<compile_context>
chip_gen: v7x
topology: tpu7x:2x2x1
jax: 0.10.0
libtpu: 0.0.40
codegen_flags: <defaults>
</compile_context>

<pallas_src>
import functools

import jax
import jax.numpy as jnp
from jax.experimental import pallas as pl
from jax.experimental.pallas import tpu as pltpu


def _reflect_pad_into(pad_ref, x, H, W):
    """Write reflect-padded x (H, W, C) into pad_ref (H+2, W+2, C).

    PyTorch 'reflect' semantics (edge row/col not repeated). Rows first, then
    columns read back from the ref so the corners come out right.
    """
    pad_ref[1:H + 1, 1:W + 1, :] = x
    pad_ref[0:1, 1:W + 1, :] = x[1:2, :, :]
    pad_ref[H + 1:H + 2, 1:W + 1, :] = x[H - 2:H - 1, :, :]
    pad_ref[:, 0:1, :] = pad_ref[:, 2:3, :]
    pad_ref[:, W + 1:W + 2, :] = pad_ref[:, W - 1:W, :]


def _im2col_into(col_ref, pad_ref, W, C):
    """Pack the 3 dx-shifts of pad_ref (H+2, W+2, C) into col_ref (H+2, W, 3C).

    Only 3 width-axis slices per layer (vs. 9 per layer before); the dy shifts
    are later taken on the cheap leading axis.
    """
    col_ref[:, :, 0:C] = pad_ref[:, 0:W, :]
    col_ref[:, :, C:2 * C] = pad_ref[:, 1:W + 1, :]
    col_ref[:, :, 2 * C:3 * C] = pad_ref[:, 2:W + 2, :]


def _conv_mxu(col_ref, w_ref, b_ref, H, W, K, Cout, relu):
    """3 MXU matmuls (one per dy tap) with K = 3*Cin; fused bias(+ReLU)."""
    acc = jnp.zeros((H * W, Cout), jnp.float32)
    for dy in range(3):  # static unroll
        acc += jnp.dot(
            col_ref[dy:dy + H, :, :].reshape(H * W, K),
            w_ref[dy],                      # (K, Cout)
            preferred_element_type=jnp.float32,
        )
    acc = acc + b_ref[...]                  # (1, Cout) broadcast
    if relu:
        acc = jnp.maximum(acc, 0.0)         # single fused VPU epilogue
    return acc.reshape(H, W, Cout)


def _decoder_kernel(x_ref, w1_ref, b1_ref, w2_ref, b2_ref, w3_ref, b3_ref,
                    o_ref, pad32, col96, pad16, col48, *, H, W):
    # ---- layer 1: 32 -> 32, ReLU ----
    _reflect_pad_into(pad32, x_ref[0], H, W)
    _im2col_into(col96, pad32, W, 32)
    h1 = _conv_mxu(col96, w1_ref, b1_ref, H, W, K=96, Cout=32, relu=True)

    # ---- layer 2: 32 -> 16, ReLU ---- (reuses the same scratch buffers)
    _reflect_pad_into(pad32, h1, H, W)
    _im2col_into(col96, pad32, W, 32)
    h2 = _conv_mxu(col96, w2_ref, b2_ref, H, W, K=96, Cout=16, relu=True)

    # ---- layer 3: 16 -> 1, no ReLU ----
    # Cout == 1: do it on the VPU/XLU (broadcast-mul + lane reduce) so the
    # output has no trailing size-1 channel dim and the MXU isn't fed N=1.
    _reflect_pad_into(pad16, h2, H, W)
    _im2col_into(col48, pad16, W, 16)
    y = jnp.zeros((H, W), jnp.float32)
    for dy in range(3):  # static unroll
        y = y + jnp.sum(col48[dy:dy + H, :, :] * w3_ref[dy], axis=-1)
    y = y + b3_ref[...]                     # (1, 1) broadcast
    o_ref[...] = y.reshape(1, H, W).astype(o_ref.dtype)


@jax.jit
def cnn_decoder_forward(x_nchw, params):
    """x_nchw: (B, 32, H, W) float32 -> (B, 1, H, W) float32 (matches PyTorch)."""
    B, C, H, W = x_nchw.shape
    assert C == 32
    x = jnp.transpose(x_nchw, (0, 2, 3, 1)).astype(jnp.float32)  # NCHW -> NHWC

    (w1, b1), (w2, b2), (w3, b3) = params
    # Pack weights (3,3,Cin,Cout) -> (3, 3*Cin, Cout): row-major reshape puts
    # the dx taps contiguous along K, matching the im2col channel packing.
    w1p = w1.reshape(3, 96, 32)
    w2p = w2.reshape(3, 96, 16)
    w3p = jnp.transpose(w3.reshape(3, 48, 1), (0, 2, 1))  # (3, 1, 48)
    b1p = b1.reshape(1, 32)
    b2p = b2.reshape(1, 16)
    b3p = b3.reshape(1, 1)

    kernel = functools.partial(_decoder_kernel, H=H, W=W)
    out = pl.pallas_call(
        kernel,
        out_shape=jax.ShapeDtypeStruct((B, H, W), jnp.float32),
        grid_spec=pltpu.PrefetchScalarGridSpec(
            num_scalar_prefetch=0,
            grid=(B,),
            in_specs=[
                pl.BlockSpec((1, H, W, 32), lambda b: (b, 0, 0, 0)),
                pl.BlockSpec((3, 96, 32), lambda b: (0, 0, 0)),
                pl.BlockSpec((1, 32), lambda b: (0, 0)),
                pl.BlockSpec((3, 96, 16), lambda b: (0, 0, 0)),
                pl.BlockSpec((1, 16), lambda b: (0, 0)),
                pl.BlockSpec((3, 1, 48), lambda b: (0, 0, 0)),
                pl.BlockSpec((1, 1), lambda b: (0, 0)),
            ],
            out_specs=pl.BlockSpec((1, H, W), lambda b: (b, 0, 0)),
            scratch_shapes=[
                pltpu.VMEM((H + 2, W + 2, 32), jnp.float32),   # reflect-pad, 32ch
                pltpu.VMEM((H + 2, W, 96), jnp.float32),       # im2col, K=96
                pltpu.VMEM((H + 2, W + 2, 16), jnp.float32),   # reflect-pad, 16ch
                pltpu.VMEM((H + 2, W, 48), jnp.float32),       # im2col, K=48
            ],
        ),
        compiler_params=pltpu.CompilerParams(
            dimension_semantics=("parallel",),     # batch splits across v7x TCs
            vmem_limit_bytes=32 * 1024 * 1024,     # explicit (v5e default is 16 MiB)
        ),
    )(x, w1p, b1p, w2p, b2p, w3p, b3p)

    # C == 1, so (B, H, W) -> (B, 1, H, W) is a free reshape (no transpose).
    return out.reshape(B, 1, H, W)


def init_params(key):
    """Deterministic synthetic weights, same shapes as the PyTorch module.

    conv1: 32 -> 32 (ReLU), conv2: 32 -> 16 (ReLU), conv3: 16 -> 1 (no ReLU).
    Weights stored as (3, 3, Cin, Cout); biases as (Cout,).
    """
    dims = [(32, 32), (32, 16), (16, 1)]
    params = []
    for (cin, cout) in dims:
        key, kw, kb = jax.random.split(key, 3)
        fan_in = cin * 3 * 3
        bound = 1.0 / jnp.sqrt(fan_in)
        w = jax.random.uniform(kw, (3, 3, cin, cout), jnp.float32, -bound, bound)
        b = jax.random.uniform(kb, (cout,), jnp.float32, -bound, bound)
        params.append((w, b))
    return params


if __name__ == "__main__":
    key = jax.random.PRNGKey(0)
    key, kx = jax.random.split(key)

    # Encoder output has 32 channels; small spatial size for the test.
    B, C, H, W = 2, 32, 16, 16
    x = jax.random.normal(kx, (B, C, H, W), jnp.float32)

    params = init_params(key)

    out = cnn_decoder_forward(x, params)
    out = jax.block_until_ready(out)

    assert out.shape == (B, 1, H, W), out.shape
    assert out.dtype == jnp.float32

    # Sanity check vs. pure-JAX reference (lax.conv with manual reflect pad).
    def ref_forward(x_nchw, ps):
        y = x_nchw
        for li, (w, b) in enumerate(ps):
            w_oihw = jnp.transpose(w, (3, 2, 0, 1))  # (3,3,Cin,Cout) -> (Cout,Cin,3,3)
            yp = jnp.pad(y, ((0, 0), (0, 0), (1, 1), (1, 1)), mode="reflect")
            y = jax.lax.conv_general_dilated(
                yp, w_oihw, window_strides=(1, 1), padding="VALID",
                dimension_numbers=("NCHW", "OIHW", "NCHW"))
            y = y + b.reshape(1, -1, 1, 1)
            if li < 2:
                y = jnp.maximum(y, 0.0)
        return y

    ref = jax.block_until_ready(ref_forward(x, params))
    err = float(jnp.max(jnp.abs(out - ref)))
    assert jnp.allclose(out, ref, atol=2e-4, rtol=2e-4), err

    print("KERNEL_OK")
</pallas_src>

<mosaic_0001>
module attributes {stable_mosaic.version = 11 : i64} {
  func.func @_decoder_kernel(%arg0: i32, %arg1: memref<1x16x16x32xf32, #tpu.memory_space<vmem>>, %arg2: memref<3x96x32xf32, #tpu.memory_space<vmem>>, %arg3: memref<1x32xf32, #tpu.memory_space<vmem>>, %arg4: memref<3x96x16xf32, #tpu.memory_space<vmem>>, %arg5: memref<1x16xf32, #tpu.memory_space<vmem>>, %arg6: memref<3x1x48xf32, #tpu.memory_space<vmem>>, %arg7: memref<1x1xf32, #tpu.memory_space<vmem>>, %arg8: memref<1x16x16xf32, #tpu.memory_space<vmem>>, %arg9: memref<18x18x32xf32, #tpu.memory_space<vmem>>, %arg10: memref<18x16x96xf32, #tpu.memory_space<vmem>>, %arg11: memref<18x18x16xf32, #tpu.memory_space<vmem>>, %arg12: memref<18x16x48xf32, #tpu.memory_space<vmem>>) attributes {dimension_semantics = [#tpu.dimension_semantics<parallel>], iteration_bounds = array<i64: 2>, scalar_prefetch = 0 : i64, scratch_operands = 4 : i64, tpu.core_type = #tpu.core_type<tc>, window_params = [{transform_indices = @transform_0, window_bounds = array<i64: 1, 16, 16, 32>}, {pipeline_mode = #tpu.pipeline_mode<synchronous>, transform_indices = @transform_1, window_bounds = array<i64: 3, 96, 32>}, {pipeline_mode = #tpu.pipeline_mode<synchronous>, transform_indices = @transform_2, window_bounds = array<i64: 1, 32>}, {pipeline_mode = #tpu.pipeline_mode<synchronous>, transform_indices = @transform_3, window_bounds = array<i64: 3, 96, 16>}, {pipeline_mode = #tpu.pipeline_mode<synchronous>, transform_indices = @transform_4, window_bounds = array<i64: 1, 16>}, {pipeline_mode = #tpu.pipeline_mode<synchronous>, transform_indices = @transform_5, window_bounds = array<i64: 3, 1, 48>}, {pipeline_mode = #tpu.pipeline_mode<synchronous>, transform_indices = @transform_6, window_bounds = array<i64: 1, 1>}, {transform_indices = @transform_7, window_bounds = array<i64: 1, 16, 16>}]} {
    %c0 = arith.constant 0 : index
    %c0_0 = arith.constant 0 : index
    %c0_1 = arith.constant 0 : index
    %c0_2 = arith.constant 0 : index
    %0 = vector.load %arg1[%c0, %c0_0, %c0_1, %c0_2] : memref<1x16x16x32xf32, #tpu.memory_space<vmem>>, vector<1x16x16x32xf32>
    %1 = vector.shape_cast %0 : vector<1x16x16x32xf32> to vector<16x16x32xf32>
    %c1 = arith.constant 1 : index
    %c1_3 = arith.constant 1 : index
    %c0_4 = arith.constant 0 : index
    %2 = vector.load %arg9[%c1, %c1_3, %c0_4] : memref<18x18x32xf32, #tpu.memory_space<vmem>>, vector<16x16x32xf32>
    tpu.vector_store %arg9[%c1, %c1_3, %c0_4], %1 {strides = array<i32>} : memref<18x18x32xf32, #tpu.memory_space<vmem>>, vector<16x16x32xf32>,
    %3 = vector.extract_strided_slice %1 {offsets = [1, 0, 0], sizes = [1, 16, 32], strides = [1, 1, 1]} : vector<16x16x32xf32> to vector<1x16x32xf32>
    %c0_5 = arith.constant 0 : index
    %c1_6 = arith.constant 1 : index
    %c0_7 = arith.constant 0 : index
    %4 = vector.load %arg9[%c0_5, %c1_6, %c0_7] : memref<18x18x32xf32, #tpu.memory_space<vmem>>, vector<1x16x32xf32>
    tpu.vector_store %arg9[%c0_5, %c1_6, %c0_7], %3 {strides = array<i32>} : memref<18x18x32xf32, #tpu.memory_space<vmem>>, vector<1x16x32xf32>,
    %5 = vector.extract_strided_slice %1 {offsets = [14, 0, 0], sizes = [1, 16, 32], strides = [1, 1, 1]} : vector<16x16x32xf32> to vector<1x16x32xf32>
    %c17 = arith.constant 17 : index
    %c1_8 = arith.constant 1 : index
    %c0_9 = arith.constant 0 : index
    %6 = vector.load %arg9[%c17, %c1_8, %c0_9] : memref<18x18x32xf32, #tpu.memory_space<vmem>>, vector<1x16x32xf32>
    tpu.vector_store %arg9[%c17, %c1_8, %c0_9], %5 {strides = array<i32>} : memref<18x18x32xf32, #tpu.memory_space<vmem>>, vector<1x16x32xf32>,
    %c0_10 = arith.constant 0 : index
    %c2 = arith.constant 2 : index
    %c0_11 = arith.constant 0 : index
    %7 = vector.load %arg9[%c0_10, %c2, %c0_11] : memref<18x18x32xf32, #tpu.memory_space<vmem>>, vector<18x1x32xf32>
    %c0_12 = arith.constant 0 : index
    %c0_13 = arith.constant 0 : index
    %c0_14 = arith.constant 0 : index
    %8 = vector.load %arg9[%c0_12, %c0_13, %c0_14] : memref<18x18x32xf32, #tpu.memory_space<vmem>>, vector<18x1x32xf32>
    tpu.vector_store %arg9[%c0_12, %c0_13, %c0_14], %7 {strides = array<i32>} : memref<18x18x32xf32, #tpu.memory_space<vmem>>, vector<18x1x32xf32>,
    %c0_15 = arith.constant 0 : index
    %c15 = arith.constant 15 : index
    %c0_16 = arith.constant 0 : index
    %9 = vector.load %arg9[%c0_15, %c15, %c0_16] : memref<18x18x32xf32, #tpu.memory_space<vmem>>, vector<18x1x32xf32>
    %c0_17 = arith.constant 0 : index
    %c17_18 = arith.constant 17 : index
    %c0_19 = arith.constant 0 : index
    %10 = vector.load %arg9[%c0_17, %c17_18, %c0_19] : memref<18x18x32xf32, #tpu.memory_space<vmem>>, vector<18x1x32xf32>
    tpu.vector_store %arg9[%c0_17, %c17_18, %c0_19], %9 {strides = array<i32>} : memref<18x18x32xf32, #tpu.memory_space<vmem>>, vector<18x1x32xf32>,
    %c0_20 = arith.constant 0 : index
    %c0_21 = arith.constant 0 : index
    %c0_22 = arith.constant 0 : index
    %11 = vector.load %arg9[%c0_20, %c0_21, %c0_22] : memref<18x18x32xf32, #tpu.memory_space<vmem>>, vector<18x16x32xf32>
    %c0_23 = arith.constant 0 : index
    %c0_24 = arith.constant 0 : index
    %c0_25 = arith.constant 0 : index
    %12 = vector.load %arg10[%c0_23, %c0_24, %c0_25] : memref<18x16x96xf32, #tpu.memory_space<vmem>>, vector<18x16x32xf32>
    tpu.vector_store %arg10[%c0_23, %c0_24, %c0_25], %11 {strides = array<i32>} : memref<18x16x96xf32, #tpu.memory_space<vmem>>, vector<18x16x32xf32>,
    %c0_26 = arith.constant 0 : index
    %c1_27 = arith.constant 1 : index
    %c0_28 = arith.constant 0 : index
    %13 = vector.load %arg9[%c0_26, %c1_27, %c0_28] : memref<18x18x32xf32, #tpu.memory_space<vmem>>, vector<18x16x32xf32>
    %c0_29 = arith.constant 0 : index
    %c0_30 = arith.constant 0 : index
    %c32 = arith.constant 32 : index
    %14 = vector.load %arg10[%c0_29, %c0_30, %c32] : memref<18x16x96xf32, #tpu.memory_space<vmem>>, vector<18x16x32xf32>
    tpu.vector_store %arg10[%c0_29, %c0_30, %c32], %13 {strides = array<i32>} : memref<18x16x96xf32, #tpu.memory_space<vmem>>, vector<18x16x32xf32>,
    %c0_31 = arith.constant 0 : index
    %c2_32 = arith.constant 2 : index
    %c0_33 = arith.constant 0 : index
    %15 = vector.load %arg9[%c0_31, %c2_32, %c0_33] : memref<18x18x32xf32, #tpu.memory_space<vmem>>, vector<18x16x32xf32>
    %c0_34 = arith.constant 0 : index
    %c0_35 = arith.constant 0 : index
    %c64 = arith.constant 64 : index
    %16 = vector.load %arg10[%c0_34, %c0_35, %c64] : memref<18x16x96xf32, #tpu.memory_space<vmem>>, vector<18x16x32xf32>
    tpu.vector_store %arg10[%c0_34, %c0_35, %c64], %15 {strides = array<i32>} : memref<18x16x96xf32, #tpu.memory_space<vmem>>, vector<18x16x32xf32>,
    %cst = arith.constant 0.000000e+00 : f32
    %17 = vector.broadcast %cst : f32 to vector<256x32xf32>
    %c0_36 = arith.constant 0 : index
    %c0_37 = arith.constant 0 : index
    %c0_38 = arith.constant 0 : index
    %18 = vector.load %arg10[%c0_36, %c0_37, %c0_38] : memref<18x16x96xf32, #tpu.memory_space<vmem>>, vector<16x16x96xf32>
    %19 = vector.shape_cast %18 : vector<16x16x96xf32> to vector<256x96xf32>
    %c0_39 = arith.constant 0 : index
    %c0_40 = arith.constant 0 : index
    %c0_41 = arith.constant 0 : index
    %20 = vector.load %arg2[%c0_39, %c0_40, %c0_41] : memref<3x96x32xf32, #tpu.memory_space<vmem>>, vector<1x96x32xf32>
    %21 = vector.shape_cast %20 : vector<1x96x32xf32> to vector<96x32xf32>
    %cst_42 = arith.constant dense<0.000000e+00> : vector<256x32xf32>
    %22 = tpu.matmul %19, %21, %cst_42 {dimension_numbers = #tpu.dot_dimension_numbers<[1], [0], [0], [1], [0, 0, 1, 1], [], []>} : vector<256x96xf32>, vector<96x32xf32>, vector<256x32xf32> -> vector<256x32xf32>
    %23 = arith.addf %17, %22 : vector<256x32xf32>
    %c1_43 = arith.constant 1 : index
    %c0_44 = arith.constant 0 : index
    %c0_45 = arith.constant 0 : index
    %24 = vector.load %arg10[%c1_43, %c0_44, %c0_45] : memref<18x16x96xf32, #tpu.memory_space<vmem>>, vector<16x16x96xf32>
    %25 = vector.shape_cast %24 : vector<16x16x96xf32> to vector<256x96xf32>
    %c1_46 = arith.constant 1 : index
    %c0_47 = arith.constant 0 : index
    %c0_48 = arith.constant 0 : index
    %26 = vector.load %arg2[%c1_46, %c0_47, %c0_48] : memref<3x96x32xf32, #tpu.memory_space<vmem>>, vector<1x96x32xf32>
    %27 = vector.shape_cast %26 : vector<1x96x32xf32> to vector<96x32xf32>
    %cst_49 = arith.constant dense<0.000000e+00> : vector<256x32xf32>
    %28 = tpu.matmul %25, %27, %cst_49 {dimension_numbers = #tpu.dot_dimension_numbers<[1], [0], [0], [1], [0, 0, 1, 1], [], []>} : vector<256x96xf32>, vector<96x32xf32>, vector<256x32xf32> -> vector<256x32xf32>
    %29 = arith.addf %23, %28 : vector<256x32xf32>
    %c2_50 = arith.constant 2 : index
    %c0_51 = arith.constant 0 : index
    %c0_52 = arith.constant 0 : index
    %30 = vector.load %arg10[%c2_50, %c0_51, %c0_52] : memref<18x16x96xf32, #tpu.memory_space<vmem>>, vector<16x16x96xf32>
    %31 = vector.shape_cast %30 : vector<16x16x96xf32> to vector<256x96xf32>
    %c2_53 = arith.constant 2 : index
    %c0_54 = arith.constant 0 : index
    %c0_55 = arith.constant 0 : index
    %32 = vector.load %arg2[%c2_53, %c0_54, %c0_55] : memref<3x96x32xf32, #tpu.memory_space<vmem>>, vector<1x96x32xf32>
    %33 = vector.shape_cast %32 : vector<1x96x32xf32> to vector<96x32xf32>
    %cst_56 = arith.constant dense<0.000000e+00> : vector<256x32xf32>
    %34 = tpu.matmul %31, %33, %cst_56 {dimension_numbers = #tpu.dot_dimension_numbers<[1], [0], [0], [1], [0, 0, 1, 1], [], []>} : vector<256x96xf32>, vector<96x32xf32>, vector<256x32xf32> -> vector<256x32xf32>
    %35 = arith.addf %29, %34 : vector<256x32xf32>
    %c0_57 = arith.constant 0 : index
    %c0_58 = arith.constant 0 : index
    %36 = vector.load %arg3[%c0_57, %c0_58] : memref<1x32xf32, #tpu.memory_space<vmem>>, vector<1x32xf32>
    %37 = vector.broadcast %36 : vector<1x32xf32> to vector<256x32xf32>
    %38 = arith.addf %35, %37 : vector<256x32xf32>
    %cst_59 = arith.constant 0.000000e+00 : f32
    %39 = vector.broadcast %cst_59 : f32 to vector<256x32xf32>
    %40 = arith.maximumf %38, %39 : vector<256x32xf32>
    %41 = vector.shape_cast %40 : vector<256x32xf32> to vector<16x16x32xf32>
    %c1_60 = arith.constant 1 : index
    %c1_61 = arith.constant 1 : index
    %c0_62 = arith.constant 0 : index
    %42 = vector.load %arg9[%c1_60, %c1_61, %c0_62] : memref<18x18x32xf32, #tpu.memory_space<vmem>>, vector<16x16x32xf32>
    tpu.vector_store %arg9[%c1_60, %c1_61, %c0_62], %41 {strides = array<i32>} : memref<18x18x32xf32, #tpu.memory_space<vmem>>, vector<16x16x32xf32>,
    %43 = vector.extract_strided_slice %41 {offsets = [1, 0, 0], sizes = [1, 16, 32], strides = [1, 1, 1]} : vector<16x16x32xf32> to vector<1x16x32xf32>
    %c0_63 = arith.constant 0 : index
    %c1_64 = arith.constant 1 : index
    %c0_65 = arith.constant 0 : index
    %44 = vector.load %arg9[%c0_63, %c1_64, %c0_65] : memref<18x18x32xf32, #tpu.memory_space<vmem>>, vector<1x16x32xf32>
    tpu.vector_store %arg9[%c0_63, %c1_64, %c0_65], %43 {strides = array<i32>} : memref<18x18x32xf32, #tpu.memory_space<vmem>>, vector<1x16x32xf32>,
    %45 = vector.extract_strided_slice %41 {offsets = [14, 0, 0], sizes = [1, 16, 32], strides = [1, 1, 1]} : vector<16x16x32xf32> to vector<1x16x32xf32>
    %c17_66 = arith.constant 17 : index
    %c1_67 = arith.constant 1 : index
    %c0_68 = arith.constant 0 : index
    %46 = vector.load %arg9[%c17_66, %c1_67, %c0_68] : memref<18x18x32xf32, #tpu.memory_space<vmem>>, vector<1x16x32xf32>
    tpu.vector_store %arg9[%c17_66, %c1_67, %c0_68], %45 {strides = array<i32>} : memref<18x18x32xf32, #tpu.memory_space<vmem>>, vector<1x16x32xf32>,
    %c0_69 = arith.constant 0 : index
    %c2_70 = arith.constant 2 : index
    %c0_71 = arith.constant 0 : index
    %47 = vector.load %arg9[%c0_69, %c2_70, %c0_71] : memref<18x18x32xf32, #tpu.memory_space<vmem>>, vector<18x1x32xf32>
    %c0_72 = arith.constant 0 : index
    %c0_73 = arith.constant 0 : index
    %c0_74 = arith.constant 0 : index
    %48 = vector.load %arg9[%c0_72, %c0_73, %c0_74] : memref<18x18x32xf32, #tpu.memory_space<vmem>>, vector<18x1x32xf32>
    tpu.vector_store %arg9[%c0_72, %c0_73, %c0_74], %47 {strides = array<i32>} : memref<18x18x32xf32, #tpu.memory_space<vmem>>, vector<18x1x32xf32>,
    %c0_75 = arith.constant 0 : index
    %c15_76 = arith.constant 15 : index
    %c0_77 = arith.constant 0 : index
    %49 = vector.load %arg9[%c0_75, %c15_76, %c0_77] : memref<18x18x32xf32, #tpu.memory_space<vmem>>, vector<18x1x32xf32>
    %c0_78 = arith.constant 0 : index
    %c17_79 = arith.constant 17 : index
    %c0_80 = arith.constant 0 : index
    %50 = vector.load %arg9[%c0_78, %c17_79, %c0_80] : memref<18x18x32xf32, #tpu.memory_space<vmem>>, vector<18x1x32xf32>
    tpu.vector_store %arg9[%c0_78, %c17_79, %c0_80], %49 {strides = array<i32>} : memref<18x18x32xf32, #tpu.memory_space<vmem>>, vector<18x1x32xf32>,
    %c0_81 = arith.constant 0 : index
    %c0_82 = arith.constant 0 : index
    %c0_83 = arith.constant 0 : index
    %51 = vector.load %arg9[%c0_81, %c0_82, %c0_83] : memref<18x18x32xf32, #tpu.memory_space<vmem>>, vector<18x16x32xf32>
    %c0_84 = arith.constant 0 : index
    %c0_85 = arith.constant 0 : index
    %c0_86 = arith.constant 0 : index
    %52 = vector.load %arg10[%c0_84, %c0_85, %c0_86] : memref<18x16x96xf32, #tpu.memory_space<vmem>>, vector<18x16x32xf32>
    tpu.vector_store %arg10[%c0_84, %c0_85, %c0_86], %51 {strides = array<i32>} : memref<18x16x96xf32, #tpu.memory_space<vmem>>, vector<18x16x32xf32>,
    %c0_87 = arith.constant 0 : index
    %c1_88 = arith.constant 1 : index
    %c0_89 = arith.constant 0 : index
    %53 = vector.load %arg9[%c0_87, %c1_88, %c0_89] : memref<18x18x32xf32, #tpu.memory_space<vmem>>, vector<18x16x32xf32>
    %c0_90 = arith.constant 0 : index
    %c0_91 = arith.constant 0 : index
    %c32_92 = arith.constant 32 : index
    %54 = vector.load %arg10[%c0_90, %c0_91, %c32_92] : memref<18x16x96xf32, #tpu.memory_space<vmem>>, vector<18x16x32xf32>
    tpu.vector_store %arg10[%c0_90, %c0_91, %c32_92], %53 {strides = array<i32>} : memref<18x16x96xf32, #tpu.memory_space<vmem>>, vector<18x16x32xf32>,
    %c0_93 = arith.constant 0 : index
    %c2_94 = arith.constant 2 : index
    %c0_95 = arith.constant 0 : index
    %55 = vector.load %arg9[%c0_93, %c2_94, %c0_95] : memref<18x18x32xf32, #tpu.memory_space<vmem>>, vector<18x16x32xf32>
    %c0_96 = arith.constant 0 : index
    %c0_97 = arith.constant 0 : index
    %c64_98 = arith.constant 64 : index
    %56 = vector.load %arg10[%c0_96, %c0_97, %c64_98] : memref<18x16x96xf32, #tpu.memory_space<vmem>>, vector<18x16x32xf32>
    tpu.vector_store %arg10[%c0_96, %c0_97, %c64_98], %55 {strides = array<i32>} : memref<18x16x96xf32, #tpu.memory_space<vmem>>, vector<18x16x32xf32>,
    %cst_99 = arith.constant 0.000000e+00 : f32
    %57 = vector.broadcast %cst_99 : f32 to vector<256x16xf32>
    %c0_100 = arith.constant 0 : index
    %c0_101 = arith.constant 0 : index
    %c0_102 = arith.constant 0 : index
    %58 = vector.load %arg10[%c0_100, %c0_101, %c0_102] : memref<18x16x96xf32, #tpu.memory_space<vmem>>, vector<16x16x96xf32>
    %59 = vector.shape_cast %58 : vector<16x16x96xf32> to vector<256x96xf32>
    %c0_103 = arith.constant 0 : index
    %c0_104 = arith.constant 0 : index
    %c0_105 = arith.constant 0 : index
    %60 = vector.load %arg4[%c0_103, %c0_104, %c0_105] : memref<3x96x16xf32, #tpu.memory_space<vmem>>, vector<1x96x16xf32>
    %61 = vector.shape_cast %60 : vector<1x96x16xf32> to vector<96x16xf32>
    %cst_106 = arith.constant dense<0.000000e+00> : vector<256x16xf32>
    %62 = tpu.matmul %59, %61, %cst_106 {dimension_numbers = #tpu.dot_dimension_numbers<[1], [0], [0], [1], [0, 0, 1, 1], [], []>} : vector<256x96xf32>, vector<96x16xf32>, vector<256x16xf32> -> vector<256x16xf32>
    %63 = arith.addf %57, %62 : vector<256x16xf32>
    %c1_107 = arith.constant 1 : index
    %c0_108 = arith.constant 0 : index
    %c0_109 = arith.constant 0 : index
    %64 = vector.load %arg10[%c1_107, %c0_108, %c0_109] : memref<18x16x96xf32, #tpu.memory_space<vmem>>, vector<16x16x96xf32>
    %65 = vector.shape_cast %64 : vector<16x16x96xf32> to vector<256x96xf32>
    %c1_110 = arith.constant 1 : index
    %c0_111 = arith.constant 0 : index
    %c0_112 = arith.constant 0 : index
    %66 = vector.load %arg4[%c1_110, %c0_111, %c0_112] : memref<3x96x16xf32, #tpu.memory_space<vmem>>, vector<1x96x16xf32>
    %67 = vector.shape_cast %66 : vector<1x96x16xf32> to vector<96x16xf32>
    %cst_113 = arith.constant dense<0.000000e+00> : vector<256x16xf32>
    %68 = tpu.matmul %65, %67, %cst_113 {dimension_numbers = #tpu.dot_dimension_numbers<[1], [0], [0], [1], [0, 0, 1, 1], [], []>} : vector<256x96xf32>, vector<96x16xf32>, vector<256x16xf32> -> vector<256x16xf32>
    %69 = arith.addf %63, %68 : vector<256x16xf32>
    %c2_114 = arith.constant 2 : index
    %c0_115 = arith.constant 0 : index
    %c0_116 = arith.constant 0 : index
    %70 = vector.load %arg10[%c2_114, %c0_115, %c0_116] : memref<18x16x96xf32, #tpu.memory_space<vmem>>, vector<16x16x96xf32>
    %71 = vector.shape_cast %70 : vector<16x16x96xf32> to vector<256x96xf32>
    %c2_117 = arith.constant 2 : index
    %c0_118 = arith.constant 0 : index
    %c0_119 = arith.constant 0 : index
    %72 = vector.load %arg4[%c2_117, %c0_118, %c0_119] : memref<3x96x16xf32, #tpu.memory_space<vmem>>, vector<1x96x16xf32>
    %73 = vector.shape_cast %72 : vector<1x96x16xf32> to vector<96x16xf32>
    %cst_120 = arith.constant dense<0.000000e+00> : vector<256x16xf32>
    %74 = tpu.matmul %71, %73, %cst_120 {dimension_numbers = #tpu.dot_dimension_numbers<[1], [0], [0], [1], [0, 0, 1, 1], [], []>} : vector<256x96xf32>, vector<96x16xf32>, vector<256x16xf32> -> vector<256x16xf32>
    %75 = arith.addf %69, %74 : vector<256x16xf32>
    %c0_121 = arith.constant 0 : index
    %c0_122 = arith.constant 0 : index
    %76 = vector.load %arg5[%c0_121, %c0_122] : memref<1x16xf32, #tpu.memory_space<vmem>>, vector<1x16xf32>
    %77 = vector.broadcast %76 : vector<1x16xf32> to vector<256x16xf32>
    %78 = arith.addf %75, %77 : vector<256x16xf32>
    %cst_123 = arith.constant 0.000000e+00 : f32
    %79 = vector.broadcast %cst_123 : f32 to vector<256x16xf32>
    %80 = arith.maximumf %78, %79 : vector<256x16xf32>
    %81 = vector.shape_cast %80 : vector<256x16xf32> to vector<16x16x16xf32>
    %c1_124 = arith.constant 1 : index
    %c1_125 = arith.constant 1 : index
    %c0_126 = arith.constant 0 : index
    %82 = vector.load %arg11[%c1_124, %c1_125, %c0_126] : memref<18x18x16xf32, #tpu.memory_space<vmem>>, vector<16x16x16xf32>
    tpu.vector_store %arg11[%c1_124, %c1_125, %c0_126], %81 {strides = array<i32>} : memref<18x18x16xf32, #tpu.memory_space<vmem>>, vector<16x16x16xf32>,
    %83 = vector.extract_strided_slice %81 {offsets = [1, 0, 0], sizes = [1, 16, 16], strides = [1, 1, 1]} : vector<16x16x16xf32> to vector<1x16x16xf32>
    %c0_127 = arith.constant 0 : index
    %c1_128 = arith.constant 1 : index
    %c0_129 = arith.constant 0 : index
    %84 = vector.load %arg11[%c0_127, %c1_128, %c0_129] : memref<18x18x16xf32, #tpu.memory_space<vmem>>, vector<1x16x16xf32>
    tpu.vector_store %arg11[%c0_127, %c1_128, %c0_129], %83 {strides = array<i32>} : memref<18x18x16xf32, #tpu.memory_space<vmem>>, vector<1x16x16xf32>,
    %85 = vector.extract_strided_slice %81 {offsets = [14, 0, 0], sizes = [1, 16, 16], strides = [1, 1, 1]} : vector<16x16x16xf32> to vector<1x16x16xf32>
    %c17_130 = arith.constant 17 : index
    %c1_131 = arith.constant 1 : index
    %c0_132 = arith.constant 0 : index
    %86 = vector.load %arg11[%c17_130, %c1_131, %c0_132] : memref<18x18x16xf32, #tpu.memory_space<vmem>>, vector<1x16x16xf32>
    tpu.vector_store %arg11[%c17_130, %c1_131, %c0_132], %85 {strides = array<i32>} : memref<18x18x16xf32, #tpu.memory_space<vmem>>, vector<1x16x16xf32>,
    %c0_133 = arith.constant 0 : index
    %c2_134 = arith.constant 2 : index
    %c0_135 = arith.constant 0 : index
    %87 = vector.load %arg11[%c0_133, %c2_134, %c0_135] : memref<18x18x16xf32, #tpu.memory_space<vmem>>, vector<18x1x16xf32>
    %c0_136 = arith.constant 0 : index
    %c0_137 = arith.constant 0 : index
    %c0_138 = arith.constant 0 : index
    %88 = vector.load %arg11[%c0_136, %c0_137, %c0_138] : memref<18x18x16xf32, #tpu.memory_space<vmem>>, vector<18x1x16xf32>
    tpu.vector_store %arg11[%c0_136, %c0_137, %c0_138], %87 {strides = array<i32>} : memref<18x18x16xf32, #tpu.memory_space<vmem>>, vector<18x1x16xf32>,
    %c0_139 = arith.constant 0 : index
    %c15_140 = arith.constant 15 : index
    %c0_141 = arith.constant 0 : index
    %89 = vector.load %arg11[%c0_139, %c15_140, %c0_141] : memref<18x18x16xf32, #tpu.memory_space<vmem>>, vector<18x1x16xf32>
    %c0_142 = arith.constant 0 : index
    %c17_143 = arith.constant 17 : index
    %c0_144 = arith.constant 0 : index
    %90 = vector.load %arg11[%c0_142, %c17_143, %c0_144] : memref<18x18x16xf32, #tpu.memory_space<vmem>>, vector<18x1x16xf32>
    tpu.vector_store %arg11[%c0_142, %c17_143, %c0_144], %89 {strides = array<i32>} : memref<18x18x16xf32, #tpu.memory_space<vmem>>, vector<18x1x16xf32>,
    %c0_145 = arith.constant 0 : index
    %c0_146 = arith.constant 0 : index
    %c0_147 = arith.constant 0 : index
    %91 = vector.load %arg11[%c0_145, %c0_146, %c0_147] : memref<18x18x16xf32, #tpu.memory_space<vmem>>, vector<18x16x16xf32>
    %c0_148 = arith.constant 0 : index
    %c0_149 = arith.constant 0 : index
    %c0_150 = arith.constant 0 : index
    %92 = vector.load %arg12[%c0_148, %c0_149, %c0_150] : memref<18x16x48xf32, #tpu.memory_space<vmem>>, vector<18x16x16xf32>
    tpu.vector_store %arg12[%c0_148, %c0_149, %c0_150], %91 {strides = array<i32>} : memref<18x16x48xf32, #tpu.memory_space<vmem>>, vector<18x16x16xf32>,
    %c0_151 = arith.constant 0 : index
    %c1_152 = arith.constant 1 : index
    %c0_153 = arith.constant 0 : index
    %93 = vector.load %arg11[%c0_151, %c1_152, %c0_153] : memref<18x18x16xf32, #tpu.memory_space<vmem>>, vector<18x16x16xf32>
    %c0_154 = arith.constant 0 : index
    %c0_155 = arith.constant 0 : index
    %c16 = arith.constant 16 : index
    %94 = vector.load %arg12[%c0_154, %c0_155, %c16] : memref<18x16x48xf32, #tpu.memory_space<vmem>>, vector<18x16x16xf32>
    tpu.vector_store %arg12[%c0_154, %c0_155, %c16], %93 {strides = array<i32>} : memref<18x16x48xf32, #tpu.memory_space<vmem>>, vector<18x16x16xf32>,
    %c0_156 = arith.constant 0 : index
    %c2_157 = arith.constant 2 : index
    %c0_158 = arith.constant 0 : index
    %95 = vector.load %arg11[%c0_156, %c2_157, %c0_158] : memref<18x18x16xf32, #tpu.memory_space<vmem>>, vector<18x16x16xf32>
    %c0_159 = arith.constant 0 : index
    %c0_160 = arith.constant 0 : index
    %c32_161 = arith.constant 32 : index
    %96 = vector.load %arg12[%c0_159, %c0_160, %c32_161] : memref<18x16x48xf32, #tpu.memory_space<vmem>>, vector<18x16x16xf32>
    tpu.vector_store %arg12[%c0_159, %c0_160, %c32_161], %95 {strides = array<i32>} : memref<18x16x48xf32, #tpu.memory_space<vmem>>, vector<18x16x16xf32>,
    %cst_162 = arith.constant 0.000000e+00 : f32
    %97 = vector.broadcast %cst_162 : f32 to vector<16x16xf32>
    %c0_163 = arith.constant 0 : index
    %c0_164 = arith.constant 0 : index
    %c0_165 = arith.constant 0 : index
    %98 = vector.load %arg12[%c0_163, %c0_164, %c0_165] : memref<18x16x48xf32, #tpu.memory_space<vmem>>, vector<16x16x48xf32>
    %c0_166 = arith.constant 0 : index
    %c0_167 = arith.constant 0 : index
    %c0_168 = arith.constant 0 : index
    %99 = vector.load %arg6[%c0_166, %c0_167, %c0_168] : memref<3x1x48xf32, #tpu.memory_space<vmem>>, vector<1x1x48xf32>
    %100 = vector.shape_cast %99 : vector<1x1x48xf32> to vector<1x48xf32>
    %101 = vector.shape_cast %100 : vector<1x48xf32> to vector<1x1x48xf32>
    %102 = vector.broadcast %101 : vector<1x1x48xf32> to vector<16x16x48xf32>
    %103 = arith.mulf %98, %102 : vector<16x16x48xf32>
    %cst_169 = arith.constant dense<0.000000e+00> : vector<16x16xf32>
    %104 = vector.multi_reduction <add>, %103, %cst_169 [2] : vector<16x16x48xf32> to vector<16x16xf32>
    %105 = arith.addf %97, %104 : vector<16x16xf32>
    %c1_170 = arith.constant 1 : index
    %c0_171 = arith.constant 0 : index
    %c0_172 = arith.constant 0 : index
    %106 = vector.load %arg12[%c1_170, %c0_171, %c0_172] : memref<18x16x48xf32, #tpu.memory_space<vmem>>, vector<16x16x48xf32>
    %c1_173 = arith.constant 1 : index
    %c0_174 = arith.constant 0 : index
    %c0_175 = arith.constant 0 : index
    %107 = vector.load %arg6[%c1_173, %c0_174, %c0_175] : memref<3x1x48xf32, #tpu.memory_space<vmem>>, vector<1x1x48xf32>
    %108 = vector.shape_cast %107 : vector<1x1x48xf32> to vector<1x48xf32>
    %109 = vector.shape_cast %108 : vector<1x48xf32> to vector<1x1x48xf32>
    %110 = vector.broadcast %109 : vector<1x1x48xf32> to vector<16x16x48xf32>
    %111 = arith.mulf %106, %110 : vector<16x16x48xf32>
    %cst_176 = arith.constant dense<0.000000e+00> : vector<16x16xf32>
    %112 = vector.multi_reduction <add>, %111, %cst_176 [2] : vector<16x16x48xf32> to vector<16x16xf32>
    %113 = arith.addf %105, %112 : vector<16x16xf32>
    %c2_177 = arith.constant 2 : index
    %c0_178 = arith.constant 0 : index
    %c0_179 = arith.constant 0 : index
    %114 = vector.load %arg12[%c2_177, %c0_178, %c0_179] : memref<18x16x48xf32, #tpu.memory_space<vmem>>, vector<16x16x48xf32>
    %c2_180 = arith.constant 2 : index
    %c0_181 = arith.constant 0 : index
    %c0_182 = arith.constant 0 : index
    %115 = vector.load %arg6[%c2_180, %c0_181, %c0_182] : memref<3x1x48xf32, #tpu.memory_space<vmem>>, vector<1x1x48xf32>
    %116 = vector.shape_cast %115 : vector<1x1x48xf32> to vector<1x48xf32>
    %117 = vector.shape_cast %116 : vector<1x48xf32> to vector<1x1x48xf32>
    %118 = vector.broadcast %117 : vector<1x1x48xf32> to vector<16x16x48xf32>
    %119 = arith.mulf %114, %118 : vector<16x16x48xf32>
    %cst_183 = arith.constant dense<0.000000e+00> : vector<16x16xf32>
    %120 = vector.multi_reduction <add>, %119, %cst_183 [2] : vector<16x16x48xf32> to vector<16x16xf32>
    %121 = arith.addf %113, %120 : vector<16x16xf32>
    %c0_184 = arith.constant 0 : index
    %c0_185 = arith.constant 0 : index
    %122 = vector.load %arg7[%c0_184, %c0_185] : memref<1x1xf32, #tpu.memory_space<vmem>>, vector<1x1xf32>
    %123 = vector.broadcast %122 : vector<1x1xf32> to vector<16x16xf32>
    %124 = arith.addf %121, %123 : vector<16x16xf32>
    %125 = vector.shape_cast %124 : vector<16x16xf32> to vector<1x16x16xf32>
    %c0_186 = arith.constant 0 : index
    %c0_187 = arith.constant 0 : index
    %c0_188 = arith.constant 0 : index
    %126 = vector.load %arg8[%c0_186, %c0_187, %c0_188] : memref<1x16x16xf32, #tpu.memory_space<vmem>>, vector<1x16x16xf32>
    tpu.vector_store %arg8[%c0_186, %c0_187, %c0_188], %125 {strides = array<i32>} : memref<1x16x16xf32, #tpu.memory_space<vmem>>, vector<1x16x16xf32>,
    return
  }
  func.func @transform_0(%arg0: i32) -> (i32, i32, i32, i32) {
    %c0_i32 = arith.constant 0 : i32
    %c0_i32_0 = arith.constant 0 : i32
    %c0_i32_1 = arith.constant 0 : i32
    %c0_i32_2 = arith.constant 0 : i32
    return %arg0, %c0_i32, %c0_i32_0, %c0_i32_1 : i32, i32, i32, i32
  }
  func.func @transform_1(%arg0: i32) -> (i32, i32, i32) {
    %c0_i32 = arith.constant 0 : i32
    %c0_i32_0 = arith.constant 0 : i32
    %c0_i32_1 = arith.constant 0 : i32
    %c0_i32_2 = arith.constant 0 : i32
    return %c0_i32, %c0_i32_0, %c0_i32_1 : i32, i32, i32
  }
  func.func @transform_2(%arg0: i32) -> (i32, i32) {
    %c0_i32 = arith.constant 0 : i32
    %c0_i32_0 = arith.constant 0 : i32
    %c0_i32_1 = arith.constant 0 : i32
    return %c0_i32, %c0_i32_0 : i32, i32
  }
  func.func @transform_3(%arg0: i32) -> (i32, i32, i32) {
    %c0_i32 = arith.constant 0 : i32
    %c0_i32_0 = arith.constant 0 : i32
    %c0_i32_1 = arith.constant 0 : i32
    %c0_i32_2 = arith.constant 0 : i32
    return %c0_i32, %c0_i32_0, %c0_i32_1 : i32, i32, i32
  }
  func.func @transform_4(%arg0: i32) -> (i32, i32) {
    %c0_i32 = arith.constant 0 : i32
    %c0_i32_0 = arith.constant 0 : i32
    %c0_i32_1 = arith.constant 0 : i32
    return %c0_i32, %c0_i32_0 : i32, i32
  }
  func.func @transform_5(%arg0: i32) -> (i32, i32, i32) {
    %c0_i32 = arith.constant 0 : i32
    %c0_i32_0 = arith.constant 0 : i32
    %c0_i32_1 = arith.constant 0 : i32
    %c0_i32_2 = arith.constant 0 : i32
    return %c0_i32, %c0_i32_0, %c0_i32_1 : i32, i32, i32
  }
  func.func @transform_6(%arg0: i32) -> (i32, i32) {
    %c0_i32 = arith.constant 0 : i32
    %c0_i32_0 = arith.constant 0 : i32
    %c0_i32_1 = arith.constant 0 : i32
    return %c0_i32, %c0_i32_0 : i32, i32
  }
  func.func @transform_7(%arg0: i32) -> (i32, i32, i32) {
    %c0_i32 = arith.constant 0 : i32
    %c0_i32_0 = arith.constant 0 : i32
    %c0_i32_1 = arith.constant 0 : i32
    return %arg0, %c0_i32, %c0_i32_0 : i32, i32, i32
  }
}

</mosaic_0001>

<llo_original>
// kernel: cnn_decoder_forward.1
$region0: #{cnn_decoder_forward.1}
  #allocation0 [shape = 'u32[]', space=smem, size = 0x4, offset = 0x4, fixed_abs, tag = 'smem constant byte address 0x4 - core index']
  #allocation1 [shape = 'u32[144,128]{1,0:T(1,128)}', space=vmem, size = 0x12000, scoped, tag = 'internal scratch']
  #allocation2 [shape = 'f32[18,18,32]{2,1,0:T(8,128)}', space=vmem, size = 0x36000, scoped, tag = 'scratch operand']
  #allocation3 [shape = 'f32[18,16,96]{2,1,0:T(8,128)}', space=vmem, size = 0x24000, scoped, tag = 'scratch operand']
  #allocation4 [shape = 'f32[18,18,16]{2,1,0:T(8,128)}', space=vmem, size = 0x36000, scoped, tag = 'scratch operand']
  #allocation5 [shape = 'f32[18,16,48]{2,1,0:T(8,128)}', space=vmem, size = 0x24000, scoped, tag = 'scratch operand']
  #allocation6 [shape = 'f32[1,1]{1,0:T(1,128)S(1)}', space=vmem, size = 0x200, scoped, tag = 'scoped memory for cnn_decoder_forward.1']
  %s0 = inlined_call_operand.hbm [shape: f32[2,16,16,32], index: 0, kind: input, shape index: {}]
  %s1 = inlined_call_operand.vmem [shape: f32[3,96,32], index: 1, kind: input, shape index: {}]
  %s2 = inlined_call_operand.vmem [shape: f32[1,32], index: 2, kind: input, shape index: {}]
  %s3 = inlined_call_operand.vmem [shape: f32[3,96,16], index: 3, kind: input, shape index: {}]
  %s4 = inlined_call_operand.vmem [shape: f32[1,16], index: 4, kind: input, shape index: {}]
  %s5 = inlined_call_operand.vmem [shape: f32[3,1,48], index: 5, kind: input, shape index: {}]
  %s6 = inlined_call_operand.<no memory space> [shape: f32[1,1], index: 6, kind: input, shape index: {}]
  %s7 = inlined_call_operand.hbm [shape: f32[2,16,16], index: 7, kind: output, shape index: {}]
  %s8 = sld [smem:[#allocation0]]
  $region65: #{cnn_decoder_forward.1} parent=0
    _
  %s10 = ssub.s32 1, %s8
  %s11 = scalar_select 0, %s10, %s8
  %v12 = vstv %s6
  %13 = vst [vmem:[#allocation6] sm:$0x1] %v12
  $region1: #{cnn_decoder_forward.1} parent=0
    #allocation7 [shape = 'u8[262144]{0}', space=vmem, size = 0x40000, scoped, tag = 'input window, operand 0']
    #allocation8 [shape = 's32[2]{0}', space=sflag, size = 0x8, scoped, tag = 'scoped memory for cnn_decoder_forward.1']
    #allocation9 [shape = 's32[2]{0}', space=sflag, size = 0x8, scoped, tag = 'scoped memory for cnn_decoder_forward.1']
    #allocation10 [shape = 'u8[16384]{0}', space=vmem, size = 0x4000, scoped, tag = 'output window, operand 0']
    %14 = vsyncpa [#allocation8], 0
    %s15 = scalar_lea.sflag [#allocation8], 1
    %16 = vsyncpa %s15, 0
    %17 = vsyncpa [#allocation9], 0
    %s18 = scalar_lea.sflag [#allocation9], 1
    %19 = vsyncpa %s18, 0
    loop: start=0, step=1, limit=4
    $region2: #{cnn_decoder_forward.1} parent=1 // loop_pre_header
      _
    $region3: #{cnn_decoder_forward.1} parent=1 // loop_header
      %s21 = sphi 0, %s25
      %p22 = scmp.ge.s32.totalorder %s21, 4
      %s31 = sphi 0, %s33
      %s34 = sphi 0, %s31
      %s35 = sphi 0, %s34
      %s51 = sphi 0, %s35
      %s55 = sphi 0, %s55
      %s57 = sphi 0, %s55
      %s58 = sphi 0, %s57
      %s72 = sphi 0, %s58
      %s76 = sphi 0, %s76
      %s78 = sphi 0, %s76
      %s79 = sphi 0, %s78
      %s93 = sphi 0, %s79
      %s97 = sphi 0, %s97
      %s99 = sphi 0, %s97
      %s100 = sphi 0, %s99
      %s114 = sphi 0, %s100
      %s118 = sphi 0, %s118
      %s120 = sphi 0, %s118
      %s121 = sphi 0, %s120
      %s135 = sphi 0, %s121
      %s139 = sphi 0, %s139
      %s141 = sphi 0, %s139
      %s142 = sphi 0, %s141
      %s156 = sphi 0, %s142
      %s160 = sphi 0, %s160
      %s162 = sphi 0, %s160
      %s163 = sphi 0, %s162
      %s177 = sphi 0, %s163
      %s183 = sphi 0, %s185
      %s186 = sphi 0, %s183
      %s187 = sphi 0, %s186
      %s203 = sphi 0, %s187
    $region4: #{cnn_decoder_forward.1} parent=1 // loop_header_branch
      %24 = sbr.rel (%p22) target = $region8
    $region5: #{cnn_decoder_forward.1} parent=1 // loop_body
      %s26 = ssub.s32 %s21, 1
      %s27 = ssub.s32 %s21, 2
      %s28 = sadd.s32 %s21, 1
      %s29 = ssub.s32 %s21, %s28
      %p30 = scmp.eq.s32.totalorder %s29, 0
      %s32 = sadd.s32 %s31, 1
      %s33 = scalar_select %p30, %s31, %s32
      %p36 = pneg %p30
      %p37 = scmp.eq.s32.totalorder %s21, 1
      %p38 = por %p36, %p37
      %p39 = scmp.ne.s32.totalorder %s31, %s34
      %p40 = scmp.eq.s32.totalorder %s21, 0
      %p41 = por %p39, %p40
      %p42 = scmp.ne.s32.totalorder %s31, %s34
      %p43 = scmp.eq.s32.totalorder %s26, 1
      %p44 = por %p42, %p43
      %p45 = scmp.ne.s32.totalorder %s34, %s35
      %p46 = scmp.eq.s32.totalorder %s26, 0
      %p47 = por %p45, %p46
      %p48 = scmp.ne.s32.totalorder %s34, %s35
      %p49 = scmp.eq.s32.totalorder %s27, 1
      %p50 = por %p48, %p49
      %p52 = scmp.ne.s32.totalorder %s35, %s51
      %p53 = scmp.eq.s32.totalorder %s27, 0
      %p54 = por %p52, %p53
      %s56 = sadd.s32 %s55, 1
      %p59 = scmp.eq.s32.totalorder %s21, 1
      %p60 = scmp.ne.s32.totalorder %s55, %s57
      %p61 = scmp.eq.s32.totalorder %s21, 0
      %p62 = por %p60, %p61
      %p63 = scmp.ne.s32.totalorder %s55, %s57
      %p64 = scmp.eq.s32.totalorder %s26, 1
      %p65 = por %p63, %p64
      %p66 = scmp.ne.s32.totalorder %s57, %s58
      %p67 = scmp.eq.s32.totalorder %s26, 0
      %p68 = por %p66, %p67
      %p69 = scmp.ne.s32.totalorder %s57, %s58
      %p70 = scmp.eq.s32.totalorder %s27, 1
      %p71 = por %p69, %p70
      %p73 = scmp.ne.s32.totalorder %s58, %s72
      %p74 = scmp.eq.s32.totalorder %s27, 0
      %p75 = por %p73, %p74
      %s77 = sadd.s32 %s76, 1
      %p80 = scmp.eq.s32.totalorder %s21, 1
      %p81 = scmp.ne.s32.totalorder %s76, %s78
      %p82 = scmp.eq.s32.totalorder %s21, 0
      %p83 = por %p81, %p82
      %p84 = scmp.ne.s32.totalorder %s76, %s78
      %p85 = scmp.eq.s32.totalorder %s26, 1
      %p86 = por %p84, %p85
      %p87 = scmp.ne.s32.totalorder %s78, %s79
      %p88 = scmp.eq.s32.totalorder %s26, 0
      %p89 = por %p87, %p88
      %p90 = scmp.ne.s32.totalorder %s78, %s79
      %p91 = scmp.eq.s32.totalorder %s27, 1
      %p92 = por %p90, %p91
      %p94 = scmp.ne.s32.totalorder %s79, %s93
      %p95 = scmp.eq.s32.totalorder %s27, 0
      %p96 = por %p94, %p95
      %s98 = sadd.s32 %s97, 1
      %p101 = scmp.eq.s32.totalorder %s21, 1
      %p102 = scmp.ne.s32.totalorder %s97, %s99
      %p103 = scmp.eq.s32.totalorder %s21, 0
      %p104 = por %p102, %p103
      %p105 = scmp.ne.s32.totalorder %s97, %s99
      %p106 = scmp.eq.s32.totalorder %s26, 1
      %p107 = por %p105, %p106
      %p108 = scmp.ne.s32.totalorder %s99, %s100
      %p109 = scmp.eq.s32.totalorder %s26, 0
      %p110 = por %p108, %p109
      %p111 = scmp.ne.s32.totalorder %s99, %s100
      %p112 = scmp.eq.s32.totalorder %s27, 1
      %p113 = por %p111, %p112
      %p115 = scmp.ne.s32.totalorder %s100, %s114
      %p116 = scmp.eq.s32.totalorder %s27, 0
      %p117 = por %p115, %p116
      %s119 = sadd.s32 %s118, 1
      %p122 = scmp.eq.s32.totalorder %s21, 1
      %p123 = scmp.ne.s32.totalorder %s118, %s120
      %p124 = scmp.eq.s32.totalorder %s21, 0
      %p125 = por %p123, %p124
      %p126 = scmp.ne.s32.totalorder %s118, %s120
      %p127 = scmp.eq.s32.totalorder %s26, 1
      %p128 = por %p126, %p127
      %p129 = scmp.ne.s32.totalorder %s120, %s121
      %p130 = scmp.eq.s32.totalorder %s26, 0
      %p131 = por %p129, %p130
      %p132 = scmp.ne.s32.totalorder %s120, %s121
      %p133 = scmp.eq.s32.totalorder %s27, 1
      %p134 = por %p132, %p133
      %p136 = scmp.ne.s32.totalorder %s121, %s135
      %p137 = scmp.eq.s32.totalorder %s27, 0
      %p138 = por %p136, %p137
      %s140 = sadd.s32 %s139, 1
      %p143 = scmp.eq.s32.totalorder %s21, 1
      %p144 = scmp.ne.s32.totalorder %s139, %s141
      %p145 = scmp.eq.s32.totalorder %s21, 0
      %p146 = por %p144, %p145
      %p147 = scmp.ne.s32.totalorder %s139, %s141
      %p148 = scmp.eq.s32.totalorder %s26, 1
      %p149 = por %p147, %p148
      %p150 = scmp.ne.s32.totalorder %s141, %s142
      %p151 = scmp.eq.s32.totalorder %s26, 0
      %p152 = por %p150, %p151
      %p153 = scmp.ne.s32.totalorder %s141, %s142
      %p154 = scmp.eq.s32.totalorder %s27, 1
      %p155 = por %p153, %p154
      %p157 = scmp.ne.s32.totalorder %s142, %s156
      %p158 = scmp.eq.s32.totalorder %s27, 0
      %p159 = por %p157, %p158
      %s161 = sadd.s32 %s160, 1
      %p164 = scmp.eq.s32.totalorder %s21, 1
      %p165 = scmp.ne.s32.totalorder %s160, %s162
      %p166 = scmp.eq.s32.totalorder %s21, 0
      %p167 = por %p165, %p166
      %p168 = scmp.ne.s32.totalorder %s160, %s162
      %p169 = scmp.eq.s32.totalorder %s26, 1
      %p170 = por %p168, %p169
      %p171 = scmp.ne.s32.totalorder %s162, %s163
      %p172 = scmp.eq.s32.totalorder %s26, 0
      %p173 = por %p171, %p172
      %p174 = scmp.ne.s32.totalorder %s162, %s163
      %p175 = scmp.eq.s32.totalorder %s27, 1
      %p176 = por %p174, %p175
      %p178 = scmp.ne.s32.totalorder %s163, %s177
      %p179 = scmp.eq.s32.totalorder %s27, 0
      %p180 = por %p178, %p179
      %s181 = ssub.s32 %s21, %s28
      %p182 = scmp.eq.s32.totalorder %s181, 0
      %s184 = sadd.s32 %s183, 1
      %s185 = scalar_select %p182, %s183, %s184
      %p188 = pneg %p182
      %p189 = scmp.eq.s32.totalorder %s21, 1
      %p190 = por %p188, %p189
      %p191 = scmp.ne.s32.totalorder %s183, %s186
      %p192 = scmp.eq.s32.totalorder %s21, 0
      %p193 = por %p191, %p192
      %p194 = scmp.ne.s32.totalorder %s183, %s186
      %p195 = scmp.eq.s32.totalorder %s26, 1
      %p196 = por %p194, %p195
      %p197 = scmp.ne.s32.totalorder %s186, %s187
      %p198 = scmp.eq.s32.totalorder %s26, 0
      %p199 = por %p197, %p198
      %p200 = scmp.ne.s32.totalorder %s186, %s187
      %p201 = scmp.eq.s32.totalorder %s27, 1
      %p202 = por %p200, %p201
      %p204 = scmp.ne.s32.totalorder %s187, %s203
      %p205 = scmp.eq.s32.totalorder %s27, 0
      %p206 = por %p204, %p205
      %p207 = scmp.le.s32.totalorder 1, %s21
      %p208 = scmp.lt.s32.totalorder %s21, 3
      %p209 = pnand %p207, %p208
      %p210 = pneg %p209
      // Predicated region
      $region9: #{cnn_decoder_forward.1} parent=5 // pred_check
        _
      $region10: #{cnn_decoder_forward.1} parent=5 // pred_check_branch
        %212 = sbr.rel (%p209) target = $region12
      $region11: #{cnn_decoder_forward.1} parent=5 // pred_region
        %s213 = ssub.s32 %s21, 1
        // Predicated region
        $region13: #{cnn_decoder_forward.1} parent=11 // pred_check
          %p214 = pneg %p68
        $region14: #{cnn_decoder_forward.1} parent=11 // pred_check_branch
          %216 = sbr.rel (%p214) target = $region16
        $region15: #{cnn_decoder_forward.1} parent=11 // pred_region
          _
        $region16: #{cnn_decoder_forward.1} parent=11 // pred_fallthru
          _
        // Predicated region
        $region17: #{cnn_decoder_forward.1} parent=11 // pred_check
          %p217 = pneg %p89
        $region18: #{cnn_decoder_forward.1} parent=11 // pred_check_branch
          %219 = sbr.rel (%p217) target = $region20
        $region19: #{cnn_decoder_forward.1} parent=11 // pred_region
          _
        $region20: #{cnn_decoder_forward.1} parent=11 // pred_fallthru
          _
        // Predicated region
        $region21: #{cnn_decoder_forward.1} parent=11 // pred_check
          %p220 = pneg %p110
        $region22: #{cnn_decoder_forward.1} parent=11 // pred_check_branch
          %222 = sbr.rel (%p220) target = $region24
        $region23: #{cnn_decoder_forward.1} parent=11 // pred_region
          _
        $region24: #{cnn_decoder_forward.1} parent=11 // pred_fallthru
          _
        // Predicated region
        $region25: #{cnn_decoder_forward.1} parent=11 // pred_check
          %p223 = pneg %p131
        $region26: #{cnn_decoder_forward.1} parent=11 // pred_check_branch
          %225 = sbr.rel (%p223) target = $region28
        $region27: #{cnn_decoder_forward.1} parent=11 // pred_region
          _
        $region28: #{cnn_decoder_forward.1} parent=11 // pred_fallthru
          _
        // Predicated region
        $region29: #{cnn_decoder_forward.1} parent=11 // pred_check
          %p226 = pneg %p152
        $region30: #{cnn_decoder_forward.1} parent=11 // pred_check_branch
          %228 = sbr.rel (%p226) target = $region32
        $region31: #{cnn_decoder_forward.1} parent=11 // pred_region
          _
        $region32: #{cnn_decoder_forward.1} parent=11 // pred_fallthru
          _
        // Predicated region
        $region33: #{cnn_decoder_forward.1} parent=11 // pred_check
          %p229 = pneg %p173
        $region34: #{cnn_decoder_forward.1} parent=11 // pred_check_branch
          %231 = sbr.rel (%p229) target = $region36
        $region35: #{cnn_decoder_forward.1} parent=11 // pred_region
          _
        $region36: #{cnn_decoder_forward.1} parent=11 // pred_fallthru
          _
      $region12: #{cnn_decoder_forward.1} parent=5 // pred_fallthru
        _
      %p232 = scmp.lt.s32.totalorder %s21, 2
      // Predicated region
      $region37: #{cnn_decoder_forward.1} parent=5 // pred_check
        %p233 = pneg %p232
      $region38: #{cnn_decoder_forward.1} parent=5 // pred_check_branch
        %235 = sbr.rel (%p233) target = $region40
      $region39: #{cnn_decoder_forward.1} parent=5 // pred_region
        // Predicated region
        $region41: #{cnn_decoder_forward.1} parent=39 // pred_check
          %p236 = pneg %p41
        $region42: #{cnn_decoder_forward.1} parent=39 // pred_check_branch
          %238 = sbr.rel (%p236) target = $region44
        $region43: #{cnn_decoder_forward.1} parent=39 // pred_region
          %s239 = sand.u32 %s31, 1
          %s240 = scalar_lea.sflag [#allocation8], %s239
          %s241 = sand.u32 %s31, 1
          %s242 = smul.addr %s241, 256
          %s243 = scalar_lea.vmem [#allocation7], %s242
          %s245 = ssub.s32 4096, 4096
          %246 = vsyncadd %s240, %s245
          %s247 = smul.addr %s21, 32
          %s248 = smul.addr %s247, 128
          %s249 = scalar_lea.hbm %s0, %s248
          %s250 = sshll.u32 %s243, 4
          %s251 = int_to_ptr.vmem [resolvable:$true] %s250
          %256 = dma.hbm_to_vmem [thread:$0]  %s249, 4096, %s251, %s240, 128, 128, 8
        $region44: #{cnn_decoder_forward.1} parent=39 // pred_fallthru
          _
      $region40: #{cnn_decoder_forward.1} parent=5 // pred_fallthru
        _
      %p257 = scmp.le.s32.totalorder 1, %s21
      %p258 = scmp.lt.s32.totalorder %s21, 3
      %p259 = pnand %p257, %p258
      %p260 = pneg %p259
      // Predicated region
      $region45: #{cnn_decoder_forward.1} parent=5 // pred_check
        _
      $region46: #{cnn_decoder_forward.1} parent=5 // pred_check_branch
        %262 = sbr.rel (%p259) target = $region48
      $region47: #{cnn_decoder_forward.1} parent=5 // pred_region
        %s263 = ssub.s32 %s21, 1
        %s264 = sand.u32 %s34, 1
        %s265 = scalar_lea.sflag [#allocation8], %s264
        %s266 = sand.u32 %s34, 1
        %s267 = smul.addr %s266, 256
        %s268 = scalar_lea.vmem [#allocation7], %s267
        // Predicated region
        $region49: #{cnn_decoder_forward.1} parent=47 // pred_check
          %p269 = pneg %p47
        $region50: #{cnn_decoder_forward.1} parent=47 // pred_check_branch
          %271 = sbr.rel (%p269) target = $region52
        $region51: #{cnn_decoder_forward.1} parent=47 // pred_region
          %272 = dma.done %s265, 4096
        $region52: #{cnn_decoder_forward.1} parent=47 // pred_fallthru
          _
        %s273 = sand.u32 %s34, 1
        %s274 = scalar_lea.sflag [#allocation8], %s273
        %s275 = sand.u32 %s34, 1
        %s276 = smul.addr %s275, 256
        %s277 = scalar_lea.vmem [#allocation7], %s276
        %p278 = pneg %p47
        %p279 = pneg %p44
        %p280 = pneg %p68
        %p281 = pneg %p65
        %p282 = pneg %p89
        %p283 = pneg %p86
        %p284 = pneg %p110
        %p285 = pneg %p107
        %p286 = pneg %p131
        %p287 = pneg %p128
        %p288 = pneg %p152
        %p289 = pneg %p149
        %p290 = pneg %p173
        %p291 = pneg %p170
        %p292 = pneg %p199
        %p293 = pneg %p196
        %s294 = sand.u32 %s186, 1
        %s295 = scalar_lea.sflag [#allocation9], %s294
        %s296 = sand.u32 %s186, 1
        %s297 = smul.addr %s296, 16
        %s298 = scalar_lea.vmem [#allocation10], %s297
        %v299 = vld [vmem:[%s268] sm:$0xff]
        %v300 = vld [vmem:[%s268 + $0x8] sm:$0xff]
        %v301 = vld [vmem:[%s268 + $0x10] sm:$0xff]
        %v302 = vld [vmem:[%s268 + $0x18] sm:$0xff]
        %v303 = vld [vmem:[%s268 + $0x20] sm:$0xff]
        %v304 = vld [vmem:[%s268 + $0x28] sm:$0xff]
        %v305 = vld [vmem:[%s268 + $0x30] sm:$0xff]
        %v306 = vld [vmem:[%s268 + $0x38] sm:$0xff]
        %v307 = vld [vmem:[%s268 + $0x40] sm:$0xff]
        %v308 = vld [vmem:[%s268 + $0x48] sm:$0xff]
        %v309 = vld [vmem:[%s268 + $0x50] sm:$0xff]
        %v310 = vld [vmem:[%s268 + $0x58] sm:$0xff]
        %v311 = vld [vmem:[%s268 + $0x60] sm:$0xff]
        %v312 = vld [vmem:[%s268 + $0x68] sm:$0xff]
        %v313 = vld [vmem:[%s268 + $0x70] sm:$0xff]
        %v314 = vld [vmem:[%s268 + $0x78] sm:$0xff]
        %v315 = vld [vmem:[%s268 + $0x80] sm:$0xff]
        %v316 = vld [vmem:[%s268 + $0x88] sm:$0xff]
        %v317 = vld [vmem:[%s268 + $0x90] sm:$0xff]
        %v318 = vld [vmem:[%s268 + $0x98] sm:$0xff]
        %v319 = vld [vmem:[%s268 + $0xa0] sm:$0xff]
        %v320 = vld [vmem:[%s268 + $0xa8] sm:$0xff]
        %v321 = vld [vmem:[%s268 + $0xb0] sm:$0xff]
        %v322 = vld [vmem:[%s268 + $0xb8] sm:$0xff]
        %v323 = vld [vmem:[%s268 + $0xc0] sm:$0xff]
        %v324 = vld [vmem:[%s268 + $0xc8] sm:$0xff]
        %v325 = vld [vmem:[%s268 + $0xd0] sm:$0xff]
        %v326 = vld [vmem:[%s268 + $0xd8] sm:$0xff]
        %v327 = vld [vmem:[%s268 + $0xe0] sm:$0xff]
        %v328 = vld [vmem:[%s268 + $0xe8] sm:$0xff]
        %v329 = vld [vmem:[%s268 + $0xf0] sm:$0xff]
        %v330 = vld [vmem:[%s268 + $0xf8] sm:$0xff]
        %s331 = scalar_lea.vmem [#allocation2], 24
        %vm332 = vcmask 261120
        %333 = vst.msk [vmem:[%s331 + $0x1] sm:$0xff] %vm332, %v299
        %334 = vst.msk [vmem:[%s331 + $0x9] sm:$0xff] %vm332, %v300
        %335 = vst.msk [vmem:[%s331 + $0x19] sm:$0xff] %vm332, %v301
        %336 = vst.msk [vmem:[%s331 + $0x21] sm:$0xff] %vm332, %v302
        %337 = vst.msk [vmem:[%s331 + $0x31] sm:$0xff] %vm332, %v303
        %338 = vst.msk [vmem:[%s331 + $0x39] sm:$0xff] %vm332, %v304
        %339 = vst.msk [vmem:[%s331 + $0x49] sm:$0xff] %vm332, %v305
        %340 = vst.msk [vmem:[%s331 + $0x51] sm:$0xff] %vm332, %v306
        %341 = vst.msk [vmem:[%s331 + $0x61] sm:$0xff] %vm332, %v307
        %342 = vst.msk [vmem:[%s331 + $0x69] sm:$0xff] %vm332, %v308
        %343 = vst.msk [vmem:[%s331 + $0x79] sm:$0xff] %vm332, %v309
        %344 = vst.msk [vmem:[%s331 + $0x81] sm:$0xff] %vm332, %v310
        %345 = vst.msk [vmem:[%s331 + $0x91] sm:$0xff] %vm332, %v311
        %346 = vst.msk [vmem:[%s331 + $0x99] sm:$0xff] %vm332, %v312
        %347 = vst.msk [vmem:[%s331 + $0xa9] sm:$0xff] %vm332, %v313
        %348 = vst.msk [vmem:[%s331 + $0xb1] sm:$0xff] %vm332, %v314
        %349 = vst.msk [vmem:[%s331 + $0xc1] sm:$0xff] %vm332, %v315
        %350 = vst.msk [vmem:[%s331 + $0xc9] sm:$0xff] %vm332, %v316
        %351 = vst.msk [vmem:[%s331 + $0xd9] sm:$0xff] %vm332, %v317
        %352 = vst.msk [vmem:[%s331 + $0xe1] sm:$0xff] %vm332, %v318
        %353 = vst.msk [vmem:[%s331 + $0xf1] sm:$0xff] %vm332, %v319
        %354 = vst.msk [vmem:[%s331 + $0xf9] sm:$0xff] %vm332, %v320
        %355 = vst.msk [vmem:[%s331 + $0x109] sm:$0xff] %vm332, %v321
        %356 = vst.msk [vmem:[%s331 + $0x111] sm:$0xff] %vm332, %v322
        %357 = vst.msk [vmem:[%s331 + $0x121] sm:$0xff] %vm332, %v323
        %358 = vst.msk [vmem:[%s331 + $0x129] sm:$0xff] %vm332, %v324
        %359 = vst.msk [vmem:[%s331 + $0x139] sm:$0xff] %vm332, %v325
        %360 = vst.msk [vmem:[%s331 + $0x141] sm:$0xff] %vm332, %v326
        %361 = vst.msk [vmem:[%s331 + $0x151] sm:$0xff] %vm332, %v327
        %362 = vst.msk [vmem:[%s331 + $0x159] sm:$0xff] %vm332, %v328
        %363 = vst.msk [vmem:[%s331 + $0x169] sm:$0xff] %vm332, %v329
        %364 = vst.msk [vmem:[%s331 + $0x171] sm:$0xff] %vm332, %v330
        %365 = vst.msk [vmem:[#allocation2 + $0x1] sm:$0xff] %vm332, %v301
        %366 = vst.msk [vmem:[#allocation2 + $0x9] sm:$0xff] %vm332, %v302
        %s367 = scalar_lea.vmem [#allocation2], 408
        %368 = vst.msk [vmem:[%s367 + $0x1] sm:$0xff] %vm332, %v327
        %369 = vst.msk [vmem:[%s367 + $0x9] sm:$0xff] %vm332, %v328
        %v370 = vld [vmem:[#allocation2 + $0x2] sm:$0x1]
        %v371 = vld [vmem:[#allocation2 + $0x1a] sm:$0x1]
        %v372 = vld [vmem:[#allocation2 + $0x32] sm:$0x1]
        %v373 = vld [vmem:[#allocation2 + $0x4a] sm:$0x1]
        %v374 = vld [vmem:[#allocation2 + $0x62] sm:$0x1]
        %v375 = vld [vmem:[#allocation2 + $0x7a] sm:$0x1]
        %v376 = vld [vmem:[#allocation2 + $0x92] sm:$0x1]
        %v377 = vld [vmem:[#allocation2 + $0xaa] sm:$0x1]
        %v378 = vld [vmem:[#allocation2 + $0xc2] sm:$0x1]
        %v379 = vld [vmem:[#allocation2 + $0xda] sm:$0x1]
        %v380 = vld [vmem:[#allocation2 + $0xf2] sm:$0x1]
        %v381 = vld [vmem:[#allocation2 + $0x10a] sm:$0x1]
        %v382 = vld [vmem:[#allocation2 + $0x122] sm:$0x1]
        %v383 = vld [vmem:[#allocation2 + $0x13a] sm:$0x1]
        %v384 = vld [vmem:[#allocation2 + $0x152] sm:$0x1]
        %v385 = vld [vmem:[#allocation2 + $0x16a] sm:$0x1]
        %v386 = vld [vmem:[#allocation2 + $0x182] sm:$0x1]
        %v387 = vld [vmem:[#allocation2 + $0x19a] sm:$0x1]
        %vm388 = vcmask 253952
        %389 = vst.msk [vmem:[#allocation2] sm:$0x1] %vm388, %v370
        %390 = vst.msk [vmem:[#allocation2 + $0x18] sm:$0x1] %vm388, %v371
        %391 = vst.msk [vmem:[#allocation2 + $0x30] sm:$0x1] %vm388, %v372
        %392 = vst.msk [vmem:[#allocation2 + $0x48] sm:$0x1] %vm388, %v373
        %393 = vst.msk [vmem:[#allocation2 + $0x60] sm:$0x1] %vm388, %v374
        %394 = vst.msk [vmem:[#allocation2 + $0x78] sm:$0x1] %vm388, %v375
        %395 = vst.msk [vmem:[#allocation2 + $0x90] sm:$0x1] %vm388, %v376
        %396 = vst.msk [vmem:[#allocation2 + $0xa8] sm:$0x1] %vm388, %v377
        %397 = vst.msk [vmem:[#allocation2 + $0xc0] sm:$0x1] %vm388, %v378
        %398 = vst.msk [vmem:[#allocation2 + $0xd8] sm:$0x1] %vm388, %v379
        %399 = vst.msk [vmem:[#allocation2 + $0xf0] sm:$0x1] %vm388, %v380
        %400 = vst.msk [vmem:[#allocation2 + $0x108] sm:$0x1] %vm388, %v381
        %401 = vst.msk [vmem:[#allocation2 + $0x120] sm:$0x1] %vm388, %v382
        %402 = vst.msk [vmem:[#allocation2 + $0x138] sm:$0x1] %vm388, %v383
        %403 = vst.msk [vmem:[#allocation2 + $0x150] sm:$0x1] %vm388, %v384
        %404 = vst.msk [vmem:[#allocation2 + $0x168] sm:$0x1] %vm388, %v385
        %405 = vst.msk [vmem:[#allocation2 + $0x180] sm:$0x1] %vm388, %v386
        %406 = vst.msk [vmem:[#allocation2 + $0x198] sm:$0x1] %vm388, %v387
        %v407 = vld [vmem:[#allocation2 + $0xf] sm:$0x1]
        %v408 = vld [vmem:[#allocation2 + $0x27] sm:$0x1]
        %v409 = vld [vmem:[#allocation2 + $0x3f] sm:$0x1]
        %v410 = vld [vmem:[#allocation2 + $0x57] sm:$0x1]
        %v411 = vld [vmem:[#allocation2 + $0x6f] sm:$0x1]
        %v412 = vld [vmem:[#allocation2 + $0x87] sm:$0x1]
        %v413 = vld [vmem:[#allocation2 + $0x9f] sm:$0x1]
        %v414 = vld [vmem:[#allocation2 + $0xb7] sm:$0x1]
        %v415 = vld [vmem:[#allocation2 + $0xcf] sm:$0x1]
        %v416 = vld [vmem:[#allocation2 + $0xe7] sm:$0x1]
        %v417 = vld [vmem:[#allocation2 + $0xff] sm:$0x1]
        %v418 = vld [vmem:[#allocation2 + $0x117] sm:$0x1]
        %v419 = vld [vmem:[#allocation2 + $0x12f] sm:$0x1]
        %v420 = vld [vmem:[#allocation2 + $0x147] sm:$0x1]
        %v421 = vld [vmem:[#allocation2 + $0x15f] sm:$0x1]
        %v422 = vld [vmem:[#allocation2 + $0x177] sm:$0x1]
        %v423 = vld [vmem:[#allocation2 + $0x18f] sm:$0x1]
        %v424 = vld [vmem:[#allocation2 + $0x1a7] sm:$0x1]
        %425 = vst.msk [vmem:[#allocation2 + $0x11] sm:$0x1] %vm388, %v407
        %426 = vst.msk [vmem:[#allocation2 + $0x29] sm:$0x1] %vm388, %v408
        %427 = vst.msk [vmem:[#allocation2 + $0x41] sm:$0x1] %vm388, %v409
        %428 = vst.msk [vmem:[#allocation2 + $0x59] sm:$0x1] %vm388, %v410
        %429 = vst.msk [vmem:[#allocation2 + $0x71] sm:$0x1] %vm388, %v411
        %430 = vst.msk [vmem:[#allocation2 + $0x89] sm:$0x1] %vm388, %v412
        %431 = vst.msk [vmem:[#allocation2 + $0xa1] sm:$0x1] %vm388, %v413
        %432 = vst.msk [vmem:[#allocation2 + $0xb9] sm:$0x1] %vm388, %v414
        %433 = vst.msk [vmem:[#allocation2 + $0xd1] sm:$0x1] %vm388, %v415
        %434 = vst.msk [vmem:[#allocation2 + $0xe9] sm:$0x1] %vm388, %v416
        %435 = vst.msk [vmem:[#allocation2 + $0x101] sm:$0x1] %vm388, %v417
        %436 = vst.msk [vmem:[#allocation2 + $0x119] sm:$0x1] %vm388, %v418
        %437 = vst.msk [vmem:[#allocation2 + $0x131] sm:$0x1] %vm388, %v419
        %438 = vst.msk [vmem:[#allocation2 + $0x149] sm:$0x1] %vm388, %v420
        %439 = vst.msk [vmem:[#allocation2 + $0x161] sm:$0x1] %vm388, %v421
        %440 = vst.msk [vmem:[#allocation2 + $0x179] sm:$0x1] %vm388, %v422
        %441 = vst.msk [vmem:[#allocation2 + $0x191] sm:$0x1] %vm388, %v423
        %442 = vst.msk [vmem:[#allocation2 + $0x1a9] sm:$0x1] %vm388, %v424
        %v443 = vld [vmem:[#allocation2] sm:$0xff]
        %v444 = vld [vmem:[#allocation2 + $0x8] sm:$0xff]
        %v445 = vld [vmem:[#allocation2 + $0x18] sm:$0xff]
        %v446 = vld [vmem:[#allocation2 + $0x20] sm:$0xff]
        %v447 = vld [vmem:[#allocation2 + $0x30] sm:$0xff]
        %v448 = vld [vmem:[#allocation2 + $0x38] sm:$0xff]
        %v449 = vld [vmem:[#allocation2 + $0x48] sm:$0xff]
        %v450 = vld [vmem:[#allocation2 + $0x50] sm:$0xff]
        %v451 = vld [vmem:[#allocation2 + $0x60] sm:$0xff]
        %v452 = vld [vmem:[#allocation2 + $0x68] sm:$0xff]
        %v453 = vld [vmem:[#allocation2 + $0x78] sm:$0xff]
        %v454 = vld [vmem:[#allocation2 + $0x80] sm:$0xff]
        %v455 = vld [vmem:[#allocation2 + $0x90] sm:$0xff]
        %v456 = vld [vmem:[#allocation2 + $0x98] sm:$0xff]
        %v457 = vld [vmem:[#allocation2 + $0xa8] sm:$0xff]
        %v458 = vld [vmem:[#allocation2 + $0xb0] sm:$0xff]
        %v459 = vld [vmem:[#allocation2 + $0xc0] sm:$0xff]
        %v460 = vld [vmem:[#allocation2 + $0xc8] sm:$0xff]
        %v461 = vld [vmem:[#allocation2 + $0xd8] sm:$0xff]
        %v462 = vld [vmem:[#allocation2 + $0xe0] sm:$0xff]
        %v463 = vld [vmem:[#allocation2 + $0xf0] sm:$0xff]
        %v464 = vld [vmem:[#allocation2 + $0xf8] sm:$0xff]
        %v465 = vld [vmem:[#allocation2 + $0x108] sm:$0xff]
        %v466 = vld [vmem:[#allocation2 + $0x110] sm:$0xff]
        %v467 = vld [vmem:[#allocation2 + $0x120] sm:$0xff]
        %v468 = vld [vmem:[#allocation2 + $0x128] sm:$0xff]
        %v469 = vld [vmem:[#allocation2 + $0x138] sm:$0xff]
        %v470 = vld [vmem:[#allocation2 + $0x140] sm:$0xff]
        %v471 = vld [vmem:[#allocation2 + $0x150] sm:$0xff]
        %v472 = vld [vmem:[#allocation2 + $0x158] sm:$0xff]
        %v473 = vld [vmem:[#allocation2 + $0x168] sm:$0xff]
        %v474 = vld [vmem:[#allocation2 + $0x170] sm:$0xff]
        %v475 = vld [vmem:[#allocation2 + $0x180] sm:$0xff]
        %v476 = vld [vmem:[#allocation2 + $0x188] sm:$0xff]
        %v477 = vld [vmem:[#allocation2 + $0x198] sm:$0xff]
        %v478 = vld [vmem:[#allocation2 + $0x1a0] sm:$0xff]
        %479 = vst.msk [vmem:[#allocation3] sm:$0xff] %vm332, %v443
        %480 = vst.msk [vmem:[#allocation3 + $0x8] sm:$0xff] %vm332, %v444
        %481 = vst.msk [vmem:[#allocation3 + $0x10] sm:$0xff] %vm332, %v445
        %482 = vst.msk [vmem:[#allocation3 + $0x18] sm:$0xff] %vm332, %v446
        %483 = vst.msk [vmem:[#allocation3 + $0x20] sm:$0xff] %vm332, %v447
        %484 = vst.msk [vmem:[#allocation3 + $0x28] sm:$0xff] %vm332, %v448
        %485 = vst.msk [vmem:[#allocation3 + $0x30] sm:$0xff] %vm332, %v449
        %486 = vst.msk [vmem:[#allocation3 + $0x38] sm:$0xff] %vm332, %v450
        %487 = vst.msk [vmem:[#allocation3 + $0x40] sm:$0xff] %vm332, %v451
        %488 = vst.msk [vmem:[#allocation3 + $0x48] sm:$0xff] %vm332, %v452
        %489 = vst.msk [vmem:[#allocation3 + $0x50] sm:$0xff] %vm332, %v453
        %490 = vst.msk [vmem:[#allocation3 + $0x58] sm:$0xff] %vm332, %v454
        %491 = vst.msk [vmem:[#allocation3 + $0x60] sm:$0xff] %vm332, %v455
        %492 = vst.msk [vmem:[#allocation3 + $0x68] sm:$0xff] %vm332, %v456
        %493 = vst.msk [vmem:[#allocation3 + $0x70] sm:$0xff] %vm332, %v457
        %494 = vst.msk [vmem:[#allocation3 + $0x78] sm:$0xff] %vm332, %v458
        %495 = vst.msk [vmem:[#allocation3 + $0x80] sm:$0xff] %vm332, %v459
        %496 = vst.msk [vmem:[#allocation3 + $0x88] sm:$0xff] %vm332, %v460
        %497 = vst.msk [vmem:[#allocation3 + $0x90] sm:$0xff] %vm332, %v461
        %498 = vst.msk [vmem:[#allocation3 + $0x98] sm:$0xff] %vm332, %v462
        %499 = vst.msk [vmem:[#allocation3 + $0xa0] sm:$0xff] %vm332, %v463
        %500 = vst.msk [vmem:[#allocation3 + $0xa8] sm:$0xff] %vm332, %v464
        %501 = vst.msk [vmem:[#allocation3 + $0xb0] sm:$0xff] %vm332, %v465
        %502 = vst.msk [vmem:[#allocation3 + $0xb8] sm:$0xff] %vm332, %v466
        %503 = vst.msk [vmem:[#allocation3 + $0xc0] sm:$0xff] %vm332, %v467
        %504 = vst.msk [vmem:[#allocation3 + $0xc8] sm:$0xff] %vm332, %v468
        %505 = vst.msk [vmem:[#allocation3 + $0xd0] sm:$0xff] %vm332, %v469
        %506 = vst.msk [vmem:[#allocation3 + $0xd8] sm:$0xff] %vm332, %v470
        %507 = vst.msk [vmem:[#allocation3 + $0xe0] sm:$0xff] %vm332, %v471
        %508 = vst.msk [vmem:[#allocation3 + $0xe8] sm:$0xff] %vm332, %v472
        %509 = vst.msk [vmem:[#allocation3 + $0xf0] sm:$0xff] %vm332, %v473
        %510 = vst.msk [vmem:[#allocation3 + $0xf8] sm:$0xff] %vm332, %v474
        %511 = vst.msk [vmem:[#allocation3 + $0x100] sm:$0xff] %vm332, %v475
        %512 = vst.msk [vmem:[#allocation3 + $0x108] sm:$0xff] %vm332, %v476
        %513 = vst.msk [vmem:[#allocation3 + $0x110] sm:$0xff] %vm332, %v477
        %514 = vst.msk [vmem:[#allocation3 + $0x118] sm:$0xff] %vm332, %v478
        %v515 = vld [vmem:[#allocation2 + $0x1] sm:$0xff]
        %v516 = vld [vmem:[#allocation2 + $0x9] sm:$0xff]
        %v517 = vld [vmem:[#allocation2 + $0x19] sm:$0xff]
        %v518 = vld [vmem:[#allocation2 + $0x21] sm:$0xff]
        %v519 = vld [vmem:[#allocation2 + $0x31] sm:$0xff]
        %v520 = vld [vmem:[#allocation2 + $0x39] sm:$0xff]
        %v521 = vld [vmem:[#allocation2 + $0x49] sm:$0xff]
        %v522 = vld [vmem:[#allocation2 + $0x51] sm:$0xff]
        %v523 = vld [vmem:[#allocation2 + $0x61] sm:$0xff]
        %v524 = vld [vmem:[#allocation2 + $0x69] sm:$0xff]
        %v525 = vld [vmem:[#allocation2 + $0x79] sm:$0xff]
        %v526 = vld [vmem:[#allocation2 + $0x81] sm:$0xff]
        %v527 = vld [vmem:[#allocation2 + $0x91] sm:$0xff]
        %v528 = vld [vmem:[#allocation2 + $0x99] sm:$0xff]
        %v529 = vld [vmem:[#allocation2 + $0xa9] sm:$0xff]
        %v530 = vld [vmem:[#allocation2 + $0xb1] sm:$0xff]
        %v531 = vld [vmem:[#allocation2 + $0xc1] sm:$0xff]
        %v532 = vld [vmem:[#allocation2 + $0xc9] sm:$0xff]
        %v533 = vld [vmem:[#allocation2 + $0xd9] sm:$0xff]
        %v534 = vld [vmem:[#allocation2 + $0xe1] sm:$0xff]
        %v535 = vld [vmem:[#allocation2 + $0xf1] sm:$0xff]
        %v536 = vld [vmem:[#allocation2 + $0xf9] sm:$0xff]
        %v537 = vld [vmem:[#allocation2 + $0x109] sm:$0xff]
        %v538 = vld [vmem:[#allocation2 + $0x111] sm:$0xff]
        %v539 = vld [vmem:[#allocation2 + $0x121] sm:$0xff]
        %v540 = vld [vmem:[#allocation2 + $0x129] sm:$0xff]
        %v541 = vld [vmem:[#allocation2 + $0x139] sm:$0xff]
        %v542 = vld [vmem:[#allocation2 + $0x141] sm:$0xff]
        %v543 = vld [vmem:[#allocation2 + $0x151] sm:$0xff]
        %v544 = vld [vmem:[#allocation2 + $0x159] sm:$0xff]
        %v545 = vld [vmem:[#allocation2 + $0x169] sm:$0xff]
        %v546 = vld [vmem:[#allocation2 + $0x171] sm:$0xff]
        %v547 = vld [vmem:[#allocation2 + $0x181] sm:$0xff]
        %v548 = vld [vmem:[#allocation2 + $0x189] sm:$0xff]
        %v549 = vld [vmem:[#allocation2 + $0x199] sm:$0xff]
        %v550 = vld [vmem:[#allocation2 + $0x1a1] sm:$0xff]
        %587 = vrot.lane.b32.xlu0 %v515, 32
        %v588 = vpop.permute.xlu0 %587
        %589 = vrot.lane.b32.xlu0 %v516, 32
        %v590 = vpop.permute.xlu0 %589
        %591 = vrot.lane.b32.xlu0 %v517, 32
        %v592 = vpop.permute.xlu0 %591
        %593 = vrot.lane.b32.xlu0 %v518, 32
        %v594 = vpop.permute.xlu0 %593
        %595 = vrot.lane.b32.xlu0 %v519, 32
        %v596 = vpop.permute.xlu0 %595
        %597 = vrot.lane.b32.xlu0 %v520, 32
        %v598 = vpop.permute.xlu0 %597
        %599 = vrot.lane.b32.xlu0 %v521, 32
        %v600 = vpop.permute.xlu0 %599
        %601 = vrot.lane.b32.xlu0 %v522, 32
        %v602 = vpop.permute.xlu0 %601
        %603 = vrot.lane.b32.xlu0 %v523, 32
        %v604 = vpop.permute.xlu0 %603
        %605 = vrot.lane.b32.xlu0 %v524, 32
        %v606 = vpop.permute.xlu0 %605
        %607 = vrot.lane.b32.xlu0 %v525, 32
        %v608 = vpop.permute.xlu0 %607
        %609 = vrot.lane.b32.xlu0 %v526, 32
        %v610 = vpop.permute.xlu0 %609
        %611 = vrot.lane.b32.xlu0 %v527, 32
        %v612 = vpop.permute.xlu0 %611
        %613 = vrot.lane.b32.xlu0 %v528, 32
        %v614 = vpop.permute.xlu0 %613
        %615 = vrot.lane.b32.xlu0 %v529, 32
        %v616 = vpop.permute.xlu0 %615
        %617 = vrot.lane.b32.xlu0 %v530, 32
        %v618 = vpop.permute.xlu0 %617
        %619 = vrot.lane.b32.xlu0 %v531, 32
        %v620 = vpop.permute.xlu0 %619
        %621 = vrot.lane.b32.xlu0 %v532, 32
        %v622 = vpop.permute.xlu0 %621
        %623 = vrot.lane.b32.xlu0 %v533, 32
        %v624 = vpop.permute.xlu0 %623
        %625 = vrot.lane.b32.xlu0 %v534, 32
        %v626 = vpop.permute.xlu0 %625
        %627 = vrot.lane.b32.xlu0 %v535, 32
        %v628 = vpop.permute.xlu0 %627
        %629 = vrot.lane.b32.xlu0 %v536, 32
        %v630 = vpop.permute.xlu0 %629
        %631 = vrot.lane.b32.xlu0 %v537, 32
        %v632 = vpop.permute.xlu0 %631
        %633 = vrot.lane.b32.xlu0 %v538, 32
        %v634 = vpop.permute.xlu0 %633
        %635 = vrot.lane.b32.xlu0 %v539, 32
        %v636 = vpop.permute.xlu0 %635
        %637 = vrot.lane.b32.xlu0 %v540, 32
        %v638 = vpop.permute.xlu0 %637
        %639 = vrot.lane.b32.xlu0 %v541, 32
        %v640 = vpop.permute.xlu0 %639
        %641 = vrot.lane.b32.xlu0 %v542, 32
        %v642 = vpop.permute.xlu0 %641
        %643 = vrot.lane.b32.xlu0 %v543, 32
        %v644 = vpop.permute.xlu0 %643
        %645 = vrot.lane.b32.xlu0 %v544, 32
        %v646 = vpop.permute.xlu0 %645
        %647 = vrot.lane.b32.xlu0 %v545, 32
        %v648 = vpop.permute.xlu0 %647
        %649 = vrot.lane.b32.xlu0 %v546, 32
        %v650 = vpop.permute.xlu0 %649
        %651 = vrot.lane.b32.xlu0 %v547, 32
        %v652 = vpop.permute.xlu0 %651
        %653 = vrot.lane.b32.xlu0 %v548, 32
        %v654 = vpop.permute.xlu0 %653
        %655 = vrot.lane.b32.xlu0 %v549, 32
        %v656 = vpop.permute.xlu0 %655
        %657 = vrot.lane.b32.xlu0 %v550, 32
        %v658 = vpop.permute.xlu0 %657
        %vm695 = vcmask 523520
        %696 = vst.msk [vmem:[#allocation3] sm:$0xff] %vm695, %v588
        %697 = vst.msk [vmem:[#allocation3 + $0x8] sm:$0xff] %vm695, %v590
        %698 = vst.msk [vmem:[#allocation3 + $0x10] sm:$0xff] %vm695, %v592
        %699 = vst.msk [vmem:[#allocation3 + $0x18] sm:$0xff] %vm695, %v594
        %700 = vst.msk [vmem:[#allocation3 + $0x20] sm:$0xff] %vm695, %v596
        %701 = vst.msk [vmem:[#allocation3 + $0x28] sm:$0xff] %vm695, %v598
        %702 = vst.msk [vmem:[#allocation3 + $0x30] sm:$0xff] %vm695, %v600
        %703 = vst.msk [vmem:[#allocation3 + $0x38] sm:$0xff] %vm695, %v602
        %704 = vst.msk [vmem:[#allocation3 + $0x40] sm:$0xff] %vm695, %v604
        %705 = vst.msk [vmem:[#allocation3 + $0x48] sm:$0xff] %vm695, %v606
        %706 = vst.msk [vmem:[#allocation3 + $0x50] sm:$0xff] %vm695, %v608
        %707 = vst.msk [vmem:[#allocation3 + $0x58] sm:$0xff] %vm695, %v610
        %708 = vst.msk [vmem:[#allocation3 + $0x60] sm:$0xff] %vm695, %v612
        %709 = vst.msk [vmem:[#allocation3 + $0x68] sm:$0xff] %vm695, %v614
        %710 = vst.msk [vmem:[#allocation3 + $0x70] sm:$0xff] %vm695, %v616
        %711 = vst.msk [vmem:[#allocation3 + $0x78] sm:$0xff] %vm695, %v618
        %712 = vst.msk [vmem:[#allocation3 + $0x80] sm:$0xff] %vm695, %v620
        %713 = vst.msk [vmem:[#allocation3 + $0x88] sm:$0xff] %vm695, %v622
        %714 = vst.msk [vmem:[#allocation3 + $0x90] sm:$0xff] %vm695, %v624
        %715 = vst.msk [vmem:[#allocation3 + $0x98] sm:$0xff] %vm695, %v626
        %716 = vst.msk [vmem:[#allocation3 + $0xa0] sm:$0xff] %vm695, %v628
        %717 = vst.msk [vmem:[#allocation3 + $0xa8] sm:$0xff] %vm695, %v630
        %718 = vst.msk [vmem:[#allocation3 + $0xb0] sm:$0xff] %vm695, %v632
        %719 = vst.msk [vmem:[#allocation3 + $0xb8] sm:$0xff] %vm695, %v634
        %720 = vst.msk [vmem:[#allocation3 + $0xc0] sm:$0xff] %vm695, %v636
        %721 = vst.msk [vmem:[#allocation3 + $0xc8] sm:$0xff] %vm695, %v638
        %722 = vst.msk [vmem:[#allocation3 + $0xd0] sm:$0xff] %vm695, %v640
        %723 = vst.msk [vmem:[#allocation3 + $0xd8] sm:$0xff] %vm695, %v642
        %724 = vst.msk [vmem:[#allocation3 + $0xe0] sm:$0xff] %vm695, %v644
        %725 = vst.msk [vmem:[#allocation3 + $0xe8] sm:$0xff] %vm695, %v646
        %726 = vst.msk [vmem:[#allocation3 + $0xf0] sm:$0xff] %vm695, %v648
        %727 = vst.msk [vmem:[#allocation3 + $0xf8] sm:$0xff] %vm695, %v650
        %728 = vst.msk [vmem:[#allocation3 + $0x100] sm:$0xff] %vm695, %v652
        %729 = vst.msk [vmem:[#allocation3 + $0x108] sm:$0xff] %vm695, %v654
        %730 = vst.msk [vmem:[#allocation3 + $0x110] sm:$0xff] %vm695, %v656
        %731 = vst.msk [vmem:[#allocation3 + $0x118] sm:$0xff] %vm695, %v658
        %v732 = vld [vmem:[#allocation2 + $0x2] sm:$0xff]
        %v733 = vld [vmem:[#allocation2 + $0xa] sm:$0xff]
        %v734 = vld [vmem:[#allocation2 + $0x1a] sm:$0xff]
        %v735 = vld [vmem:[#allocation2 + $0x22] sm:$0xff]
        %v736 = vld [vmem:[#allocation2 + $0x32] sm:$0xff]
        %v737 = vld [vmem:[#allocation2 + $0x3a] sm:$0xff]
        %v738 = vld [vmem:[#allocation2 + $0x4a] sm:$0xff]
        %v739 = vld [vmem:[#allocation2 + $0x52] sm:$0xff]
        %v740 = vld [vmem:[#allocation2 + $0x62] sm:$0xff]
        %v741 = vld [vmem:[#allocation2 + $0x6a] sm:$0xff]
        %v742 = vld [vmem:[#allocation2 + $0x7a] sm:$0xff]
        %v743 = vld [vmem:[#allocation2 + $0x82] sm:$0xff]
        %v744 = vld [vmem:[#allocation2 + $0x92] sm:$0xff]
        %v745 = vld [vmem:[#allocation2 + $0x9a] sm:$0xff]
        %v746 = vld [vmem:[#allocation2 + $0xaa] sm:$0xff]
        %v747 = vld [vmem:[#allocation2 + $0xb2] sm:$0xff]
        %v748 = vld [vmem:[#allocation2 + $0xc2] sm:$0xff]
        %v749 = vld [vmem:[#allocation2 + $0xca] sm:$0xff]
        %v750 = vld [vmem:[#allocation2 + $0xda] sm:$0xff]
        %v751 = vld [vmem:[#allocation2 + $0xe2] sm:$0xff]
        %v752 = vld [vmem:[#allocation2 + $0xf2] sm:$0xff]
        %v753 = vld [vmem:[#allocation2 + $0xfa] sm:$0xff]
        %v754 = vld [vmem:[#allocation2 + $0x10a] sm:$0xff]
        %v755 = vld [vmem:[#allocation2 + $0x112] sm:$0xff]
        %v756 = vld [vmem:[#allocation2 + $0x122] sm:$0xff]
        %v757 = vld [vmem:[#allocation2 + $0x12a] sm:$0xff]
        %v758 = vld [vmem:[#allocation2 + $0x13a] sm:$0xff]
        %v759 = vld [vmem:[#allocation2 + $0x142] sm:$0xff]
        %v760 = vld [vmem:[#allocation2 + $0x152] sm:$0xff]
        %v761 = vld [vmem:[#allocation2 + $0x15a] sm:$0xff]
        %v762 = vld [vmem:[#allocation2 + $0x16a] sm:$0xff]
        %v763 = vld [vmem:[#allocation2 + $0x172] sm:$0xff]
        %v764 = vld [vmem:[#allocation2 + $0x182] sm:$0xff]
        %v765 = vld [vmem:[#allocation2 + $0x18a] sm:$0xff]
        %v766 = vld [vmem:[#allocation2 + $0x19a] sm:$0xff]
        %v767 = vld [vmem:[#allocation2 + $0x1a2] sm:$0xff]
        %804 = vrot.lane.b32.xlu0 %v732, 64
        %v805 = vpop.permute.xlu0 %804
        %806 = vrot.lane.b32.xlu0 %v733, 64
        %v807 = vpop.permute.xlu0 %806
        %808 = vrot.lane.b32.xlu0 %v734, 64
        %v809 = vpop.permute.xlu0 %808
        %810 = vrot.lane.b32.xlu0 %v735, 64
        %v811 = vpop.permute.xlu0 %810
        %812 = vrot.lane.b32.xlu0 %v736, 64
        %v813 = vpop.permute.xlu0 %812
        %814 = vrot.lane.b32.xlu0 %v737, 64
        %v815 = vpop.permute.xlu0 %814
        %816 = vrot.lane.b32.xlu0 %v738, 64
        %v817 = vpop.permute.xlu0 %816
        %818 = vrot.lane.b32.xlu0 %v739, 64
        %v819 = vpop.permute.xlu0 %818
        %820 = vrot.lane.b32.xlu0 %v740, 64
        %v821 = vpop.permute.xlu0 %820
        %822 = vrot.lane.b32.xlu0 %v741, 64
        %v823 = vpop.permute.xlu0 %822
        %824 = vrot.lane.b32.xlu0 %v742, 64
        %v825 = vpop.permute.xlu0 %824
        %826 = vrot.lane.b32.xlu0 %v743, 64
        %v827 = vpop.permute.xlu0 %826
        %828 = vrot.lane.b32.xlu0 %v744, 64
        %v829 = vpop.permute.xlu0 %828
        %830 = vrot.lane.b32.xlu0 %v745, 64
        %v831 = vpop.permute.xlu0 %830
        %832 = vrot.lane.b32.xlu0 %v746, 64
        %v833 = vpop.permute.xlu0 %832
        %834 = vrot.lane.b32.xlu0 %v747, 64
        %v835 = vpop.permute.xlu0 %834
        %836 = vrot.lane.b32.xlu0 %v748, 64
        %v837 = vpop.permute.xlu0 %836
        %838 = vrot.lane.b32.xlu0 %v749, 64
        %v839 = vpop.permute.xlu0 %838
        %840 = vrot.lane.b32.xlu0 %v750, 64
        %v841 = vpop.permute.xlu0 %840
        %842 = vrot.lane.b32.xlu0 %v751, 64
        %v843 = vpop.permute.xlu0 %842
        %844 = vrot.lane.b32.xlu0 %v752, 64
        %v845 = vpop.permute.xlu0 %844
        %846 = vrot.lane.b32.xlu0 %v753, 64
        %v847 = vpop.permute.xlu0 %846
        %848 = vrot.lane.b32.xlu0 %v754, 64
        %v849 = vpop.permute.xlu0 %848
        %850 = vrot.lane.b32.xlu0 %v755, 64
        %v851 = vpop.permute.xlu0 %850
        %852 = vrot.lane.b32.xlu0 %v756, 64
        %v853 = vpop.permute.xlu0 %852
        %854 = vrot.lane.b32.xlu0 %v757, 64
        %v855 = vpop.permute.xlu0 %854
        %856 = vrot.lane.b32.xlu0 %v758, 64
        %v857 = vpop.permute.xlu0 %856
        %858 = vrot.lane.b32.xlu0 %v759, 64
        %v859 = vpop.permute.xlu0 %858
        %860 = vrot.lane.b32.xlu0 %v760, 64
        %v861 = vpop.permute.xlu0 %860
        %862 = vrot.lane.b32.xlu0 %v761, 64
        %v863 = vpop.permute.xlu0 %862
        %864 = vrot.lane.b32.xlu0 %v762, 64
        %v865 = vpop.permute.xlu0 %864
        %866 = vrot.lane.b32.xlu0 %v763, 64
        %v867 = vpop.permute.xlu0 %866
        %868 = vrot.lane.b32.xlu0 %v764, 64
        %v869 = vpop.permute.xlu0 %868
        %870 = vrot.lane.b32.xlu0 %v765, 64
        %v871 = vpop.permute.xlu0 %870
        %872 = vrot.lane.b32.xlu0 %v766, 64
        %v873 = vpop.permute.xlu0 %872
        %874 = vrot.lane.b32.xlu0 %v767, 64
        %v875 = vpop.permute.xlu0 %874
        %vm912 = vcmask 785920
        %913 = vst.msk [vmem:[#allocation3] sm:$0xff] %vm912, %v805
        %914 = vst.msk [vmem:[#allocation3 + $0x8] sm:$0xff] %vm912, %v807
        %915 = vst.msk [vmem:[#allocation3 + $0x10] sm:$0xff] %vm912, %v809
        %916 = vst.msk [vmem:[#allocation3 + $0x18] sm:$0xff] %vm912, %v811
        %917 = vst.msk [vmem:[#allocation3 + $0x20] sm:$0xff] %vm912, %v813
        %918 = vst.msk [vmem:[#allocation3 + $0x28] sm:$0xff] %vm912, %v815
        %919 = vst.msk [vmem:[#allocation3 + $0x30] sm:$0xff] %vm912, %v817
        %920 = vst.msk [vmem:[#allocation3 + $0x38] sm:$0xff] %vm912, %v819
        %921 = vst.msk [vmem:[#allocation3 + $0x40] sm:$0xff] %vm912, %v821
        %922 = vst.msk [vmem:[#allocation3 + $0x48] sm:$0xff] %vm912, %v823
        %923 = vst.msk [vmem:[#allocation3 + $0x50] sm:$0xff] %vm912, %v825
        %924 = vst.msk [vmem:[#allocation3 + $0x58] sm:$0xff] %vm912, %v827
        %925 = vst.msk [vmem:[#allocation3 + $0x60] sm:$0xff] %vm912, %v829
        %926 = vst.msk [vmem:[#allocation3 + $0x68] sm:$0xff] %vm912, %v831
        %927 = vst.msk [vmem:[#allocation3 + $0x70] sm:$0xff] %vm912, %v833
        %928 = vst.msk [vmem:[#allocation3 + $0x78] sm:$0xff] %vm912, %v835
        %929 = vst.msk [vmem:[#allocation3 + $0x80] sm:$0xff] %vm912, %v837
        %930 = vst.msk [vmem:[#allocation3 + $0x88] sm:$0xff] %vm912, %v839
        %931 = vst.msk [vmem:[#allocation3 + $0x90] sm:$0xff] %vm912, %v841
        %932 = vst.msk [vmem:[#allocation3 + $0x98] sm:$0xff] %vm912, %v843
        %933 = vst.msk [vmem:[#allocation3 + $0xa0] sm:$0xff] %vm912, %v845
        %934 = vst.msk [vmem:[#allocation3 + $0xa8] sm:$0xff] %vm912, %v847
        %935 = vst.msk [vmem:[#allocation3 + $0xb0] sm:$0xff] %vm912, %v849
        %936 = vst.msk [vmem:[#allocation3 + $0xb8] sm:$0xff] %vm912, %v851
        %937 = vst.msk [vmem:[#allocation3 + $0xc0] sm:$0xff] %vm912, %v853
        %938 = vst.msk [vmem:[#allocation3 + $0xc8] sm:$0xff] %vm912, %v855
        %939 = vst.msk [vmem:[#allocation3 + $0xd0] sm:$0xff] %vm912, %v857
        %940 = vst.msk [vmem:[#allocation3 + $0xd8] sm:$0xff] %vm912, %v859
        %941 = vst.msk [vmem:[#allocation3 + $0xe0] sm:$0xff] %vm912, %v861
        %942 = vst.msk [vmem:[#allocation3 + $0xe8] sm:$0xff] %vm912, %v863
        %943 = vst.msk [vmem:[#allocation3 + $0xf0] sm:$0xff] %vm912, %v865
        %944 = vst.msk [vmem:[#allocation3 + $0xf8] sm:$0xff] %vm912, %v867
        %945 = vst.msk [vmem:[#allocation3 + $0x100] sm:$0xff] %vm912, %v869
        %946 = vst.msk [vmem:[#allocation3 + $0x108] sm:$0xff] %vm912, %v871
        %947 = vst.msk [vmem:[#allocation3 + $0x110] sm:$0xff] %vm912, %v873
        %948 = vst.msk [vmem:[#allocation3 + $0x118] sm:$0xff] %vm912, %v875
        %v949 = vld [vmem:[#allocation3] sm:$0xff]
        %v950 = vld [vmem:[#allocation3 + $0x8] sm:$0xff]
        %v951 = vld [vmem:[#allocation3 + $0x10] sm:$0xff]
        %v952 = vld [vmem:[#allocation3 + $0x18] sm:$0xff]
        %v953 = vld [vmem:[#allocation3 + $0x20] sm:$0xff]
        %v954 = vld [vmem:[#allocation3 + $0x28] sm:$0xff]
        %v955 = vld [vmem:[#allocation3 + $0x30] sm:$0xff]
        %v956 = vld [vmem:[#allocation3 + $0x38] sm:$0xff]
        %v957 = vld [vmem:[#allocation3 + $0x40] sm:$0xff]
        %v958 = vld [vmem:[#allocation3 + $0x48] sm:$0xff]
        %v959 = vld [vmem:[#allocation3 + $0x50] sm:$0xff]
        %v960 = vld [vmem:[#allocation3 + $0x58] sm:$0xff]
        %v961 = vld [vmem:[#allocation3 + $0x60] sm:$0xff]
        %v962 = vld [vmem:[#allocation3 + $0x68] sm:$0xff]
        %v963 = vld [vmem:[#allocation3 + $0x70] sm:$0xff]
        %v964 = vld [vmem:[#allocation3 + $0x78] sm:$0xff]
        %v965 = vld [vmem:[#allocation3 + $0x80] sm:$0xff]
        %v966 = vld [vmem:[#allocation3 + $0x88] sm:$0xff]
        %v967 = vld [vmem:[#allocation3 + $0x90] sm:$0xff]
        %v968 = vld [vmem:[#allocation3 + $0x98] sm:$0xff]
        %v969 = vld [vmem:[#allocation3 + $0xa0] sm:$0xff]
        %v970 = vld [vmem:[#allocation3 + $0xa8] sm:$0xff]
        %v971 = vld [vmem:[#allocation3 + $0xb0] sm:$0xff]
        %v972 = vld [vmem:[#allocation3 + $0xb8] sm:$0xff]
        %v973 = vld [vmem:[#allocation3 + $0xc0] sm:$0xff]
        %v974 = vld [vmem:[#allocation3 + $0xc8] sm:$0xff]
        %v975 = vld [vmem:[#allocation3 + $0xd0] sm:$0xff]
        %v976 = vld [vmem:[#allocation3 + $0xd8] sm:$0xff]
        %v977 = vld [vmem:[#allocation3 + $0xe0] sm:$0xff]
        %v978 = vld [vmem:[#allocation3 + $0xe8] sm:$0xff]
        %v979 = vld [vmem:[#allocation3 + $0xf0] sm:$0xff]
        %v980 = vld [vmem:[#allocation3 + $0xf8] sm:$0xff]
        %v981 = vld [vmem:[%s1] sm:$0xff]
        %v982 = vld [vmem:[%s1 + $0x8] sm:$0xff]
        %v983 = vld [vmem:[%s1 + $0x10] sm:$0xff]
        %v984 = vld [vmem:[%s1 + $0x18] sm:$0xff]
        %v985 = vld [vmem:[%s1 + $0x20] sm:$0xff]
        %v986 = vld [vmem:[%s1 + $0x28] sm:$0xff]
        %v987 = vld [vmem:[%s1 + $0x30] sm:$0xff]
        %v988 = vld [vmem:[%s1 + $0x38] sm:$0xff]
        %v989 = vld [vmem:[%s1 + $0x40] sm:$0xff]
        %v990 = vld [vmem:[%s1 + $0x48] sm:$0xff]
        %v991 = vld [vmem:[%s1 + $0x50] sm:$0xff]
        %v992 = vld [vmem:[%s1 + $0x58] sm:$0xff]
        %s993 = scalar_lea.vmem [#allocation3], 16
        %v994 = vld [vmem:[%s993] sm:$0xff]
        %v995 = vld [vmem:[%s993 + $0x8] sm:$0xff]
        %v996 = vld [vmem:[%s993 + $0x10] sm:$0xff]
        %v997 = vld [vmem:[%s993 + $0x18] sm:$0xff]
        %v998 = vld [vmem:[%s993 + $0x20] sm:$0xff]
        %v999 = vld [vmem:[%s993 + $0x28] sm:$0xff]
        %v1000 = vld [vmem:[%s993 + $0x30] sm:$0xff]
        %v1001 = vld [vmem:[%s993 + $0x38] sm:$0xff]
        %v1002 = vld [vmem:[%s993 + $0x40] sm:$0xff]
        %v1003 = vld [vmem:[%s993 + $0x48] sm:$0xff]
        %v1004 = vld [vmem:[%s993 + $0x50] sm:$0xff]
        %v1005 = vld [vmem:[%s993 + $0x58] sm:$0xff]
        %v1006 = vld [vmem:[%s993 + $0x60] sm:$0xff]
        %v1007 = vld [vmem:[%s993 + $0x68] sm:$0xff]
        %v1008 = vld [vmem:[%s993 + $0x70] sm:$0xff]
        %v1009 = vld [vmem:[%s993 + $0x78] sm:$0xff]
        %v1010 = vld [vmem:[%s993 + $0x80] sm:$0xff]
        %v1011 = vld [vmem:[%s993 + $0x88] sm:$0xff]
        %v1012 = vld [vmem:[%s993 + $0x90] sm:$0xff]
        %v1013 = vld [vmem:[%s993 + $0x98] sm:$0xff]
        %v1014 = vld [vmem:[%s993 + $0xa0] sm:$0xff]
        %v1015 = vld [vmem:[%s993 + $0xa8] sm:$0xff]
        %v1016 = vld [vmem:[%s993 + $0xb0] sm:$0xff]
        %v1017 = vld [vmem:[%s993 + $0xb8] sm:$0xff]
        %v1018 = vld [vmem:[%s993 + $0xc0] sm:$0xff]
        %v1019 = vld [vmem:[%s993 + $0xc8] sm:$0xff]
        %v1020 = vld [vmem:[%s993 + $0xd0] sm:$0xff]
        %v1021 = vld [vmem:[%s993 + $0xd8] sm:$0xff]
        %v1022 = vld [vmem:[%s993 + $0xe0] sm:$0xff]
        %v1023 = vld [vmem:[%s993 + $0xe8] sm:$0xff]
        %v1024 = vld [vmem:[%s993 + $0xf0] sm:$0xff]
        %v1025 = vld [vmem:[%s993 + $0xf8] sm:$0xff]
        %s1026 = scalar_lea.vmem %s1, 96
        %v1027 = vld [vmem:[%s1026] sm:$0xff]
        %v1028 = vld [vmem:[%s1026 + $0x8] sm:$0xff]
        %v1029 = vld [vmem:[%s1026 + $0x10] sm:$0xff]
        %v1030 = vld [vmem:[%s1026 + $0x18] sm:$0xff]
        %v1031 = vld [vmem:[%s1026 + $0x20] sm:$0xff]
        %v1032 = vld [vmem:[%s1026 + $0x28] sm:$0xff]
        %v1033 = vld [vmem:[%s1026 + $0x30] sm:$0xff]
        %v1034 = vld [vmem:[%s1026 + $0x38] sm:$0xff]
        %v1035 = vld [vmem:[%s1026 + $0x40] sm:$0xff]
        %v1036 = vld [vmem:[%s1026 + $0x48] sm:$0xff]
        %v1037 = vld [vmem:[%s1026 + $0x50] sm:$0xff]
        %v1038 = vld [vmem:[%s1026 + $0x58] sm:$0xff]
        %vm1039 = vcmask 785408
        %v1041 = vsel %vm1039, %v994, 0
        %v1044 = vsel %vm1039, %v995, 0
        %v1047 = vsel %vm1039, %v996, 0
        %v1050 = vsel %vm1039, %v997, 0
        %v1053 = vsel %vm1039, %v998, 0
        %v1056 = vsel %vm1039, %v999, 0
        %v1059 = vsel %vm1039, %v1000, 0
        %v1062 = vsel %vm1039, %v1001, 0
        %v1065 = vsel %vm1039, %v1002, 0
        %v1068 = vsel %vm1039, %v1003, 0
        %v1071 = vsel %vm1039, %v1004, 0
        %v1074 = vsel %vm1039, %v1005, 0
        %v1077 = vsel %vm1039, %v1006, 0
        %v1080 = vsel %vm1039, %v1007, 0
        %v1083 = vsel %vm1039, %v1008, 0
        %v1086 = vsel %vm1039, %v1009, 0
        %v1089 = vsel %vm1039, %v1010, 0
        %v1092 = vsel %vm1039, %v1011, 0
        %v1095 = vsel %vm1039, %v1012, 0
        %v1098 = vsel %vm1039, %v1013, 0
        %v1101 = vsel %vm1039, %v1014, 0
        %v1104 = vsel %vm1039, %v1015, 0
        %v1107 = vsel %vm1039, %v1016, 0
        %v1110 = vsel %vm1039, %v1017, 0
        %v1113 = vsel %vm1039, %v1018, 0
        %v1116 = vsel %vm1039, %v1019, 0
        %v1119 = vsel %vm1039, %v1020, 0
        %v1122 = vsel %vm1039, %v1021, 0
        %v1125 = vsel %vm1039, %v1022, 0
        %v1128 = vsel %vm1039, %v1023, 0
        %v1131 = vsel %vm1039, %v1024, 0
        %v1134 = vsel %vm1039, %v1025, 0
        %1136 = vmatprep.subr.mxu0 0.0
        %1137 = vmatpush1.msra.mxu0 %v1027
        %1138 = vmatprep.subr.mxu0 0.0
        %1139 = vmatpush1.msra.mxu0 %v1028
        %1140 = vmatprep.subr.mxu0 0.0
        %1141 = vmatpush1.msra.mxu0 %v1029
        %1142 = vmatprep.subr.mxu0 0.0
        %1143 = vmatpush1.msra.mxu0 %v1030
        %1144 = vmatprep.subr.mxu0 0.0
        %1145 = vmatpush1.msra.mxu0 %v1031
        %1146 = vmatprep.subr.mxu0 0.0
        %1147 = vmatpush1.msra.mxu0 %v1032
        %1148 = vmatprep.subr.mxu0 0.0
        %1149 = vmatpush1.msra.mxu0 %v1033
        %1150 = vmatprep.subr.mxu0 0.0
        %1151 = vmatpush1.msra.mxu0 %v1034
        %1152 = vmatprep.subr.mxu0 0.0
        %1153 = vmatpush1.msra.mxu0 %v1035
        %1154 = vmatprep.subr.mxu0 0.0
        %1155 = vmatpush1.msra.mxu0 %v1036
        %1156 = vmatprep.subr.mxu0 0.0
        %1157 = vmatpush1.msra.mxu0 %v1037
        %1158 = vmatprep.subr.mxu0 0.0
        %1159 = vmatpush1.msra.mxu0 %v1038
        %1160 = vmatprep.subr.mxu0 0.0
        %1161 = vmatpush1.msra.mxu0 0.0
        %1162 = vmatprep.subr.mxu0 0.0
        %1163 = vmatpush1.msra.mxu0 0.0
        %1164 = vmatprep.subr.mxu0 0.0
        %1165 = vmatpush1.msra.mxu0 0.0
        %1166 = vmatprep.subr.mxu0 0.0
        %1167 = vmatpush1.msra.mxu0 0.0
        %1168 = vmatprep.subr.mxu0 0.0
        %1169 = vmatpush1.msra.mxu0 0.0
        %1170 = vmatprep.subr.mxu0 0.0
        %1171 = vmatpush1.msra.mxu0 0.0
        %1172 = vmatprep.subr.mxu0 0.0
        %1173 = vmatpush1.msra.mxu0 0.0
        %1174 = vmatprep.subr.mxu0 0.0
        %1175 = vmatpush1.msra.mxu0 0.0
        %1176 = vmatprep.subr.mxu0 0.0
        %1177 = vmatpush1.msra.mxu0 0.0
        %1178 = vmatprep.subr.mxu0 0.0
        %1179 = vmatpush1.msra.mxu0 0.0
        %1180 = vmatprep.subr.mxu0 0.0
        %1181 = vmatpush1.msra.mxu0 0.0
        %1182 = vmatprep.subr.mxu0 0.0
        %1183 = vmatpush1.msra.mxu0 0.0
        %1184 = vmatprep.subr.mxu0 0.0
        %1185 = vmatpush1.msra.mxu0 0.0
        %1186 = vmatprep.subr.mxu0 0.0
        %1187 = vmatpush1.msra.mxu0 0.0
        %1188 = vmatprep.subr.mxu0 0.0
        %1189 = vmatpush1.msra.mxu0 0.0
        %1190 = vmatprep.subr.mxu0 0.0
        %1191 = vmatpush1.msra.mxu0 0.0
        %1192 = vmatprep.subr.mxu0 0.0
        %1193 = vmatpush1.msra.mxu0 0.0
        %1194 = vmatprep.subr.mxu0 0.0
        %1195 = vmatpush1.msra.mxu0 0.0
        %1196 = vmatprep.subr.mxu0 0.0
        %1197 = vmatpush1.msra.mxu0 0.0
        %1198 = vmatprep.subr.mxu0 0.0
        %1199 = vmatpush1.msra.mxu0 0.0
        %1200 = vmatprep.mubr.f32.mxu0 0.0
        %1201 = vmatmul.mubr.f32.gmra.mrb[0].mxu0 %v1041
        %v1202 = vpop.f32.mrb[0].mxu0
        %v1203 = vadd.f32 0.0, %v1202
        %v1204 = vpop.f32.mrb[0].mxu0
        %1205 = vmatprep.mubr.f32.mxu0 0.0
        %1206 = vmatmul.mubr.f32.gmra.mrb[0].mxu0 %v1044
        %v1207 = vpop.f32.mrb[0].mxu0
        %v1208 = vadd.f32 0.0, %v1207
        %v1209 = vpop.f32.mrb[0].mxu0
        %1210 = vmatprep.mubr.f32.mxu0 0.0
        %1211 = vmatmul.mubr.f32.gmra.mrb[0].mxu0 %v1047
        %v1212 = vpop.f32.mrb[0].mxu0
        %v1213 = vadd.f32 0.0, %v1212
        %v1214 = vpop.f32.mrb[0].mxu0
        %1215 = vmatprep.mubr.f32.mxu0 0.0
        %1216 = vmatmul.mubr.f32.gmra.mrb[0].mxu0 %v1050
        %v1217 = vpop.f32.mrb[0].mxu0
        %v1218 = vadd.f32 0.0, %v1217
        %v1219 = vpop.f32.mrb[0].mxu0
        %1220 = vmatprep.mubr.f32.mxu0 0.0
        %1221 = vmatmul.mubr.f32.gmra.mrb[0].mxu0 %v1053
        %v1222 = vpop.f32.mrb[0].mxu0
        %v1223 = vadd.f32 0.0, %v1222
        %v1224 = vpop.f32.mrb[0].mxu0
        %1225 = vmatprep.mubr.f32.mxu0 0.0
        %1226 = vmatmul.mubr.f32.gmra.mrb[0].mxu0 %v1056
        %v1227 = vpop.f32.mrb[0].mxu0
        %v1228 = vadd.f32 0.0, %v1227
        %v1229 = vpop.f32.mrb[0].mxu0
        %1230 = vmatprep.mubr.f32.mxu0 0.0
        %1231 = vmatmul.mubr.f32.gmra.mrb[0].mxu0 %v1059
        %v1232 = vpop.f32.mrb[0].mxu0
        %v1233 = vadd.f32 0.0, %v1232
        %v1234 = vpop.f32.mrb[0].mxu0
        %1235 = vmatprep.mubr.f32.mxu0 0.0
        %1236 = vmatmul.mubr.f32.gmra.mrb[0].mxu0 %v1062
        %v1237 = vpop.f32.mrb[0].mxu0
        %v1238 = vadd.f32 0.0, %v1237
        %v1239 = vpop.f32.mrb[0].mxu0
        %1240 = vmatprep.mubr.f32.mxu0 0.0
        %1241 = vmatmul.mubr.f32.gmra.mrb[0].mxu0 %v1065
        %v1242 = vpop.f32.mrb[0].mxu0
        %v1243 = vadd.f32 0.0, %v1242
        %v1244 = vpop.f32.mrb[0].mxu0
        %1245 = vmatprep.mubr.f32.mxu0 0.0
        %1246 = vmatmul.mubr.f32.gmra.mrb[0].mxu0 %v1068
        %v1247 = vpop.f32.mrb[0].mxu0
        %v1248 = vadd.f32 0.0, %v1247
        %v1249 = vpop.f32.mrb[0].mxu0
        %1250 = vmatprep.mubr.f32.mxu0 0.0
        %1251 = vmatmul.mubr.f32.gmra.mrb[0].mxu0 %v1071
        %v1252 = vpop.f32.mrb[0].mxu0
        %v1253 = vadd.f32 0.0, %v1252
        %v1254 = vpop.f32.mrb[0].mxu0
        %1255 = vmatprep.mubr.f32.mxu0 0.0
        %1256 = vmatmul.mubr.f32.gmra.mrb[0].mxu0 %v1074
        %v1257 = vpop.f32.mrb[0].mxu0
        %v1258 = vadd.f32 0.0, %v1257
        %v1259 = vpop.f32.mrb[0].mxu0
        %1260 = vmatprep.mubr.f32.mxu0 0.0
        %1261 = vmatmul.mubr.f32.gmra.mrb[0].mxu0 %v1077
        %v1262 = vpop.f32.mrb[0].mxu0
        %v1263 = vadd.f32 0.0, %v1262
        %v1264 = vpop.f32.mrb[0].mxu0
        %1265 = vmatprep.mubr.f32.mxu0 0.0
        %1266 = vmatmul.mubr.f32.gmra.mrb[0].mxu0 %v1080
        %v1267 = vpop.f32.mrb[0].mxu0
        %v1268 = vadd.f32 0.0, %v1267
        %v1269 = vpop.f32.mrb[0].mxu0
        %1270 = vmatprep.mubr.f32.mxu0 0.0
        %1271 = vmatmul.mubr.f32.gmra.mrb[0].mxu0 %v1083
        %v1272 = vpop.f32.mrb[0].mxu0
        %v1273 = vadd.f32 0.0, %v1272
        %v1274 = vpop.f32.mrb[0].mxu0
        %1275 = vmatprep.mubr.f32.mxu0 0.0
        %1276 = vmatmul.mubr.f32.gmra.mrb[0].mxu0 %v1086
        %v1277 = vpop.f32.mrb[0].mxu0
        %v1278 = vadd.f32 0.0, %v1277
        %v1279 = vpop.f32.mrb[0].mxu0
        %1280 = vmatprep.mubr.f32.mxu0 0.0
        %1281 = vmatmul.mubr.f32.gmra.mrb[0].mxu0 %v1089
        %v1282 = vpop.f32.mrb[0].mxu0
        %v1283 = vadd.f32 0.0, %v1282
        %v1284 = vpop.f32.mrb[0].mxu0
        %1285 = vmatprep.mubr.f32.mxu0 0.0
        %1286 = vmatmul.mubr.f32.gmra.mrb[0].mxu0 %v1092
        %v1287 = vpop.f32.mrb[0].mxu0
        %v1288 = vadd.f32 0.0, %v1287
        %v1289 = vpop.f32.mrb[0].mxu0
        %1290 = vmatprep.mubr.f32.mxu0 0.0
        %1291 = vmatmul.mubr.f32.gmra.mrb[0].mxu0 %v1095
        %v1292 = vpop.f32.mrb[0].mxu0
        %v1293 = vadd.f32 0.0, %v1292
        %v1294 = vpop.f32.mrb[0].mxu0
        %1295 = vmatprep.mubr.f32.mxu0 0.0
        %1296 = vmatmul.mubr.f32.gmra.mrb[0].mxu0 %v1098
        %v1297 = vpop.f32.mrb[0].mxu0
        %v1298 = vadd.f32 0.0, %v1297
        %v1299 = vpop.f32.mrb[0].mxu0
        %1300 = vmatprep.mubr.f32.mxu0 0.0
        %1301 = vmatmul.mubr.f32.gmra.mrb[0].mxu0 %v1101
        %v1302 = vpop.f32.mrb[0].mxu0
        %v1303 = vadd.f32 0.0, %v1302
        %v1304 = vpop.f32.mrb[0].mxu0
        %1305 = vmatprep.mubr.f32.mxu0 0.0
        %1306 = vmatmul.mubr.f32.gmra.mrb[0].mxu0 %v1104
        %v1307 = vpop.f32.mrb[0].mxu0
        %v1308 = vadd.f32 0.0, %v1307
        %v1309 = vpop.f32.mrb[0].mxu0
        %1310 = vmatprep.mubr.f32.mxu0 0.0
        %1311 = vmatmul.mubr.f32.gmra.mrb[0].mxu0 %v1107
        %v1312 = vpop.f32.mrb[0].mxu0
        %v1313 = vadd.f32 0.0, %v1312
        %v1314 = vpop.f32.mrb[0].mxu0
        %1315 = vmatprep.mubr.f32.mxu0 0.0
        %1316 = vmatmul.mubr.f32.gmra.mrb[0].mxu0 %v1110
        %v1317 = vpop.f32.mrb[0].mxu0
        %v1318 = vadd.f32 0.0, %v1317
        %v1319 = vpop.f32.mrb[0].mxu0
        %1320 = vmatprep.mubr.f32.mxu0 0.0
        %1321 = vmatmul.mubr.f32.gmra.mrb[0].mxu0 %v1113
        %v1322 = vpop.f32.mrb[0].mxu0
        %v1323 = vadd.f32 0.0, %v1322
        %v1324 = vpop.f32.mrb[0].mxu0
        %1325 = vmatprep.mubr.f32.mxu0 0.0
        %1326 = vmatmul.mubr.f32.gmra.mrb[0].mxu0 %v1116
        %v1327 = vpop.f32.mrb[0].mxu0
        %v1328 = vadd.f32 0.0, %v1327
        %v1329 = vpop.f32.mrb[0].mxu0
        %1330 = vmatprep.mubr.f32.mxu0 0.0
        %1331 = vmatmul.mubr.f32.gmra.mrb[0].mxu0 %v1119
        %v1332 = vpop.f32.mrb[0].mxu0
        %v1333 = vadd.f32 0.0, %v1332
        %v1334 = vpop.f32.mrb[0].mxu0
        %1335 = vmatprep.mubr.f32.mxu0 0.0
        %1336 = vmatmul.mubr.f32.gmra.mrb[0].mxu0 %v1122
        %v1337 = vpop.f32.mrb[0].mxu0
        %v1338 = vadd.f32 0.0, %v1337
        %v1339 = vpop.f32.mrb[0].mxu0
        %1340 = vmatprep.mubr.f32.mxu0 0.0
        %1341 = vmatmul.mubr.f32.gmra.mrb[0].mxu0 %v1125
        %v1342 = vpop.f32.mrb[0].mxu0
        %v1343 = vadd.f32 0.0, %v1342
        %v1344 = vpop.f32.mrb[0].mxu0
        %1345 = vmatprep.mubr.f32.mxu0 0.0
        %1346 = vmatmul.mubr.f32.gmra.mrb[0].mxu0 %v1128
        %v1347 = vpop.f32.mrb[0].mxu0
        %v1348 = vadd.f32 0.0, %v1347
        %v1349 = vpop.f32.mrb[0].mxu0
        %1350 = vmatprep.mubr.f32.mxu0 0.0
        %1351 = vmatmul.mubr.f32.gmra.mrb[0].mxu0 %v1131
        %v1352 = vpop.f32.mrb[0].mxu0
        %v1353 = vadd.f32 0.0, %v1352
        %v1354 = vpop.f32.mrb[0].mxu0
        %1355 = vmatprep.mubr.f32.mxu0 0.0
        %1356 = vmatmul.mubr.f32.gmra.mrb[0].mxu0 %v1134
        %v1357 = vpop.f32.mrb[0].mxu0
        %v1358 = vadd.f32 0.0, %v1357
        %v1359 = vpop.f32.mrb[0].mxu0
        %1360 = vdwg.mxu0
        %v1362 = vsel %vm1039, %v949, 0
        %v1365 = vsel %vm1039, %v950, 0
        %v1368 = vsel %vm1039, %v951, 0
        %v1371 = vsel %vm1039, %v952, 0
        %v1374 = vsel %vm1039, %v953, 0
        %v1377 = vsel %vm1039, %v954, 0
        %v1380 = vsel %vm1039, %v955, 0
        %v1383 = vsel %vm1039, %v956, 0
        %v1386 = vsel %vm1039, %v957, 0
        %v1389 = vsel %vm1039, %v958, 0
        %v1392 = vsel %vm1039, %v959, 0
        %v1395 = vsel %vm1039, %v960, 0
        %v1398 = vsel %vm1039, %v961, 0
        %v1401 = vsel %vm1039, %v962, 0
        %v1404 = vsel %vm1039, %v963, 0
        %v1407 = vsel %vm1039, %v964, 0
        %v1410 = vsel %vm1039, %v965, 0
        %v1413 = vsel %vm1039, %v966, 0
        %v1416 = vsel %vm1039, %v967, 0
        %v1419 = vsel %vm1039, %v968, 0
        %v1422 = vsel %vm1039, %v969, 0
        %v1425 = vsel %vm1039, %v970, 0
        %v1428 = vsel %vm1039, %v971, 0
        %v1431 = vsel %vm1039, %v972, 0
        %v1434 = vsel %vm1039, %v973, 0
        %v1437 = vsel %vm1039, %v974, 0
        %v1440 = vsel %vm1039, %v975, 0
        %v1443 = vsel %vm1039, %v976, 0
        %v1446 = vsel %vm1039, %v977, 0
        %v1449 = vsel %vm1039, %v978, 0
        %v1452 = vsel %vm1039, %v979, 0
        %v1455 = vsel %vm1039, %v980, 0
        %1457 = vmatprep.subr.mxu0 0.0
        %1458 = vmatpush1.msra.mxu0 %v981
        %1459 = vmatprep.subr.mxu0 0.0
        %1460 = vmatpush1.msra.mxu0 %v982
        %1461 = vmatprep.subr.mxu0 0.0
        %1462 = vmatpush1.msra.mxu0 %v983
        %1463 = vmatprep.subr.mxu0 0.0
        %1464 = vmatpush1.msra.mxu0 %v984
        %1465 = vmatprep.subr.mxu0 0.0
        %1466 = vmatpush1.msra.mxu0 %v985
        %1467 = vmatprep.subr.mxu0 0.0
        %1468 = vmatpush1.msra.mxu0 %v986
        %1469 = vmatprep.subr.mxu0 0.0
        %1470 = vmatpush1.msra.mxu0 %v987
        %1471 = vmatprep.subr.mxu0 0.0
        %1472 = vmatpush1.msra.mxu0 %v988
        %1473 = vmatprep.subr.mxu0 0.0
        %1474 = vmatpush1.msra.mxu0 %v989
        %1475 = vmatprep.subr.mxu0 0.0
        %1476 = vmatpush1.msra.mxu0 %v990
        %1477 = vmatprep.subr.mxu0 0.0
        %1478 = vmatpush1.msra.mxu0 %v991
        %1479 = vmatprep.subr.mxu0 0.0
        %1480 = vmatpush1.msra.mxu0 %v992
        %1481 = vmatprep.subr.mxu0 0.0
        %1482 = vmatpush1.msra.mxu0 0.0
        %1483 = vmatprep.subr.mxu0 0.0
        %1484 = vmatpush1.msra.mxu0 0.0
        %1485 = vmatprep.subr.mxu0 0.0
        %1486 = vmatpush1.msra.mxu0 0.0
        %1487 = vmatprep.subr.mxu0 0.0
        %1488 = vmatpush1.msra.mxu0 0.0
        %1489 = vmatprep.subr.mxu0 0.0
        %1490 = vmatpush1.msra.mxu0 0.0
        %1491 = vmatprep.subr.mxu0 0.0
        %1492 = vmatpush1.msra.mxu0 0.0
        %1493 = vmatprep.subr.mxu0 0.0
        %1494 = vmatpush1.msra.mxu0 0.0
        %1495 = vmatprep.subr.mxu0 0.0
        %1496 = vmatpush1.msra.mxu0 0.0
        %1497 = vmatprep.subr.mxu0 0.0
        %1498 = vmatpush1.msra.mxu0 0.0
        %1499 = vmatprep.subr.mxu0 0.0
        %1500 = vmatpush1.msra.mxu0 0.0
        %1501 = vmatprep.subr.mxu0 0.0
        %1502 = vmatpush1.msra.mxu0 0.0
        %1503 = vmatprep.subr.mxu0 0.0
        %1504 = vmatpush1.msra.mxu0 0.0
        %1505 = vmatprep.subr.mxu0 0.0
        %1506 = vmatpush1.msra.mxu0 0.0
        %1507 = vmatprep.subr.mxu0 0.0
        %1508 = vmatpush1.msra.mxu0 0.0
        %1509 = vmatprep.subr.mxu0 0.0
        %1510 = vmatpush1.msra.mxu0 0.0
        %1511 = vmatprep.subr.mxu0 0.0
        %1512 = vmatpush1.msra.mxu0 0.0
        %1513 = vmatprep.subr.mxu0 0.0
        %1514 = vmatpush1.msra.mxu0 0.0
        %1515 = vmatprep.subr.mxu0 0.0
        %1516 = vmatpush1.msra.mxu0 0.0
        %1517 = vmatprep.subr.mxu0 0.0
        %1518 = vmatpush1.msra.mxu0 0.0
        %1519 = vmatprep.subr.mxu0 0.0
        %1520 = vmatpush1.msra.mxu0 0.0
        %1521 = vmatprep.mubr.f32.mxu0 0.0
        %1522 = vmatmul.mubr.f32.gmra.mrb[0].mxu0 %v1362
        %v1523 = vpop.f32.mrb[0].mxu0
        %v1524 = vadd.f32 %v1203, %v1523
        %v1525 = vpop.f32.mrb[0].mxu0
        %1526 = vmatprep.mubr.f32.mxu0 0.0
        %1527 = vmatmul.mubr.f32.gmra.mrb[0].mxu0 %v1365
        %v1528 = vpop.f32.mrb[0].mxu0
        %v1529 = vadd.f32 %v1208, %v1528
        %v1530 = vpop.f32.mrb[0].mxu0
        %1531 = vmatprep.mubr.f32.mxu0 0.0
        %1532 = vmatmul.mubr.f32.gmra.mrb[0].mxu0 %v1368
        %v1533 = vpop.f32.mrb[0].mxu0
        %v1534 = vadd.f32 %v1213, %v1533
        %v1535 = vpop.f32.mrb[0].mxu0
        %1536 = vmatprep.mubr.f32.mxu0 0.0
        %1537 = vmatmul.mubr.f32.gmra.mrb[0].mxu0 %v1371
        %v1538 = vpop.f32.mrb[0].mxu0
        %v1539 = vadd.f32 %v1218, %v1538
        %v1540 = vpop.f32.mrb[0].mxu0
        %1541 = vmatprep.mubr.f32.mxu0 0.0
        %1542 = vmatmul.mubr.f32.gmra.mrb[0].mxu0 %v1374
        %v1543 = vpop.f32.mrb[0].mxu0
        %v1544 = vadd.f32 %v1223, %v1543
        %v1545 = vpop.f32.mrb[0].mxu0
        %1546 = vmatprep.mubr.f32.mxu0 0.0
        %1547 = vmatmul.mubr.f32.gmra.mrb[0].mxu0 %v1377
        %v1548 = vpop.f32.mrb[0].mxu0
        %v1549 = vadd.f32 %v1228, %v1548
        %v1550 = vpop.f32.mrb[0].mxu0
        %1551 = vmatprep.mubr.f32.mxu0 0.0
        %1552 = vmatmul.mubr.f32.gmra.mrb[0].mxu0 %v1380
        %v1553 = vpop.f32.mrb[0].mxu0
        %v1554 = vadd.f32 %v1233, %v1553
        %v1555 = vpop.f32.mrb[0].mxu0
        %1556 = vmatprep.mubr.f32.mxu0 0.0
        %1557 = vmatmul.mubr.f32.gmra.mrb[0].mxu0 %v1383
        %v1558 = vpop.f32.mrb[0].mxu0
        %v1559 = vadd.f32 %v1238, %v1558
        %v1560 = vpop.f32.mrb[0].mxu0
        %1561 = vmatprep.mubr.f32.mxu0 0.0
        %1562 = vmatmul.mubr.f32.gmra.mrb[0].mxu0 %v1386
        %v1563 = vpop.f32.mrb[0].mxu0
        %v1564 = vadd.f32 %v1243, %v1563
        %v1565 = vpop.f32.mrb[0].mxu0
        %1566 = vmatprep.mubr.f32.mxu0 0.0
        %1567 = vmatmul.mubr.f32.gmra.mrb[0].mxu0 %v1389
        %v1568 = vpop.f32.mrb[0].mxu0
        %v1569 = vadd.f32 %v1248, %v1568
        %v1570 = vpop.f32.mrb[0].mxu0
        %1571 = vmatprep.mubr.f32.mxu0 0.0
        %1572 = vmatmul.mubr.f32.gmra.mrb[0].mxu0 %v1392
        %v1573 = vpop.f32.mrb[0].mxu0
        %v1574 = vadd.f32 %v1253, %v1573
        %v1575 = vpop.f32.mrb[0].mxu0
        %1576 = vmatprep.mubr.f32.mxu0 0.0
        %1577 = vmatmul.mubr.f32.gmra.mrb[0].mxu0 %v1395
        %v1578 = vpop.f32.mrb[0].mxu0
        %v1579 = vadd.f32 %v1258, %v1578
        %v1580 = vpop.f32.mrb[0].mxu0
        %1581 = vmatprep.mubr.f32.mxu0 0.0
        %1582 = vmatmul.mubr.f32.gmra.mrb[0].mxu0 %v1398
        %v1583 = vpop.f32.mrb[0].mxu0
        %v1584 = vadd.f32 %v1263, %v1583
        %v1585 = vpop.f32.mrb[0].mxu0
        %1586 = vmatprep.mubr.f32.mxu0 0.0
        %1587 = vmatmul.mubr.f32.gmra.mrb[0].mxu0 %v1401
        %v1588 = vpop.f32.mrb[0].mxu0
        %v1589 = vadd.f32 %v1268, %v1588
        %v1590 = vpop.f32.mrb[0].mxu0
        %1591 = vmatprep.mubr.f32.mxu0 0.0
        %1592 = vmatmul.mubr.f32.gmra.mrb[0].mxu0 %v1404
        %v1593 = vpop.f32.mrb[0].mxu0
        %v1594 = vadd.f32 %v1273, %v1593
        %v1595 = vpop.f32.mrb[0].mxu0
        %1596 = vmatprep.mubr.f32.mxu0 0.0
        %1597 = vmatmul.mubr.f32.gmra.mrb[0].mxu0 %v1407
        %v1598 = vpop.f32.mrb[0].mxu0
        %v1599 = vadd.f32 %v1278, %v1598
        %v1600 = vpop.f32.mrb[0].mxu0
        %1601 = vmatprep.mubr.f32.mxu0 0.0
        %1602 = vmatmul.mubr.f32.gmra.mrb[0].mxu0 %v1410
        %v1603 = vpop.f32.mrb[0].mxu0
        %v1604 = vadd.f32 %v1283, %v1603
        %v1605 = vpop.f32.mrb[0].mxu0
        %1606 = vmatprep.mubr.f32.mxu0 0.0
        %1607 = vmatmul.mubr.f32.gmra.mrb[0].mxu0 %v1413
        %v1608 = vpop.f32.mrb[0].mxu0
        %v1609 = vadd.f32 %v1288, %v1608
        %v1610 = vpop.f32.mrb[0].mxu0
        %1611 = vmatprep.mubr.f32.mxu0 0.0
        %1612 = vmatmul.mubr.f32.gmra.mrb[0].mxu0 %v1416
        %v1613 = vpop.f32.mrb[0].mxu0
        %v1614 = vadd.f32 %v1293, %v1613
        %v1615 = vpop.f32.mrb[0].mxu0
        %1616 = vmatprep.mubr.f32.mxu0 0.0
        %1617 = vmatmul.mubr.f32.gmra.mrb[0].mxu0 %v1419
        %v1618 = vpop.f32.mrb[0].mxu0
        %v1619 = vadd.f32 %v1298, %v1618
        %v1620 = vpop.f32.mrb[0].mxu0
        %1621 = vmatprep.mubr.f32.mxu0 0.0
        %1622 = vmatmul.mubr.f32.gmra.mrb[0].mxu0 %v1422
        %v1623 = vpop.f32.mrb[0].mxu0
        %v1624 = vadd.f32 %v1303, %v1623
        %v1625 = vpop.f32.mrb[0].mxu0
        %1626 = vmatprep.mubr.f32.mxu0 0.0
        %1627 = vmatmul.mubr.f32.gmra.mrb[0].mxu0 %v1425
        %v1628 = vpop.f32.mrb[0].mxu0
        %v1629 = vadd.f32 %v1308, %v1628
        %v1630 = vpop.f32.mrb[0].mxu0
        %1631 = vmatprep.mubr.f32.mxu0 0.0
        %1632 = vmatmul.mubr.f32.gmra.mrb[0].mxu0 %v1428
        %v1633 = vpop.f32.mrb[0].mxu0
        %v1634 = vadd.f32 %v1313, %v1633
        %v1635 = vpop.f32.mrb[0].mxu0
        %1636 = vmatprep.mubr.f32.mxu0 0.0
        %1637 = vmatmul.mubr.f32.gmra.mrb[0].mxu0 %v1431
        %v1638 = vpop.f32.mrb[0].mxu0
        %v1639 = vadd.f32 %v1318, %v1638
        %v1640 = vpop.f32.mrb[0].mxu0
        %1641 = vmatprep.mubr.f32.mxu0 0.0
        %1642 = vmatmul.mubr.f32.gmra.mrb[0].mxu0 %v1434
        %v1643 = vpop.f32.mrb[0].mxu0
        %v1644 = vadd.f32 %v1323, %v1643
        %v1645 = vpop.f32.mrb[0].mxu0
        %1646 = vmatprep.mubr.f32.mxu0 0.0
        %1647 = vmatmul.mubr.f32.gmra.mrb[0].mxu0 %v1437
        %v1648 = vpop.f32.mrb[0].mxu0
        %v1649 = vadd.f32 %v1328, %v1648
        %v1650 = vpop.f32.mrb[0].mxu0
        %1651 = vmatprep.mubr.f32.mxu0 0.0
        %1652 = vmatmul.mubr.f32.gmra.mrb[0].mxu0 %v1440
        %v1653 = vpop.f32.mrb[0].mxu0
        %v1654 = vadd.f32 %v1333, %v1653
        %v1655 = vpop.f32.mrb[0].mxu0
        %1656 = vmatprep.mubr.f32.mxu0 0.0
        %1657 = vmatmul.mubr.f32.gmra.mrb[0].mxu0 %v1443
        %v1658 = vpop.f32.mrb[0].mxu0
        %v1659 = vadd.f32 %v1338, %v1658
        %v1660 = vpop.f32.mrb[0].mxu0
        %1661 = vmatprep.mubr.f32.mxu0 0.0
        %1662 = vmatmul.mubr.f32.gmra.mrb[0].mxu0 %v1446
        %v1663 = vpop.f32.mrb[0].mxu0
        %v1664 = vadd.f32 %v1343, %v1663
        %v1665 = vpop.f32.mrb[0].mxu0
        %1666 = vmatprep.mubr.f32.mxu0 0.0
        %1667 = vmatmul.mubr.f32.gmra.mrb[0].mxu0 %v1449
        %v1668 = vpop.f32.mrb[0].mxu0
        %v1669 = vadd.f32 %v1348, %v1668
        %v1670 = vpop.f32.mrb[0].mxu0
        %1671 = vmatprep.mubr.f32.mxu0 0.0
        %1672 = vmatmul.mubr.f32.gmra.mrb[0].mxu0 %v1452
        %v1673 = vpop.f32.mrb[0].mxu0
        %v1674 = vadd.f32 %v1353, %v1673
        %v1675 = vpop.f32.mrb[0].mxu0
        %1676 = vmatprep.mubr.f32.mxu0 0.0
        %1677 = vmatmul.mubr.f32.gmra.mrb[0].mxu0 %v1455
        %v1678 = vpop.f32.mrb[0].mxu0
        %v1679 = vadd.f32 %v1358, %v1678
        %v1680 = vpop.f32.mrb[0].mxu0
        %1681 = vdwg.mxu0
        %s1682 = scalar_lea.vmem [#allocation3], 32
        %v1683 = vld [vmem:[%s1682] sm:$0xff]
        %v1684 = vld [vmem:[%s1682 + $0x8] sm:$0xff]
        %v1685 = vld [vmem:[%s1682 + $0x10] sm:$0xff]
        %v1686 = vld [vmem:[%s1682 + $0x18] sm:$0xff]
        %v1687 = vld [vmem:[%s1682 + $0x20] sm:$0xff]
        %v1688 = vld [vmem:[%s1682 + $0x28] sm:$0xff]
        %v1689 = vld [vmem:[%s1682 + $0x30] sm:$0xff]
        %v1690 = vld [vmem:[%s1682 + $0x38] sm:$0xff]
        %v1691 = vld [vmem:[%s1682 + $0x40] sm:$0xff]
        %v1692 = vld [vmem:[%s1682 + $0x48] sm:$0xff]
        %v1693 = vld [vmem:[%s1682 + $0x50] sm:$0xff]
        %v1694 = vld [vmem:[%s1682 + $0x58] sm:$0xff]
        %v1695 = vld [vmem:[%s1682 + $0x60] sm:$0xff]
        %v1696 = vld [vmem:[%s1682 + $0x68] sm:$0xff]
        %v1697 = vld [vmem:[%s1682 + $0x70] sm:$0xff]
        %v1698 = vld [vmem:[%s1682 + $0x78] sm:$0xff]
        %v1699 = vld [vmem:[%s1682 + $0x80] sm:$0xff]
        %v1700 = vld [vmem:[%s1682 + $0x88] sm:$0xff]
        %v1701 = vld [vmem:[%s1682 + $0x90] sm:$0xff]
        %v1702 = vld [vmem:[%s1682 + $0x98] sm:$0xff]
        %v1703 = vld [vmem:[%s1682 + $0xa0] sm:$0xff]
        %v1704 = vld [vmem:[%s1682 + $0xa8] sm:$0xff]
        %v1705 = vld [vmem:[%s1682 + $0xb0] sm:$0xff]
        %v1706 = vld [vmem:[%s1682 + $0xb8] sm:$0xff]
        %v1707 = vld [vmem:[%s1682 + $0xc0] sm:$0xff]
        %v1708 = vld [vmem:[%s1682 + $0xc8] sm:$0xff]
        %v1709 = vld [vmem:[%s1682 + $0xd0] sm:$0xff]
        %v1710 = vld [vmem:[%s1682 + $0xd8] sm:$0xff]
        %v1711 = vld [vmem:[%s1682 + $0xe0] sm:$0xff]
        %v1712 = vld [vmem:[%s1682 + $0xe8] sm:$0xff]
        %v1713 = vld [vmem:[%s1682 + $0xf0] sm:$0xff]
        %v1714 = vld [vmem:[%s1682 + $0xf8] sm:$0xff]
        %s1715 = scalar_lea.vmem %s1, 192
        %v1716 = vld [vmem:[%s1715] sm:$0xff]
        %v1717 = vld [vmem:[%s1715 + $0x8] sm:$0xff]
        %v1718 = vld [vmem:[%s1715 + $0x10] sm:$0xff]
        %v1719 = vld [vmem:[%s1715 + $0x18] sm:$0xff]
        %v1720 = vld [vmem:[%s1715 + $0x20] sm:$0xff]
        %v1721 = vld [vmem:[%s1715 + $0x28] sm:$0xff]
        %v1722 = vld [vmem:[%s1715 + $0x30] sm:$0xff]
        %v1723 = vld [vmem:[%s1715 + $0x38] sm:$0xff]
        %v1724 = vld [vmem:[%s1715 + $0x40] sm:$0xff]
        %v1725 = vld [vmem:[%s1715 + $0x48] sm:$0xff]
        %v1726 = vld [vmem:[%s1715 + $0x50] sm:$0xff]
        %v1727 = vld [vmem:[%s1715 + $0x58] sm:$0xff]
        %v1729 = vsel %vm1039, %v1683, 0
        %v1732 = vsel %vm1039, %v1684, 0
        %v1735 = vsel %vm1039, %v1685, 0
        %v1738 = vsel %vm1039, %v1686, 0
        %v1741 = vsel %vm1039, %v1687, 0
        %v1744 = vsel %vm1039, %v1688, 0
        %v1747 = vsel %vm1039, %v1689, 0
        %v1750 = vsel %vm1039, %v1690, 0
        %v1753 = vsel %vm1039, %v1691, 0
        %v1756 = vsel %vm1039, %v1692, 0
        %v1759 = vsel %vm1039, %v1693, 0
        %v1762 = vsel %vm1039, %v1694, 0
        %v1765 = vsel %vm1039, %v1695, 0
        %v1768 = vsel %vm1039, %v1696, 0
        %v1771 = vsel %vm1039, %v1697, 0
        %v1774 = vsel %vm1039, %v1698, 0
        %v1777 = vsel %vm1039, %v1699, 0
        %v1780 = vsel %vm1039, %v1700, 0
        %v1783 = vsel %vm1039, %v1701, 0
        %v1786 = vsel %vm1039, %v1702, 0
        %v1789 = vsel %vm1039, %v1703, 0
        %v1792 = vsel %vm1039, %v1704, 0
        %v1795 = vsel %vm1039, %v1705, 0
        %v1798 = vsel %vm1039, %v1706, 0
        %v1801 = vsel %vm1039, %v1707, 0
        %v1804 = vsel %vm1039, %v1708, 0
        %v1807 = vsel %vm1039, %v1709, 0
        %v1810 = vsel %vm1039, %v1710, 0
        %v1813 = vsel %vm1039, %v1711, 0
        %v1816 = vsel %vm1039, %v1712, 0
        %v1819 = vsel %vm1039, %v1713, 0
        %v1822 = vsel %vm1039, %v1714, 0
        %1824 = vmatprep.subr.mxu0 0.0
        %1825 = vmatpush1.msra.mxu0 %v1716
        %1826 = vmatprep.subr.mxu0 0.0
        %1827 = vmatpush1.msra.mxu0 %v1717
        %1828 = vmatprep.subr.mxu0 0.0
        %1829 = vmatpush1.msra.mxu0 %v1718
        %1830 = vmatprep.subr.mxu0 0.0
        %1831 = vmatpush1.msra.mxu0 %v1719
        %1832 = vmatprep.subr.mxu0 0.0
        %1833 = vmatpush1.msra.mxu0 %v1720
        %1834 = vmatprep.subr.mxu0 0.0
        %1835 = vmatpush1.msra.mxu0 %v1721
        %1836 = vmatprep.subr.mxu0 0.0
        %1837 = vmatpush1.msra.mxu0 %v1722
        %1838 = vmatprep.subr.mxu0 0.0
        %1839 = vmatpush1.msra.mxu0 %v1723
        %1840 = vmatprep.subr.mxu0 0.0
        %1841 = vmatpush1.msra.mxu0 %v1724
        %1842 = vmatprep.subr.mxu0 0.0
        %1843 = vmatpush1.msra.mxu0 %v1725
        %1844 = vmatprep.subr.mxu0 0.0
        %1845 = vmatpush1.msra.mxu0 %v1726
        %1846 = vmatprep.subr.mxu0 0.0
        %1847 = vmatpush1.msra.mxu0 %v1727
        %1848 = vmatprep.subr.mxu0 0.0
        %1849 = vmatpush1.msra.mxu0 0.0
        %1850 = vmatprep.subr.mxu0 0.0
        %1851 = vmatpush1.msra.mxu0 0.0
        %1852 = vmatprep.subr.mxu0 0.0
        %1853 = vmatpush1.msra.mxu0 0.0
        %1854 = vmatprep.subr.mxu0 0.0
        %1855 = vmatpush1.msra.mxu0 0.0
        %1856 = vmatprep.subr.mxu0 0.0
        %1857 = vmatpush1.msra.mxu0 0.0
        %1858 = vmatprep.subr.mxu0 0.0
        %1859 = vmatpush1.msra.mxu0 0.0
        %1860 = vmatprep.subr.mxu0 0.0
        %1861 = vmatpush1.msra.mxu0 0.0
        %1862 = vmatprep.subr.mxu0 0.0
        %1863 = vmatpush1.msra.mxu0 0.0
        %1864 = vmatprep.subr.mxu0 0.0
        %1865 = vmatpush1.msra.mxu0 0.0
        %1866 = vmatprep.subr.mxu0 0.0
        %1867 = vmatpush1.msra.mxu0 0.0
        %1868 = vmatprep.subr.mxu0 0.0
        %1869 = vmatpush1.msra.mxu0 0.0
        %1870 = vmatprep.subr.mxu0 0.0
        %1871 = vmatpush1.msra.mxu0 0.0
        %1872 = vmatprep.subr.mxu0 0.0
        %1873 = vmatpush1.msra.mxu0 0.0
        %1874 = vmatprep.subr.mxu0 0.0
        %1875 = vmatpush1.msra.mxu0 0.0
        %1876 = vmatprep.subr.mxu0 0.0
        %1877 = vmatpush1.msra.mxu0 0.0
        %1878 = vmatprep.subr.mxu0 0.0
        %1879 = vmatpush1.msra.mxu0 0.0
        %1880 = vmatprep.subr.mxu0 0.0
        %1881 = vmatpush1.msra.mxu0 0.0
        %1882 = vmatprep.subr.mxu0 0.0
        %1883 = vmatpush1.msra.mxu0 0.0
        %1884 = vmatprep.subr.mxu0 0.0
        %1885 = vmatpush1.msra.mxu0 0.0
        %1886 = vmatprep.subr.mxu0 0.0
        %1887 = vmatpush1.msra.mxu0 0.0
        %1888 = vmatprep.mubr.f32.mxu0 0.0
        %1889 = vmatmul.mubr.f32.gmra.mrb[0].mxu0 %v1729
        %v1890 = vpop.f32.mrb[0].mxu0
        %v1891 = vadd.f32 0.0, %v1890
        %v1892 = vpop.f32.mrb[0].mxu0
        %1893 = vmatprep.mubr.f32.mxu0 0.0
        %1894 = vmatmul.mubr.f32.gmra.mrb[0].mxu0 %v1732
        %v1895 = vpop.f32.mrb[0].mxu0
        %v1896 = vadd.f32 0.0, %v1895
        %v1897 = vpop.f32.mrb[0].mxu0
        %1898 = vmatprep.mubr.f32.mxu0 0.0
        %1899 = vmatmul.mubr.f32.gmra.mrb[0].mxu0 %v1735
        %v1900 = vpop.f32.mrb[0].mxu0
        %v1901 = vadd.f32 0.0, %v1900
        %v1902 = vpop.f32.mrb[0].mxu0
        %1903 = vmatprep.mubr.f32.mxu0 0.0
        %1904 = vmatmul.mubr.f32.gmra.mrb[0].mxu0 %v1738
        %v1905 = vpop.f32.mrb[0].mxu0
        %v1906 = vadd.f32 0.0, %v1905
        %v1907 = vpop.f32.mrb[0].mxu0
        %1908 = vmatprep.mubr.f32.mxu0 0.0
        %1909 = vmatmul.mubr.f32.gmra.mrb[0].mxu0 %v1741
        %v1910 = vpop.f32.mrb[0].mxu0
        %v1911 = vadd.f32 0.0, %v1910
        %v1912 = vpop.f32.mrb[0].mxu0
        %1913 = vmatprep.mubr.f32.mxu0 0.0
        %1914 = vmatmul.mubr.f32.gmra.mrb[0].mxu0 %v1744
        %v1915 = vpop.f32.mrb[0].mxu0
        %v1916 = vadd.f32 0.0, %v1915
        %v1917 = vpop.f32.mrb[0].mxu0
        %1918 = vmatprep.mubr.f32.mxu0 0.0
        %1919 = vmatmul.mubr.f32.gmra.mrb[0].mxu0 %v1747
        %v1920 = vpop.f32.mrb[0].mxu0
        %v1921 = vadd.f32 0.0, %v1920
        %v1922 = vpop.f32.mrb[0].mxu0
        %1923 = vmatprep.mubr.f32.mxu0 0.0
        %1924 = vmatmul.mubr.f32.gmra.mrb[0].mxu0 %v1750
        %v1925 = vpop.f32.mrb[0].mxu0
        %v1926 = vadd.f32 0.0, %v1925
        %v1927 = vpop.f32.mrb[0].mxu0
        %1928 = vmatprep.mubr.f32.mxu0 0.0
        %1929 = vmatmul.mubr.f32.gmra.mrb[0].mxu0 %v1753
        %v1930 = vpop.f32.mrb[0].mxu0
        %v1931 = vadd.f32 0.0, %v1930
        %v1932 = vpop.f32.mrb[0].mxu0
        %1933 = vmatprep.mubr.f32.mxu0 0.0
        %1934 = vmatmul.mubr.f32.gmra.mrb[0].mxu0 %v1756
        %v1935 = vpop.f32.mrb[0].mxu0
        %v1936 = vadd.f32 0.0, %v1935
        %v1937 = vpop.f32.mrb[0].mxu0
        %1938 = vmatprep.mubr.f32.mxu0 0.0
        %1939 = vmatmul.mubr.f32.gmra.mrb[0].mxu0 %v1759
        %v1940 = vpop.f32.mrb[0].mxu0
        %v1941 = vadd.f32 0.0, %v1940
        %v1942 = vpop.f32.mrb[0].mxu0
        %1943 = vmatprep.mubr.f32.mxu0 0.0
        %1944 = vmatmul.mubr.f32.gmra.mrb[0].mxu0 %v1762
        %v1945 = vpop.f32.mrb[0].mxu0
        %v1946 = vadd.f32 0.0, %v1945
        %v1947 = vpop.f32.mrb[0].mxu0
        %1948 = vmatprep.mubr.f32.mxu0 0.0
        %1949 = vmatmul.mubr.f32.gmra.mrb[0].mxu0 %v1765
        %v1950 = vpop.f32.mrb[0].mxu0
        %v1951 = vadd.f32 0.0, %v1950
        %v1952 = vpop.f32.mrb[0].mxu0
        %1953 = vmatprep.mubr.f32.mxu0 0.0
        %1954 = vmatmul.mubr.f32.gmra.mrb[0].mxu0 %v1768
        %v1955 = vpop.f32.mrb[0].mxu0
        %v1956 = vadd.f32 0.0, %v1955
        %v1957 = vpop.f32.mrb[0].mxu0
        %1958 = vmatprep.mubr.f32.mxu0 0.0
        %1959 = vmatmul.mubr.f32.gmra.mrb[0].mxu0 %v1771
        %v1960 = vpop.f32.mrb[0].mxu0
        %v1961 = vadd.f32 0.0, %v1960
        %v1962 = vpop.f32.mrb[0].mxu0
        %1963 = vmatprep.mubr.f32.mxu0 0.0
        %1964 = vmatmul.mubr.f32.gmra.mrb[0].mxu0 %v1774
        %v1965 = vpop.f32.mrb[0].mxu0
        %v1966 = vadd.f32 0.0, %v1965
        %v1967 = vpop.f32.mrb[0].mxu0
        %1968 = vmatprep.mubr.f32.mxu0 0.0
        %1969 = vmatmul.mubr.f32.gmra.mrb[0].mxu0 %v1777
        %v1970 = vpop.f32.mrb[0].mxu0
        %v1971 = vadd.f32 0.0, %v1970
        %v1972 = vpop.f32.mrb[0].mxu0
        %1973 = vmatprep.mubr.f32.mxu0 0.0
        %1974 = vmatmul.mubr.f32.gmra.mrb[0].mxu0 %v1780
        %v1975 = vpop.f32.mrb[0].mxu0
        %v1976 = vadd.f32 0.0, %v1975
        %v1977 = vpop.f32.mrb[0].mxu0
        %1978 = vmatprep.mubr.f32.mxu0 0.0
        %1979 = vmatmul.mubr.f32.gmra.mrb[0].mxu0 %v1783
        %v1980 = vpop.f32.mrb[0].mxu0
        %v1981 = vadd.f32 0.0, %v1980
        %v1982 = vpop.f32.mrb[0].mxu0
        %1983 = vmatprep.mubr.f32.mxu0 0.0
        %1984 = vmatmul.mubr.f32.gmra.mrb[0].mxu0 %v1786
        %v1985 = vpop.f32.mrb[0].mxu0
        %v1986 = vadd.f32 0.0, %v1985
        %v1987 = vpop.f32.mrb[0].mxu0
        %1988 = vmatprep.mubr.f32.mxu0 0.0
        %1989 = vmatmul.mubr.f32.gmra.mrb[0].mxu0 %v1789
        %v1990 = vpop.f32.mrb[0].mxu0
        %v1991 = vadd.f32 0.0, %v1990
        %v1992 = vpop.f32.mrb[0].mxu0
        %1993 = vmatprep.mubr.f32.mxu0 0.0
        %1994 = vmatmul.mubr.f32.gmra.mrb[0].mxu0 %v1792
        %v1995 = vpop.f32.mrb[0].mxu0
        %v1996 = vadd.f32 0.0, %v1995
        %v1997 = vpop.f32.mrb[0].mxu0
        %1998 = vmatprep.mubr.f32.mxu0 0.0
        %1999 = vmatmul.mubr.f32.gmra.mrb[0].mxu0 %v1795
        %v2000 = vpop.f32.mrb[0].mxu0
        %v2001 = vadd.f32 0.0, %v2000
        %v2002 = vpop.f32.mrb[0].mxu0
        %2003 = vmatprep.mubr.f32.mxu0 0.0
        %2004 = vmatmul.mubr.f32.gmra.mrb[0].mxu0 %v1798
        %v2005 = vpop.f32.mrb[0].mxu0
        %v2006 = vadd.f32 0.0, %v2005
        %v2007 = vpop.f32.mrb[0].mxu0
        %2008 = vmatprep.mubr.f32.mxu0 0.0
        %2009 = vmatmul.mubr.f32.gmra.mrb[0].mxu0 %v1801
        %v2010 = vpop.f32.mrb[0].mxu0
        %v2011 = vadd.f32 0.0, %v2010
        %v2012 = vpop.f32.mrb[0].mxu0
        %2013 = vmatprep.mubr.f32.mxu0 0.0
        %2014 = vmatmul.mubr.f32.gmra.mrb[0].mxu0 %v1804
        %v2015 = vpop.f32.mrb[0].mxu0
        %v2016 = vadd.f32 0.0, %v2015
        %v2017 = vpop.f32.mrb[0].mxu0
        %2018 = vmatprep.mubr.f32.mxu0 0.0
        %2019 = vmatmul.mubr.f32.gmra.mrb[0].mxu0 %v1807
        %v2020 = vpop.f32.mrb[0].mxu0
        %v2021 = vadd.f32 0.0, %v2020
        %v2022 = vpop.f32.mrb[0].mxu0
        %2023 = vmatprep.mubr.f32.mxu0 0.0
        %2024 = vmatmul.mubr.f32.gmra.mrb[0].mxu0 %v1810
        %v2025 = vpop.f32.mrb[0].mxu0
        %v2026 = vadd.f32 0.0, %v2025
        %v2027 = vpop.f32.mrb[0].mxu0
        %2028 = vmatprep.mubr.f32.mxu0 0.0
        %2029 = vmatmul.mubr.f32.gmra.mrb[0].mxu0 %v1813
        %v2030 = vpop.f32.mrb[0].mxu0
        %v2031 = vadd.f32 0.0, %v2030
        %v2032 = vpop.f32.mrb[0].mxu0
        %2033 = vmatprep.mubr.f32.mxu0 0.0
        %2034 = vmatmul.mubr.f32.gmra.mrb[0].mxu0 %v1816
        %v2035 = vpop.f32.mrb[0].mxu0
        %v2036 = vadd.f32 0.0, %v2035
        %v2037 = vpop.f32.mrb[0].mxu0
        %2038 = vmatprep.mubr.f32.mxu0 0.0
        %2039 = vmatmul.mubr.f32.gmra.mrb[0].mxu0 %v1819
        %v2040 = vpop.f32.mrb[0].mxu0
        %v2041 = vadd.f32 0.0, %v2040
        %v2042 = vpop.f32.mrb[0].mxu0
        %2043 = vmatprep.mubr.f32.mxu0 0.0
        %2044 = vmatmul.mubr.f32.gmra.mrb[0].mxu0 %v1822
        %v2045 = vpop.f32.mrb[0].mxu0
        %v2046 = vadd.f32 0.0, %v2045
        %v2047 = vpop.f32.mrb[0].mxu0
        %2048 = vdwg.mxu0
        %v2049 = vadd.f32 %v1524, %v1891
        %v2050 = vadd.f32 %v1529, %v1896
        %v2051 = vadd.f32 %v1534, %v1901
        %v2052 = vadd.f32 %v1539, %v1906
        %v2053 = vadd.f32 %v1544, %v1911
        %v2054 = vadd.f32 %v1549, %v1916
        %v2055 = vadd.f32 %v1554, %v1921
        %v2056 = vadd.f32 %v1559, %v1926
        %v2057 = vadd.f32 %v1564, %v1931
        %v2058 = vadd.f32 %v1569, %v1936
        %v2059 = vadd.f32 %v1574, %v1941
        %v2060 = vadd.f32 %v1579, %v1946
        %v2061 = vadd.f32 %v1584, %v1951
        %v2062 = vadd.f32 %v1589, %v1956
        %v2063 = vadd.f32 %v1594, %v1961
        %v2064 = vadd.f32 %v1599, %v1966
        %v2065 = vadd.f32 %v1604, %v1971
        %v2066 = vadd.f32 %v1609, %v1976
        %v2067 = vadd.f32 %v1614, %v1981
        %v2068 = vadd.f32 %v1619, %v1986
        %v2069 = vadd.f32 %v1624, %v1991
        %v2070 = vadd.f32 %v1629, %v1996
        %v2071 = vadd.f32 %v1634, %v2001
        %v2072 = vadd.f32 %v1639, %v2006
        %v2073 = vadd.f32 %v1644, %v2011
        %v2074 = vadd.f32 %v1649, %v2016
        %v2075 = vadd.f32 %v1654, %v2021
        %v2076 = vadd.f32 %v1659, %v2026
        %v2077 = vadd.f32 %v1664, %v2031
        %v2078 = vadd.f32 %v1669, %v2036
        %v2079 = vadd.f32 %v1674, %v2041
        %v2080 = vadd.f32 %v1679, %v2046
        %v2081 = vld [vmem:[%s2] sm:$0x1]
        %v2083 = vlaneseq
        %v2084 = vshrl.u32 %v2083, 7
        %v2085 = vsub.s32 0, %v2084
        %v2086 = vrot.slane %v2081, %v2085
        %v2088 = vadd.f32 %v2049, %v2086
        %v2089 = vadd.f32 %v2050, %v2086
        %v2090 = vadd.f32 %v2051, %v2086
        %v2091 = vadd.f32 %v2052, %v2086
        %v2092 = vadd.f32 %v2053, %v2086
        %v2093 = vadd.f32 %v2054, %v2086
        %v2094 = vadd.f32 %v2055, %v2086
        %v2095 = vadd.f32 %v2056, %v2086
        %v2096 = vadd.f32 %v2057, %v2086
        %v2097 = vadd.f32 %v2058, %v2086
        %v2098 = vadd.f32 %v2059, %v2086
        %v2099 = vadd.f32 %v2060, %v2086
        %v2100 = vadd.f32 %v2061, %v2086
        %v2101 = vadd.f32 %v2062, %v2086
        %v2102 = vadd.f32 %v2063, %v2086
        %v2103 = vadd.f32 %v2064, %v2086
        %v2104 = vadd.f32 %v2065, %v2086
        %v2105 = vadd.f32 %v2066, %v2086
        %v2106 = vadd.f32 %v2067, %v2086
        %v2107 = vadd.f32 %v2068, %v2086
        %v2108 = vadd.f32 %v2069, %v2086
        %v2109 = vadd.f32 %v2070, %v2086
        %v2110 = vadd.f32 %v2071, %v2086
        %v2111 = vadd.f32 %v2072, %v2086
        %v2112 = vadd.f32 %v2073, %v2086
        %v2113 = vadd.f32 %v2074, %v2086
        %v2114 = vadd.f32 %v2075, %v2086
        %v2115 = vadd.f32 %v2076, %v2086
        %v2116 = vadd.f32 %v2077, %v2086
        %v2117 = vadd.f32 %v2078, %v2086
        %v2118 = vadd.f32 %v2079, %v2086
        %v2119 = vadd.f32 %v2080, %v2086
        %v2120 = vmax.f32 %v2088, 0.0
        %v2121 = vmax.f32 %v2089, 0.0
        %v2122 = vmax.f32 %v2090, 0.0
        %v2123 = vmax.f32 %v2091, 0.0
        %v2124 = vmax.f32 %v2092, 0.0
        %v2125 = vmax.f32 %v2093, 0.0
        %v2126 = vmax.f32 %v2094, 0.0
        %v2127 = vmax.f32 %v2095, 0.0
        %v2128 = vmax.f32 %v2096, 0.0
        %v2129 = vmax.f32 %v2097, 0.0
        %v2130 = vmax.f32 %v2098, 0.0
        %v2131 = vmax.f32 %v2099, 0.0
        %v2132 = vmax.f32 %v2100, 0.0
        %v2133 = vmax.f32 %v2101, 0.0
        %v2134 = vmax.f32 %v2102, 0.0
        %v2135 = vmax.f32 %v2103, 0.0
        %v2136 = vmax.f32 %v2104, 0.0
        %v2137 = vmax.f32 %v2105, 0.0
        %v2138 = vmax.f32 %v2106, 0.0
        %v2139 = vmax.f32 %v2107, 0.0
        %v2140 = vmax.f32 %v2108, 0.0
        %v2141 = vmax.f32 %v2109, 0.0
        %v2142 = vmax.f32 %v2110, 0.0
        %v2143 = vmax.f32 %v2111, 0.0
        %v2144 = vmax.f32 %v2112, 0.0
        %v2145 = vmax.f32 %v2113, 0.0
        %v2146 = vmax.f32 %v2114, 0.0
        %v2147 = vmax.f32 %v2115, 0.0
        %v2148 = vmax.f32 %v2116, 0.0
        %v2149 = vmax.f32 %v2117, 0.0
        %v2150 = vmax.f32 %v2118, 0.0
        %v2151 = vmax.f32 %v2119, 0.0
        %2152 = vst.msk [vmem:[%s331 + $0x1] sm:$0xff] %vm332, %v2120
        %2153 = vst.msk [vmem:[%s331 + $0x9] sm:$0xff] %vm332, %v2121
        %2154 = vst.msk [vmem:[%s331 + $0x19] sm:$0xff] %vm332, %v2122
        %2155 = vst.msk [vmem:[%s331 + $0x21] sm:$0xff] %vm332, %v2123
        %2156 = vst.msk [vmem:[%s331 + $0x31] sm:$0xff] %vm332, %v2124
        %2157 = vst.msk [vmem:[%s331 + $0x39] sm:$0xff] %vm332, %v2125
        %2158 = vst.msk [vmem:[%s331 + $0x49] sm:$0xff] %vm332, %v2126
        %2159 = vst.msk [vmem:[%s331 + $0x51] sm:$0xff] %vm332, %v2127
        %2160 = vst.msk [vmem:[%s331 + $0x61] sm:$0xff] %vm332, %v2128
        %2161 = vst.msk [vmem:[%s331 + $0x69] sm:$0xff] %vm332, %v2129
        %2162 = vst.msk [vmem:[%s331 + $0x79] sm:$0xff] %vm332, %v2130
        %2163 = vst.msk [vmem:[%s331 + $0x81] sm:$0xff] %vm332, %v2131
        %2164 = vst.msk [vmem:[%s331 + $0x91] sm:$0xff] %vm332, %v2132
        %2165 = vst.msk [vmem:[%s331 + $0x99] sm:$0xff] %vm332, %v2133
        %2166 = vst.msk [vmem:[%s331 + $0xa9] sm:$0xff] %vm332, %v2134
        %2167 = vst.msk [vmem:[%s331 + $0xb1] sm:$0xff] %vm332, %v2135
        %2168 = vst.msk [vmem:[%s331 + $0xc1] sm:$0xff] %vm332, %v2136
        %2169 = vst.msk [vmem:[%s331 + $0xc9] sm:$0xff] %vm332, %v2137
        %2170 = vst.msk [vmem:[%s331 + $0xd9] sm:$0xff] %vm332, %v2138
        %2171 = vst.msk [vmem:[%s331 + $0xe1] sm:$0xff] %vm332, %v2139
        %2172 = vst.msk [vmem:[%s331 + $0xf1] sm:$0xff] %vm332, %v2140
        %2173 = vst.msk [vmem:[%s331 + $0xf9] sm:$0xff] %vm332, %v2141
        %2174 = vst.msk [vmem:[%s331 + $0x109] sm:$0xff] %vm332, %v2142
        %2175 = vst.msk [vmem:[%s331 + $0x111] sm:$0xff] %vm332, %v2143
        %2176 = vst.msk [vmem:[%s331 + $0x121] sm:$0xff] %vm332, %v2144
        %2177 = vst.msk [vmem:[%s331 + $0x129] sm:$0xff] %vm332, %v2145
        %2178 = vst.msk [vmem:[%s331 + $0x139] sm:$0xff] %vm332, %v2146
        %2179 = vst.msk [vmem:[%s331 + $0x141] sm:$0xff] %vm332, %v2147
        %2180 = vst.msk [vmem:[%s331 + $0x151] sm:$0xff] %vm332, %v2148
        %2181 = vst.msk [vmem:[%s331 + $0x159] sm:$0xff] %vm332, %v2149
        %2182 = vst.msk [vmem:[%s331 + $0x169] sm:$0xff] %vm332, %v2150
        %2183 = vst.msk [vmem:[%s331 + $0x171] sm:$0xff] %vm332, %v2151
        %2184 = vst.msk [vmem:[#allocation2 + $0x1] sm:$0xff] %vm332, %v2122
        %2185 = vst.msk [vmem:[#allocation2 + $0x9] sm:$0xff] %vm332, %v2123
        %2186 = vst.msk [vmem:[%s367 + $0x1] sm:$0xff] %vm332, %v2148
        %2187 = vst.msk [vmem:[%s367 + $0x9] sm:$0xff] %vm332, %v2149
        %v2188 = vld [vmem:[#allocation2 + $0x2] sm:$0x1]
        %v2189 = vld [vmem:[#allocation2 + $0x1a] sm:$0x1]
        %v2190 = vld [vmem:[#allocation2 + $0x32] sm:$0x1]
        %v2191 = vld [vmem:[#allocation2 + $0x4a] sm:$0x1]
        %v2192 = vld [vmem:[#allocation2 + $0x62] sm:$0x1]
        %v2193 = vld [vmem:[#allocation2 + $0x7a] sm:$0x1]
        %v2194 = vld [vmem:[#allocation2 + $0x92] sm:$0x1]
        %v2195 = vld [vmem:[#allocation2 + $0xaa] sm:$0x1]
        %v2196 = vld [vmem:[#allocation2 + $0xc2] sm:$0x1]
        %v2197 = vld [vmem:[#allocation2 + $0xda] sm:$0x1]
        %v2198 = vld [vmem:[#allocation2 + $0xf2] sm:$0x1]
        %v2199 = vld [vmem:[#allocation2 + $0x10a] sm:$0x1]
        %v2200 = vld [vmem:[#allocation2 + $0x122] sm:$0x1]
        %v2201 = vld [vmem:[#allocation2 + $0x13a] sm:$0x1]
        %v2202 = vld [vmem:[#allocation2 + $0x152] sm:$0x1]
        %v2203 = vld [vmem:[#allocation2 + $0x16a] sm:$0x1]
        %v2204 = vld [vmem:[#allocation2 + $0x182] sm:$0x1]
        %v2205 = vld [vmem:[#allocation2 + $0x19a] sm:$0x1]
        %2206 = vst.msk [vmem:[#allocation2] sm:$0x1] %vm388, %v2188
        %2207 = vst.msk [vmem:[#allocation2 + $0x18] sm:$0x1] %vm388, %v2189
        %2208 = vst.msk [vmem:[#allocation2 + $0x30] sm:$0x1] %vm388, %v2190
        %2209 = vst.msk [vmem:[#allocation2 + $0x48] sm:$0x1] %vm388, %v2191
        %2210 = vst.msk [vmem:[#allocation2 + $0x60] sm:$0x1] %vm388, %v2192
        %2211 = vst.msk [vmem:[#allocation2 + $0x78] sm:$0x1] %vm388, %v2193
        %2212 = vst.msk [vmem:[#allocation2 + $0x90] sm:$0x1] %vm388, %v2194
        %2213 = vst.msk [vmem:[#allocation2 + $0xa8] sm:$0x1] %vm388, %v2195
        %2214 = vst.msk [vmem:[#allocation2 + $0xc0] sm:$0x1] %vm388, %v2196
        %2215 = vst.msk [vmem:[#allocation2 + $0xd8] sm:$0x1] %vm388, %v2197
        %2216 = vst.msk [vmem:[#allocation2 + $0xf0] sm:$0x1] %vm388, %v2198
        %2217 = vst.msk [vmem:[#allocation2 + $0x108] sm:$0x1] %vm388, %v2199
        %2218 = vst.msk [vmem:[#allocation2 + $0x120] sm:$0x1] %vm388, %v2200
        %2219 = vst.msk [vmem:[#allocation2 + $0x138] sm:$0x1] %vm388, %v2201
        %2220 = vst.msk [vmem:[#allocation2 + $0x150] sm:$0x1] %vm388, %v2202
        %2221 = vst.msk [vmem:[#allocation2 + $0x168] sm:$0x1] %vm388, %v2203
        %2222 = vst.msk [vmem:[#allocation2 + $0x180] sm:$0x1] %vm388, %v2204
        %2223 = vst.msk [vmem:[#allocation2 + $0x198] sm:$0x1] %vm388, %v2205
        %v2224 = vld [vmem:[#allocation2 + $0xf] sm:$0x1]
        %v2225 = vld [vmem:[#allocation2 + $0x27] sm:$0x1]
        %v2226 = vld [vmem:[#allocation2 + $0x3f] sm:$0x1]
        %v2227 = vld [vmem:[#allocation2 + $0x57] sm:$0x1]
        %v2228 = vld [vmem:[#allocation2 + $0x6f] sm:$0x1]
        %v2229 = vld [vmem:[#allocation2 + $0x87] sm:$0x1]
        %v2230 = vld [vmem:[#allocation2 + $0x9f] sm:$0x1]
        %v2231 = vld [vmem:[#allocation2 + $0xb7] sm:$0x1]
        %v2232 = vld [vmem:[#allocation2 + $0xcf] sm:$0x1]
        %v2233 = vld [vmem:[#allocation2 + $0xe7] sm:$0x1]
        %v2234 = vld [vmem:[#allocation2 + $0xff] sm:$0x1]
        %v2235 = vld [vmem:[#allocation2 + $0x117] sm:$0x1]
        %v2236 = vld [vmem:[#allocation2 + $0x12f] sm:$0x1]
        %v2237 = vld [vmem:[#allocation2 + $0x147] sm:$0x1]
        %v2238 = vld [vmem:[#allocation2 + $0x15f] sm:$0x1]
        %v2239 = vld [vmem:[#allocation2 + $0x177] sm:$0x1]
        %v2240 = vld [vmem:[#allocation2 + $0x18f] sm:$0x1]
        %v2241 = vld [vmem:[#allocation2 + $0x1a7] sm:$0x1]
        %2242 = vst.msk [vmem:[#allocation2 + $0x11] sm:$0x1] %vm388, %v2224
        %2243 = vst.msk [vmem:[#allocation2 + $0x29] sm:$0x1] %vm388, %v2225
        %2244 = vst.msk [vmem:[#allocation2 + $0x41] sm:$0x1] %vm388, %v2226
        %2245 = vst.msk [vmem:[#allocation2 + $0x59] sm:$0x1] %vm388, %v2227
        %2246 = vst.msk [vmem:[#allocation2 + $0x71] sm:$0x1] %vm388, %v2228
        %2247 = vst.msk [vmem:[#allocation2 + $0x89] sm:$0x1] %vm388, %v2229
        %2248 = vst.msk [vmem:[#allocation2 + $0xa1] sm:$0x1] %vm388, %v2230
        %2249 = vst.msk [vmem:[#allocation2 + $0xb9] sm:$0x1] %vm388, %v2231
        %2250 = vst.msk [vmem:[#allocation2 + $0xd1] sm:$0x1] %vm388, %v2232
        %2251 = vst.msk [vmem:[#allocation2 + $0xe9] sm:$0x1] %vm388, %v2233
        %2252 = vst.msk [vmem:[#allocation2 + $0x101] sm:$0x1] %vm388, %v2234
        %2253 = vst.msk [vmem:[#allocation2 + $0x119] sm:$0x1] %vm388, %v2235
        %2254 = vst.msk [vmem:[#allocation2 + $0x131] sm:$0x1] %vm388, %v2236
        %2255 = vst.msk [vmem:[#allocation2 + $0x149] sm:$0x1] %vm388, %v2237
        %2256 = vst.msk [vmem:[#allocation2 + $0x161] sm:$0x1] %vm388, %v2238
        %2257 = vst.msk [vmem:[#allocation2 + $0x179] sm:$0x1] %vm388, %v2239
        %2258 = vst.msk [vmem:[#allocation2 + $0x191] sm:$0x1] %vm388, %v2240
        %2259 = vst.msk [vmem:[#allocation2 + $0x1a9] sm:$0x1] %vm388, %v2241
        %v2260 = vld [vmem:[#allocation2] sm:$0xff]
        %v2261 = vld [vmem:[#allocation2 + $0x8] sm:$0xff]
        %v2262 = vld [vmem:[#allocation2 + $0x18] sm:$0xff]
        %v2263 = vld [vmem:[#allocation2 + $0x20] sm:$0xff]
        %v2264 = vld [vmem:[#allocation2 + $0x30] sm:$0xff]
        %v2265 = vld [vmem:[#allocation2 + $0x38] sm:$0xff]
        %v2266 = vld [vmem:[#allocation2 + $0x48] sm:$0xff]
        %v2267 = vld [vmem:[#allocation2 + $0x50] sm:$0xff]
        %v2268 = vld [vmem:[#allocation2 + $0x60] sm:$0xff]
        %v2269 = vld [vmem:[#allocation2 + $0x68] sm:$0xff]
        %v2270 = vld [vmem:[#allocation2 + $0x78] sm:$0xff]
        %v2271 = vld [vmem:[#allocation2 + $0x80] sm:$0xff]
        %v2272 = vld [vmem:[#allocation2 + $0x90] sm:$0xff]
        %v2273 = vld [vmem:[#allocation2 + $0x98] sm:$0xff]
        %v2274 = vld [vmem:[#allocation2 + $0xa8] sm:$0xff]
        %v2275 = vld [vmem:[#allocation2 + $0xb0] sm:$0xff]
        %v2276 = vld [vmem:[#allocation2 + $0xc0] sm:$0xff]
        %v2277 = vld [vmem:[#allocation2 + $0xc8] sm:$0xff]
        %v2278 = vld [vmem:[#allocation2 + $0xd8] sm:$0xff]
        %v2279 = vld [vmem:[#allocation2 + $0xe0] sm:$0xff]
        %v2280 = vld [vmem:[#allocation2 + $0xf0] sm:$0xff]
        %v2281 = vld [vmem:[#allocation2 + $0xf8] sm:$0xff]
        %v2282 = vld [vmem:[#allocation2 + $0x108] sm:$0xff]
        %v2283 = vld [vmem:[#allocation2 + $0x110] sm:$0xff]
        %v2284 = vld [vmem:[#allocation2 + $0x120] sm:$0xff]
        %v2285 = vld [vmem:[#allocation2 + $0x128] sm:$0xff]
        %v2286 = vld [vmem:[#allocation2 + $0x138] sm:$0xff]
        %v2287 = vld [vmem:[#allocation2 + $0x140] sm:$0xff]
        %v2288 = vld [vmem:[#allocation2 + $0x150] sm:$0xff]
        %v2289 = vld [vmem:[#allocation2 + $0x158] sm:$0xff]
        %v2290 = vld [vmem:[#allocation2 + $0x168] sm:$0xff]
        %v2291 = vld [vmem:[#allocation2 + $0x170] sm:$0xff]
        %v2292 = vld [vmem:[#allocation2 + $0x180] sm:$0xff]
        %v2293 = vld [vmem:[#allocation2 + $0x188] sm:$0xff]
        %v2294 = vld [vmem:[#allocation2 + $0x198] sm:$0xff]
        %v2295 = vld [vmem:[#allocation2 + $0x1a0] sm:$0xff]
        %2296 = vst.msk [vmem:[#allocation3] sm:$0xff] %vm332, %v2260
        %2297 = vst.msk [vmem:[#allocation3 + $0x8] sm:$0xff] %vm332, %v2261
        %2298 = vst.msk [vmem:[#allocation3 + $0x10] sm:$0xff] %vm332, %v2262
        %2299 = vst.msk [vmem:[#allocation3 + $0x18] sm:$0xff] %vm332, %v2263
        %2300 = vst.msk [vmem:[#allocation3 + $0x20] sm:$0xff] %vm332, %v2264
        %2301 = vst.msk [vmem:[#allocation3 + $0x28] sm:$0xff] %vm332, %v2265
        %2302 = vst.msk [vmem:[#allocation3 + $0x30] sm:$0xff] %vm332, %v2266
        %2303 = vst.msk [vmem:[#allocation3 + $0x38] sm:$0xff] %vm332, %v2267
        %2304 = vst.msk [vmem:[#allocation3 + $0x40] sm:$0xff] %vm332, %v2268
        %2305 = vst.msk [vmem:[#allocation3 + $0x48] sm:$0xff] %vm332, %v2269
        %2306 = vst.msk [vmem:[#allocation3 + $0x50] sm:$0xff] %vm332, %v2270
        %2307 = vst.msk [vmem:[#allocation3 + $0x58] sm:$0xff] %vm332, %v2271
        %2308 = vst.msk [vmem:[#allocation3 + $0x60] sm:$0xff] %vm332, %v2272
        %2309 = vst.msk [vmem:[#allocation3 + $0x68] sm:$0xff] %vm332, %v2273
        %2310 = vst.msk [vmem:[#allocation3 + $0x70] sm:$0xff] %vm332, %v2274
        %2311 = vst.msk [vmem:[#allocation3 + $0x78] sm:$0xff] %vm332, %v2275
        %2312 = vst.msk [vmem:[#allocation3 + $0x80] sm:$0xff] %vm332, %v2276
        %2313 = vst.msk [vmem:[#allocation3 + $0x88] sm:$0xff] %vm332, %v2277
        %2314 = vst.msk [vmem:[#allocation3 + $0x90] sm:$0xff] %vm332, %v2278
        %2315 = vst.msk [vmem:[#allocation3 + $0x98] sm:$0xff] %vm332, %v2279
        %2316 = vst.msk [vmem:[#allocation3 + $0xa0] sm:$0xff] %vm332, %v2280
        %2317 = vst.msk [vmem:[#allocation3 + $0xa8] sm:$0xff] %vm332, %v2281
        %2318 = vst.msk [vmem:[#allocation3 + $0xb0] sm:$0xff] %vm332, %v2282
        %2319 = vst.msk [vmem:[#allocation3 + $0xb8] sm:$0xff] %vm332, %v2283
        %2320 = vst.msk [vmem:[#allocation3 + $0xc0] sm:$0xff] %vm332, %v2284
        %2321 = vst.msk [vmem:[#allocation3 + $0xc8] sm:$0xff] %vm332, %v2285
        %2322 = vst.msk [vmem:[#allocation3 + $0xd0] sm:$0xff] %vm332, %v2286
        %2323 = vst.msk [vmem:[#allocation3 + $0xd8] sm:$0xff] %vm332, %v2287
        %2324 = vst.msk [vmem:[#allocation3 + $0xe0] sm:$0xff] %vm332, %v2288
        %2325 = vst.msk [vmem:[#allocation3 + $0xe8] sm:$0xff] %vm332, %v2289
        %2326 = vst.msk [vmem:[#allocation3 + $0xf0] sm:$0xff] %vm332, %v2290
        %2327 = vst.msk [vmem:[#allocation3 + $0xf8] sm:$0xff] %vm332, %v2291
        %2328 = vst.msk [vmem:[#allocation3 + $0x100] sm:$0xff] %vm332, %v2292
        %2329 = vst.msk [vmem:[#allocation3 + $0x108] sm:$0xff] %vm332, %v2293
        %2330 = vst.msk [vmem:[#allocation3 + $0x110] sm:$0xff] %vm332, %v2294
        %2331 = vst.msk [vmem:[#allocation3 + $0x118] sm:$0xff] %vm332, %v2295
        %v2332 = vld [vmem:[#allocation2 + $0x1] sm:$0xff]
        %v2333 = vld [vmem:[#allocation2 + $0x9] sm:$0xff]
        %v2334 = vld [vmem:[#allocation2 + $0x19] sm:$0xff]
        %v2335 = vld [vmem:[#allocation2 + $0x21] sm:$0xff]
        %v2336 = vld [vmem:[#allocation2 + $0x31] sm:$0xff]
        %v2337 = vld [vmem:[#allocation2 + $0x39] sm:$0xff]
        %v2338 = vld [vmem:[#allocation2 + $0x49] sm:$0xff]
        %v2339 = vld [vmem:[#allocation2 + $0x51] sm:$0xff]
        %v2340 = vld [vmem:[#allocation2 + $0x61] sm:$0xff]
        %v2341 = vld [vmem:[#allocation2 + $0x69] sm:$0xff]
        %v2342 = vld [vmem:[#allocation2 + $0x79] sm:$0xff]
        %v2343 = vld [vmem:[#allocation2 + $0x81] sm:$0xff]
        %v2344 = vld [vmem:[#allocation2 + $0x91] sm:$0xff]
        %v2345 = vld [vmem:[#allocation2 + $0x99] sm:$0xff]
        %v2346 = vld [vmem:[#allocation2 + $0xa9] sm:$0xff]
        %v2347 = vld [vmem:[#allocation2 + $0xb1] sm:$0xff]
        %v2348 = vld [vmem:[#allocation2 + $0xc1] sm:$0xff]
        %v2349 = vld [vmem:[#allocation2 + $0xc9] sm:$0xff]
        %v2350 = vld [vmem:[#allocation2 + $0xd9] sm:$0xff]
        %v2351 = vld [vmem:[#allocation2 + $0xe1] sm:$0xff]
        %v2352 = vld [vmem:[#allocation2 + $0xf1] sm:$0xff]
        %v2353 = vld [vmem:[#allocation2 + $0xf9] sm:$0xff]
        %v2354 = vld [vmem:[#allocation2 + $0x109] sm:$0xff]
        %v2355 = vld [vmem:[#allocation2 + $0x111] sm:$0xff]
        %v2356 = vld [vmem:[#allocation2 + $0x121] sm:$0xff]
        %v2357 = vld [vmem:[#allocation2 + $0x129] sm:$0xff]
        %v2358 = vld [vmem:[#allocation2 + $0x139] sm:$0xff]
        %v2359 = vld [vmem:[#allocation2 + $0x141] sm:$0xff]
        %v2360 = vld [vmem:[#allocation2 + $0x151] sm:$0xff]
        %v2361 = vld [vmem:[#allocation2 + $0x159] sm:$0xff]
        %v2362 = vld [vmem:[#allocation2 + $0x169] sm:$0xff]
        %v2363 = vld [vmem:[#allocation2 + $0x171] sm:$0xff]
        %v2364 = vld [vmem:[#allocation2 + $0x181] sm:$0xff]
        %v2365 = vld [vmem:[#allocation2 + $0x189] sm:$0xff]
        %v2366 = vld [vmem:[#allocation2 + $0x199] sm:$0xff]
        %v2367 = vld [vmem:[#allocation2 + $0x1a1] sm:$0xff]
        %2404 = vrot.lane.b32.xlu0 %v2332, 32
        %v2405 = vpop.permute.xlu0 %2404
        %2406 = vrot.lane.b32.xlu0 %v2333, 32
        %v2407 = vpop.permute.xlu0 %2406
        %2408 = vrot.lane.b32.xlu0 %v2334, 32
        %v2409 = vpop.permute.xlu0 %2408
        %2410 = vrot.lane.b32.xlu0 %v2335, 32
        %v2411 = vpop.permute.xlu0 %2410
        %2412 = vrot.lane.b32.xlu0 %v2336, 32
        %v2413 = vpop.permute.xlu0 %2412
        %2414 = vrot.lane.b32.xlu0 %v2337, 32
        %v2415 = vpop.permute.xlu0 %2414
        %2416 = vrot.lane.b32.xlu0 %v2338, 32
        %v2417 = vpop.permute.xlu0 %2416
        %2418 = vrot.lane.b32.xlu0 %v2339, 32
        %v2419 = vpop.permute.xlu0 %2418
        %2420 = vrot.lane.b32.xlu0 %v2340, 32
        %v2421 = vpop.permute.xlu0 %2420
        %2422 = vrot.lane.b32.xlu0 %v2341, 32
        %v2423 = vpop.permute.xlu0 %2422
        %2424 = vrot.lane.b32.xlu0 %v2342, 32
        %v2425 = vpop.permute.xlu0 %2424
        %2426 = vrot.lane.b32.xlu0 %v2343, 32
        %v2427 = vpop.permute.xlu0 %2426
        %2428 = vrot.lane.b32.xlu0 %v2344, 32
        %v2429 = vpop.permute.xlu0 %2428
        %2430 = vrot.lane.b32.xlu0 %v2345, 32
        %v2431 = vpop.permute.xlu0 %2430
        %2432 = vrot.lane.b32.xlu0 %v2346, 32
        %v2433 = vpop.permute.xlu0 %2432
        %2434 = vrot.lane.b32.xlu0 %v2347, 32
        %v2435 = vpop.permute.xlu0 %2434
        %2436 = vrot.lane.b32.xlu0 %v2348, 32
        %v2437 = vpop.permute.xlu0 %2436
        %2438 = vrot.lane.b32.xlu0 %v2349, 32
        %v2439 = vpop.permute.xlu0 %2438
        %2440 = vrot.lane.b32.xlu0 %v2350, 32
        %v2441 = vpop.permute.xlu0 %2440
        %2442 = vrot.lane.b32.xlu0 %v2351, 32
        %v2443 = vpop.permute.xlu0 %2442
        %2444 = vrot.lane.b32.xlu0 %v2352, 32
        %v2445 = vpop.permute.xlu0 %2444
        %2446 = vrot.lane.b32.xlu0 %v2353, 32
        %v2447 = vpop.permute.xlu0 %2446
        %2448 = vrot.lane.b32.xlu0 %v2354, 32
        %v2449 = vpop.permute.xlu0 %2448
        %2450 = vrot.lane.b32.xlu0 %v2355, 32
        %v2451 = vpop.permute.xlu0 %2450
        %2452 = vrot.lane.b32.xlu0 %v2356, 32
        %v2453 = vpop.permute.xlu0 %2452
        %2454 = vrot.lane.b32.xlu0 %v2357, 32
        %v2455 = vpop.permute.xlu0 %2454
        %2456 = vrot.lane.b32.xlu0 %v2358, 32
        %v2457 = vpop.permute.xlu0 %2456
        %2458 = vrot.lane.b32.xlu0 %v2359, 32
        %v2459 = vpop.permute.xlu0 %2458
        %2460 = vrot.lane.b32.xlu0 %v2360, 32
        %v2461 = vpop.permute.xlu0 %2460
        %2462 = vrot.lane.b32.xlu0 %v2361, 32
        %v2463 = vpop.permute.xlu0 %2462
        %2464 = vrot.lane.b32.xlu0 %v2362, 32
        %v2465 = vpop.permute.xlu0 %2464
        %2466 = vrot.lane.b32.xlu0 %v2363, 32
        %v2467 = vpop.permute.xlu0 %2466
        %2468 = vrot.lane.b32.xlu0 %v2364, 32
        %v2469 = vpop.permute.xlu0 %2468
        %2470 = vrot.lane.b32.xlu0 %v2365, 32
        %v2471 = vpop.permute.xlu0 %2470
        %2472 = vrot.lane.b32.xlu0 %v2366, 32
        %v2473 = vpop.permute.xlu0 %2472
        %2474 = vrot.lane.b32.xlu0 %v2367, 32
        %v2475 = vpop.permute.xlu0 %2474
        %2512 = vst.msk [vmem:[#allocation3] sm:$0xff] %vm695, %v2405
        %2513 = vst.msk [vmem:[#allocation3 + $0x8] sm:$0xff] %vm695, %v2407
        %2514 = vst.msk [vmem:[#allocation3 + $0x10] sm:$0xff] %vm695, %v2409
        %2515 = vst.msk [vmem:[#allocation3 + $0x18] sm:$0xff] %vm695, %v2411
        %2516 = vst.msk [vmem:[#allocation3 + $0x20] sm:$0xff] %vm695, %v2413
        %2517 = vst.msk [vmem:[#allocation3 + $0x28] sm:$0xff] %vm695, %v2415
        %2518 = vst.msk [vmem:[#allocation3 + $0x30] sm:$0xff] %vm695, %v2417
        %2519 = vst.msk [vmem:[#allocation3 + $0x38] sm:$0xff] %vm695, %v2419
        %2520 = vst.msk [vmem:[#allocation3 + $0x40] sm:$0xff] %vm695, %v2421
        %2521 = vst.msk [vmem:[#allocation3 + $0x48] sm:$0xff] %vm695, %v2423
        %2522 = vst.msk [vmem:[#allocation3 + $0x50] sm:$0xff] %vm695, %v2425
        %2523 = vst.msk [vmem:[#allocation3 + $0x58] sm:$0xff] %vm695, %v2427
        %2524 = vst.msk [vmem:[#allocation3 + $0x60] sm:$0xff] %vm695, %v2429
        %2525 = vst.msk [vmem:[#allocation3 + $0x68] sm:$0xff] %vm695, %v2431
        %2526 = vst.msk [vmem:[#allocation3 + $0x70] sm:$0xff] %vm695, %v2433
        %2527 = vst.msk [vmem:[#allocation3 + $0x78] sm:$0xff] %vm695, %v2435
        %2528 = vst.msk [vmem:[#allocation3 + $0x80] sm:$0xff] %vm695, %v2437
        %2529 = vst.msk [vmem:[#allocation3 + $0x88] sm:$0xff] %vm695, %v2439
        %2530 = vst.msk [vmem:[#allocation3 + $0x90] sm:$0xff] %vm695, %v2441
        %2531 = vst.msk [vmem:[#allocation3 + $0x98] sm:$0xff] %vm695, %v2443
        %2532 = vst.msk [vmem:[#allocation3 + $0xa0] sm:$0xff] %vm695, %v2445
        %2533 = vst.msk [vmem:[#allocation3 + $0xa8] sm:$0xff] %vm695, %v2447
        %2534 = vst.msk [vmem:[#allocation3 + $0xb0] sm:$0xff] %vm695, %v2449
        %2535 = vst.msk [vmem:[#allocation3 + $0xb8] sm:$0xff] %vm695, %v2451
        %2536 = vst.msk [vmem:[#allocation3 + $0xc0] sm:$0xff] %vm695, %v2453
        %2537 = vst.msk [vmem:[#allocation3 + $0xc8] sm:$0xff] %vm695, %v2455
        %2538 = vst.msk [vmem:[#allocation3 + $0xd0] sm:$0xff] %vm695, %v2457
        %2539 = vst.msk [vmem:[#allocation3 + $0xd8] sm:$0xff] %vm695, %v2459
        %2540 = vst.msk [vmem:[#allocation3 + $0xe0] sm:$0xff] %vm695, %v2461
        %2541 = vst.msk [vmem:[#allocation3 + $0xe8] sm:$0xff] %vm695, %v2463
        %2542 = vst.msk [vmem:[#allocation3 + $0xf0] sm:$0xff] %vm695, %v2465
        %2543 = vst.msk [vmem:[#allocation3 + $0xf8] sm:$0xff] %vm695, %v2467
        %2544 = vst.msk [vmem:[#allocation3 + $0x100] sm:$0xff] %vm695, %v2469
        %2545 = vst.msk [vmem:[#allocation3 + $0x108] sm:$0xff] %vm695, %v2471
        %2546 = vst.msk [vmem:[#allocation3 + $0x110] sm:$0xff] %vm695, %v2473
        %2547 = vst.msk [vmem:[#allocation3 + $0x118] sm:$0xff] %vm695, %v2475
        %v2548 = vld [vmem:[#allocation2 + $0x2] sm:$0xff]
        %v2549 = vld [vmem:[#allocation2 + $0xa] sm:$0xff]
        %v2550 = vld [vmem:[#allocation2 + $0x1a] sm:$0xff]
        %v2551 = vld [vmem:[#allocation2 + $0x22] sm:$0xff]
        %v2552 = vld [vmem:[#allocation2 + $0x32] sm:$0xff]
        %v2553 = vld [vmem:[#allocation2 + $0x3a] sm:$0xff]
        %v2554 = vld [vmem:[#allocation2 + $0x4a] sm:$0xff]
        %v2555 = vld [vmem:[#allocation2 + $0x52] sm:$0xff]
        %v2556 = vld [vmem:[#allocation2 + $0x62] sm:$0xff]
        %v2557 = vld [vmem:[#allocation2 + $0x6a] sm:$0xff]
        %v2558 = vld [vmem:[#allocation2 + $0x7a] sm:$0xff]
        %v2559 = vld [vmem:[#allocation2 + $0x82] sm:$0xff]
        %v2560 = vld [vmem:[#allocation2 + $0x92] sm:$0xff]
        %v2561 = vld [vmem:[#allocation2 + $0x9a] sm:$0xff]
        %v2562 = vld [vmem:[#allocation2 + $0xaa] sm:$0xff]
        %v2563 = vld [vmem:[#allocation2 + $0xb2] sm:$0xff]
        %v2564 = vld [vmem:[#allocation2 + $0xc2] sm:$0xff]
        %v2565 = vld [vmem:[#allocation2 + $0xca] sm:$0xff]
        %v2566 = vld [vmem:[#allocation2 + $0xda] sm:$0xff]
        %v2567 = vld [vmem:[#allocation2 + $0xe2] sm:$0xff]
        %v2568 = vld [vmem:[#allocation2 + $0xf2] sm:$0xff]
        %v2569 = vld [vmem:[#allocation2 + $0xfa] sm:$0xff]
        %v2570 = vld [vmem:[#allocation2 + $0x10a] sm:$0xff]
        %v2571 = vld [vmem:[#allocation2 + $0x112] sm:$0xff]
        %v2572 = vld [vmem:[#allocation2 + $0x122] sm:$0xff]
        %v2573 = vld [vmem:[#allocation2 + $0x12a] sm:$0xff]
        %v2574 = vld [vmem:[#allocation2 + $0x13a] sm:$0xff]
        %v2575 = vld [vmem:[#allocation2 + $0x142] sm:$0xff]
        %v2576 = vld [vmem:[#allocation2 + $0x152] sm:$0xff]
        %v2577 = vld [vmem:[#allocation2 + $0x15a] sm:$0xff]
        %v2578 = vld [vmem:[#allocation2 + $0x16a] sm:$0xff]
        %v2579 = vld [vmem:[#allocation2 + $0x172] sm:$0xff]
        %v2580 = vld [vmem:[#allocation2 + $0x182] sm:$0xff]
        %v2581 = vld [vmem:[#allocation2 + $0x18a] sm:$0xff]
        %v2582 = vld [vmem:[#allocation2 + $0x19a] sm:$0xff]
        %v2583 = vld [vmem:[#allocation2 + $0x1a2] sm:$0xff]
        %2620 = vrot.lane.b32.xlu0 %v2548, 64
        %v2621 = vpop.permute.xlu0 %2620
        %2622 = vrot.lane.b32.xlu0 %v2549, 64
        %v2623 = vpop.permute.xlu0 %2622
        %2624 = vrot.lane.b32.xlu0 %v2550, 64
        %v2625 = vpop.permute.xlu0 %2624
        %2626 = vrot.lane.b32.xlu0 %v2551, 64
        %v2627 = vpop.permute.xlu0 %2626
        %2628 = vrot.lane.b32.xlu0 %v2552, 64
        %v2629 = vpop.permute.xlu0 %2628
        %2630 = vrot.lane.b32.xlu0 %v2553, 64
        %v2631 = vpop.permute.xlu0 %2630
        %2632 = vrot.lane.b32.xlu0 %v2554, 64
        %v2633 = vpop.permute.xlu0 %2632
        %2634 = vrot.lane.b32.xlu0 %v2555, 64
        %v2635 = vpop.permute.xlu0 %2634
        %2636 = vrot.lane.b32.xlu0 %v2556, 64
        %v2637 = vpop.permute.xlu0 %2636
        %2638 = vrot.lane.b32.xlu0 %v2557, 64
        %v2639 = vpop.permute.xlu0 %2638
        %2640 = vrot.lane.b32.xlu0 %v2558, 64
        %v2641 = vpop.permute.xlu0 %2640
        %2642 = vrot.lane.b32.xlu0 %v2559, 64
        %v2643 = vpop.permute.xlu0 %2642
        %2644 = vrot.lane.b32.xlu0 %v2560, 64
        %v2645 = vpop.permute.xlu0 %2644
        %2646 = vrot.lane.b32.xlu0 %v2561, 64
        %v2647 = vpop.permute.xlu0 %2646
        %2648 = vrot.lane.b32.xlu0 %v2562, 64
        %v2649 = vpop.permute.xlu0 %2648
        %2650 = vrot.lane.b32.xlu0 %v2563, 64
        %v2651 = vpop.permute.xlu0 %2650
        %2652 = vrot.lane.b32.xlu0 %v2564, 64
        %v2653 = vpop.permute.xlu0 %2652
        %2654 = vrot.lane.b32.xlu0 %v2565, 64
        %v2655 = vpop.permute.xlu0 %2654
        %2656 = vrot.lane.b32.xlu0 %v2566, 64
        %v2657 = vpop.permute.xlu0 %2656
        %2658 = vrot.lane.b32.xlu0 %v2567, 64
        %v2659 = vpop.permute.xlu0 %2658
        %2660 = vrot.lane.b32.xlu0 %v2568, 64
        %v2661 = vpop.permute.xlu0 %2660
        %2662 = vrot.lane.b32.xlu0 %v2569, 64
        %v2663 = vpop.permute.xlu0 %2662
        %2664 = vrot.lane.b32.xlu0 %v2570, 64
        %v2665 = vpop.permute.xlu0 %2664
        %2666 = vrot.lane.b32.xlu0 %v2571, 64
        %v2667 = vpop.permute.xlu0 %2666
        %2668 = vrot.lane.b32.xlu0 %v2572, 64
        %v2669 = vpop.permute.xlu0 %2668
        %2670 = vrot.lane.b32.xlu0 %v2573, 64
        %v2671 = vpop.permute.xlu0 %2670
        %2672 = vrot.lane.b32.xlu0 %v2574, 64
        %v2673 = vpop.permute.xlu0 %2672
        %2674 = vrot.lane.b32.xlu0 %v2575, 64
        %v2675 = vpop.permute.xlu0 %2674
        %2676 = vrot.lane.b32.xlu0 %v2576, 64
        %v2677 = vpop.permute.xlu0 %2676
        %2678 = vrot.lane.b32.xlu0 %v2577, 64
        %v2679 = vpop.permute.xlu0 %2678
        %2680 = vrot.lane.b32.xlu0 %v2578, 64
        %v2681 = vpop.permute.xlu0 %2680
        %2682 = vrot.lane.b32.xlu0 %v2579, 64
        %v2683 = vpop.permute.xlu0 %2682
        %2684 = vrot.lane.b32.xlu0 %v2580, 64
        %v2685 = vpop.permute.xlu0 %2684
        %2686 = vrot.lane.b32.xlu0 %v2581, 64
        %v2687 = vpop.permute.xlu0 %2686
        %2688 = vrot.lane.b32.xlu0 %v2582, 64
        %v2689 = vpop.permute.xlu0 %2688
        %2690 = vrot.lane.b32.xlu0 %v2583, 64
        %v2691 = vpop.permute.xlu0 %2690
        %2728 = vst.msk [vmem:[#allocation3] sm:$0xff] %vm912, %v2621
        %2729 = vst.msk [vmem:[#allocation3 + $0x8] sm:$0xff] %vm912, %v2623
        %2730 = vst.msk [vmem:[#allocation3 + $0x10] sm:$0xff] %vm912, %v2625
        %2731 = vst.msk [vmem:[#allocation3 + $0x18] sm:$0xff] %vm912, %v2627
        %2732 = vst.msk [vmem:[#allocation3 + $0x20] sm:$0xff] %vm912, %v2629
        %2733 = vst.msk [vmem:[#allocation3 + $0x28] sm:$0xff] %vm912, %v2631
        %2734 = vst.msk [vmem:[#allocation3 + $0x30] sm:$0xff] %vm912, %v2633
        %2735 = vst.msk [vmem:[#allocation3 + $0x38] sm:$0xff] %vm912, %v2635
        %2736 = vst.msk [vmem:[#allocation3 + $0x40] sm:$0xff] %vm912, %v2637
        %2737 = vst.msk [vmem:[#allocation3 + $0x48] sm:$0xff] %vm912, %v2639
        %2738 = vst.msk [vmem:[#allocation3 + $0x50] sm:$0xff] %vm912, %v2641
        %2739 = vst.msk [vmem:[#allocation3 + $0x58] sm:$0xff] %vm912, %v2643
        %2740 = vst.msk [vmem:[#allocation3 + $0x60] sm:$0xff] %vm912, %v2645
        %2741 = vst.msk [vmem:[#allocation3 + $0x68] sm:$0xff] %vm912, %v2647
        %2742 = vst.msk [vmem:[#allocation3 + $0x70] sm:$0xff] %vm912, %v2649
        %2743 = vst.msk [vmem:[#allocation3 + $0x78] sm:$0xff] %vm912, %v2651
        %2744 = vst.msk [vmem:[#allocation3 + $0x80] sm:$0xff] %vm912, %v2653
        %2745 = vst.msk [vmem:[#allocation3 + $0x88] sm:$0xff] %vm912, %v2655
        %2746 = vst.msk [vmem:[#allocation3 + $0x90] sm:$0xff] %vm912, %v2657
        %2747 = vst.msk [vmem:[#allocation3 + $0x98] sm:$0xff] %vm912, %v2659
        %2748 = vst.msk [vmem:[#allocation3 + $0xa0] sm:$0xff] %vm912, %v2661
        %2749 = vst.msk [vmem:[#allocation3 + $0xa8] sm:$0xff] %vm912, %v2663
        %2750 = vst.msk [vmem:[#allocation3 + $0xb0] sm:$0xff] %vm912, %v2665
        %2751 = vst.msk [vmem:[#allocation3 + $0xb8] sm:$0xff] %vm912, %v2667
        %2752 = vst.msk [vmem:[#allocation3 + $0xc0] sm:$0xff] %vm912, %v2669
        %2753 = vst.msk [vmem:[#allocation3 + $0xc8] sm:$0xff] %vm912, %v2671
        %2754 = vst.msk [vmem:[#allocation3 + $0xd0] sm:$0xff] %vm912, %v2673
        %2755 = vst.msk [vmem:[#allocation3 + $0xd8] sm:$0xff] %vm912, %v2675
        %2756 = vst.msk [vmem:[#allocation3 + $0xe0] sm:$0xff] %vm912, %v2677
        %2757 = vst.msk [vmem:[#allocation3 + $0xe8] sm:$0xff] %vm912, %v2679
        %2758 = vst.msk [vmem:[#allocation3 + $0xf0] sm:$0xff] %vm912, %v2681
        %2759 = vst.msk [vmem:[#allocation3 + $0xf8] sm:$0xff] %vm912, %v2683
        %2760 = vst.msk [vmem:[#allocation3 + $0x100] sm:$0xff] %vm912, %v2685
        %2761 = vst.msk [vmem:[#allocation3 + $0x108] sm:$0xff] %vm912, %v2687
        %2762 = vst.msk [vmem:[#allocation3 + $0x110] sm:$0xff] %vm912, %v2689
        %2763 = vst.msk [vmem:[#allocation3 + $0x118] sm:$0xff] %vm912, %v2691
        %v2764 = vld [vmem:[#allocation3] sm:$0xff]
        %v2765 = vld [vmem:[#allocation3 + $0x8] sm:$0xff]
        %v2766 = vld [vmem:[#allocation3 + $0x10] sm:$0xff]
        %v2767 = vld [vmem:[#allocation3 + $0x18] sm:$0xff]
        %v2768 = vld [vmem:[#allocation3 + $0x20] sm:$0xff]
        %v2769 = vld [vmem:[#allocation3 + $0x28] sm:$0xff]
        %v2770 = vld [vmem:[#allocation3 + $0x30] sm:$0xff]
        %v2771 = vld [vmem:[#allocation3 + $0x38] sm:$0xff]
        %v2772 = vld [vmem:[#allocation3 + $0x40] sm:$0xff]
        %v2773 = vld [vmem:[#allocation3 + $0x48] sm:$0xff]
        %v2774 = vld [vmem:[#allocation3 + $0x50] sm:$0xff]
        %v2775 = vld [vmem:[#allocation3 + $0x58] sm:$0xff]
        %v2776 = vld [vmem:[#allocation3 + $0x60] sm:$0xff]
        %v2777 = vld [vmem:[#allocation3 + $0x68] sm:$0xff]
        %v2778 = vld [vmem:[#allocation3 + $0x70] sm:$0xff]
        %v2779 = vld [vmem:[#allocation3 + $0x78] sm:$0xff]
        %v2780 = vld [vmem:[#allocation3 + $0x80] sm:$0xff]
        %v2781 = vld [vmem:[#allocation3 + $0x88] sm:$0xff]
        %v2782 = vld [vmem:[#allocation3 + $0x90] sm:$0xff]
        %v2783 = vld [vmem:[#allocation3 + $0x98] sm:$0xff]
        %v2784 = vld [vmem:[#allocation3 + $0xa0] sm:$0xff]
        %v2785 = vld [vmem:[#allocation3 + $0xa8] sm:$0xff]
        %v2786 = vld [vmem:[#allocation3 + $0xb0] sm:$0xff]
        %v2787 = vld [vmem:[#allocation3 + $0xb8] sm:$0xff]
        %v2788 = vld [vmem:[#allocation3 + $0xc0] sm:$0xff]
        %v2789 = vld [vmem:[#allocation3 + $0xc8] sm:$0xff]
        %v2790 = vld [vmem:[#allocation3 + $0xd0] sm:$0xff]
        %v2791 = vld [vmem:[#allocation3 + $0xd8] sm:$0xff]
        %v2792 = vld [vmem:[#allocation3 + $0xe0] sm:$0xff]
        %v2793 = vld [vmem:[#allocation3 + $0xe8] sm:$0xff]
        %v2794 = vld [vmem:[#allocation3 + $0xf0] sm:$0xff]
        %v2795 = vld [vmem:[#allocation3 + $0xf8] sm:$0xff]
        %v2796 = vld [vmem:[%s3] sm:$0xff]
        %v2797 = vld [vmem:[%s3 + $0x8] sm:$0xff]
        %v2798 = vld [vmem:[%s3 + $0x10] sm:$0xff]
        %v2799 = vld [vmem:[%s3 + $0x18] sm:$0xff]
        %v2800 = vld [vmem:[%s3 + $0x20] sm:$0xff]
        %v2801 = vld [vmem:[%s3 + $0x28] sm:$0xff]
        %v2802 = vld [vmem:[%s3 + $0x30] sm:$0xff]
        %v2803 = vld [vmem:[%s3 + $0x38] sm:$0xff]
        %v2804 = vld [vmem:[%s3 + $0x40] sm:$0xff]
        %v2805 = vld [vmem:[%s3 + $0x48] sm:$0xff]
        %v2806 = vld [vmem:[%s3 + $0x50] sm:$0xff]
        %v2807 = vld [vmem:[%s3 + $0x58] sm:$0xff]
        %v2808 = vld [vmem:[%s993] sm:$0xff]
        %v2809 = vld [vmem:[%s993 + $0x8] sm:$0xff]
        %v2810 = vld [vmem:[%s993 + $0x10] sm:$0xff]
        %v2811 = vld [vmem:[%s993 + $0x18] sm:$0xff]
        %v2812 = vld [vmem:[%s993 + $0x20] sm:$0xff]
        %v2813 = vld [vmem:[%s993 + $0x28] sm:$0xff]
        %v2814 = vld [vmem:[%s993 + $0x30] sm:$0xff]
        %v2815 = vld [vmem:[%s993 + $0x38] sm:$0xff]
        %v2816 = vld [vmem:[%s993 + $0x40] sm:$0xff]
        %v2817 = vld [vmem:[%s993 + $0x48] sm:$0xff]
        %v2818 = vld [vmem:[%s993 + $0x50] sm:$0xff]
        %v2819 = vld [vmem:[%s993 + $0x58] sm:$0xff]
        %v2820 = vld [vmem:[%s993 + $0x60] sm:$0xff]
        %v2821 = vld [vmem:[%s993 + $0x68] sm:$0xff]
        %v2822 = vld [vmem:[%s993 + $0x70] sm:$0xff]
        %v2823 = vld [vmem:[%s993 + $0x78] sm:$0xff]
        %v2824 = vld [vmem:[%s993 + $0x80] sm:$0xff]
        %v2825 = vld [vmem:[%s993 + $0x88] sm:$0xff]
        %v2826 = vld [vmem:[%s993 + $0x90] sm:$0xff]
        %v2827 = vld [vmem:[%s993 + $0x98] sm:$0xff]
        %v2828 = vld [vmem:[%s993 + $0xa0] sm:$0xff]
        %v2829 = vld [vmem:[%s993 + $0xa8] sm:$0xff]
        %v2830 = vld [vmem:[%s993 + $0xb0] sm:$0xff]
        %v2831 = vld [vmem:[%s993 + $0xb8] sm:$0xff]
        %v2832 = vld [vmem:[%s993 + $0xc0] sm:$0xff]
        %v2833 = vld [vmem:[%s993 + $0xc8] sm:$0xff]
        %v2834 = vld [vmem:[%s993 + $0xd0] sm:$0xff]
        %v2835 = vld [vmem:[%s993 + $0xd8] sm:$0xff]
        %v2836 = vld [vmem:[%s993 + $0xe0] sm:$0xff]
        %v2837 = vld [vmem:[%s993 + $0xe8] sm:$0xff]
        %v2838 = vld [vmem:[%s993 + $0xf0] sm:$0xff]
        %v2839 = vld [vmem:[%s993 + $0xf8] sm:$0xff]
        %s2840 = scalar_lea.vmem %s3, 96
        %v2841 = vld [vmem:[%s2840] sm:$0xff]
        %v2842 = vld [vmem:[%s2840 + $0x8] sm:$0xff]
        %v2843 = vld [vmem:[%s2840 + $0x10] sm:$0xff]
        %v2844 = vld [vmem:[%s2840 + $0x18] sm:$0xff]
        %v2845 = vld [vmem:[%s2840 + $0x20] sm:$0xff]
        %v2846 = vld [vmem:[%s2840 + $0x28] sm:$0xff]
        %v2847 = vld [vmem:[%s2840 + $0x30] sm:$0xff]
        %v2848 = vld [vmem:[%s2840 + $0x38] sm:$0xff]
        %v2849 = vld [vmem:[%s2840 + $0x40] sm:$0xff]
        %v2850 = vld [vmem:[%s2840 + $0x48] sm:$0xff]
        %v2851 = vld [vmem:[%s2840 + $0x50] sm:$0xff]
        %v2852 = vld [vmem:[%s2840 + $0x58] sm:$0xff]
        %v2854 = vsel %vm1039, %v2808, 0
        %v2857 = vsel %vm1039, %v2809, 0
        %v2860 = vsel %vm1039, %v2810, 0
        %v2863 = vsel %vm1039, %v2811, 0
        %v2866 = vsel %vm1039, %v2812, 0
        %v2869 = vsel %vm1039, %v2813, 0
        %v2872 = vsel %vm1039, %v2814, 0
        %v2875 = vsel %vm1039, %v2815, 0
        %v2878 = vsel %vm1039, %v2816, 0
        %v2881 = vsel %vm1039, %v2817, 0
        %v2884 = vsel %vm1039, %v2818, 0
        %v2887 = vsel %vm1039, %v2819, 0
        %v2890 = vsel %vm1039, %v2820, 0
        %v2893 = vsel %vm1039, %v2821, 0
        %v2896 = vsel %vm1039, %v2822, 0
        %v2899 = vsel %vm1039, %v2823, 0
        %v2902 = vsel %vm1039, %v2824, 0
        %v2905 = vsel %vm1039, %v2825, 0
        %v2908 = vsel %vm1039, %v2826, 0
        %v2911 = vsel %vm1039, %v2827, 0
        %v2914 = vsel %vm1039, %v2828, 0
        %v2917 = vsel %vm1039, %v2829, 0
        %v2920 = vsel %vm1039, %v2830, 0
        %v2923 = vsel %vm1039, %v2831, 0
        %v2926 = vsel %vm1039, %v2832, 0
        %v2929 = vsel %vm1039, %v2833, 0
        %v2932 = vsel %vm1039, %v2834, 0
        %v2935 = vsel %vm1039, %v2835, 0
        %v2938 = vsel %vm1039, %v2836, 0
        %v2941 = vsel %vm1039, %v2837, 0
        %v2944 = vsel %vm1039, %v2838, 0
        %v2947 = vsel %vm1039, %v2839, 0
        %2949 = vmatprep.subr.mxu0 0.0
        %2950 = vmatpush1.msra.mxu0 %v2841
        %2951 = vmatprep.subr.mxu0 0.0
        %2952 = vmatpush1.msra.mxu0 %v2842
        %2953 = vmatprep.subr.mxu0 0.0
        %2954 = vmatpush1.msra.mxu0 %v2843
        %2955 = vmatprep.subr.mxu0 0.0
        %2956 = vmatpush1.msra.mxu0 %v2844
        %2957 = vmatprep.subr.mxu0 0.0
        %2958 = vmatpush1.msra.mxu0 %v2845
        %2959 = vmatprep.subr.mxu0 0.0
        %2960 = vmatpush1.msra.mxu0 %v2846
        %2961 = vmatprep.subr.mxu0 0.0
        %2962 = vmatpush1.msra.mxu0 %v2847
        %2963 = vmatprep.subr.mxu0 0.0
        %2964 = vmatpush1.msra.mxu0 %v2848
        %2965 = vmatprep.subr.mxu0 0.0
        %2966 = vmatpush1.msra.mxu0 %v2849
        %2967 = vmatprep.subr.mxu0 0.0
        %2968 = vmatpush1.msra.mxu0 %v2850
        %2969 = vmatprep.subr.mxu0 0.0
        %2970 = vmatpush1.msra.mxu0 %v2851
        %2971 = vmatprep.subr.mxu0 0.0
        %2972 = vmatpush1.msra.mxu0 %v2852
        %2973 = vmatprep.subr.mxu0 0.0
        %2974 = vmatpush1.msra.mxu0 0.0
        %2975 = vmatprep.subr.mxu0 0.0
        %2976 = vmatpush1.msra.mxu0 0.0
        %2977 = vmatprep.subr.mxu0 0.0
        %2978 = vmatpush1.msra.mxu0 0.0
        %2979 = vmatprep.subr.mxu0 0.0
        %2980 = vmatpush1.msra.mxu0 0.0
        %2981 = vmatprep.subr.mxu0 0.0
        %2982 = vmatpush1.msra.mxu0 0.0
        %2983 = vmatprep.subr.mxu0 0.0
        %2984 = vmatpush1.msra.mxu0 0.0
        %2985 = vmatprep.subr.mxu0 0.0
        %2986 = vmatpush1.msra.mxu0 0.0
        %2987 = vmatprep.subr.mxu0 0.0
        %2988 = vmatpush1.msra.mxu0 0.0
        %2989 = vmatprep.subr.mxu0 0.0
        %2990 = vmatpush1.msra.mxu0 0.0
        %2991 = vmatprep.subr.mxu0 0.0
        %2992 = vmatpush1.msra.mxu0 0.0
        %2993 = vmatprep.subr.mxu0 0.0
        %2994 = vmatpush1.msra.mxu0 0.0
        %2995 = vmatprep.subr.mxu0 0.0
        %2996 = vmatpush1.msra.mxu0 0.0
        %2997 = vmatprep.subr.mxu0 0.0
        %2998 = vmatpush1.msra.mxu0 0.0
        %2999 = vmatprep.subr.mxu0 0.0
        %3000 = vmatpush1.msra.mxu0 0.0
        %3001 = vmatprep.subr.mxu0 0.0
        %3002 = vmatpush1.msra.mxu0 0.0
        %3003 = vmatprep.subr.mxu0 0.0
        %3004 = vmatpush1.msra.mxu0 0.0
        %3005 = vmatprep.subr.mxu0 0.0
        %3006 = vmatpush1.msra.mxu0 0.0
        %3007 = vmatprep.subr.mxu0 0.0
        %3008 = vmatpush1.msra.mxu0 0.0
        %3009 = vmatprep.subr.mxu0 0.0
        %3010 = vmatpush1.msra.mxu0 0.0
        %3011 = vmatprep.subr.mxu0 0.0
        %3012 = vmatpush1.msra.mxu0 0.0
        %3013 = vmatprep.mubr.f32.mxu0 0.0
        %3014 = vmatmul.mubr.f32.gmra.mrb[0].mxu0 %v2854
        %v3015 = vpop.f32.mrb[0].mxu0
        %v3016 = vadd.f32 0.0, %v3015
        %v3017 = vpop.f32.mrb[0].mxu0
        %3018 = vmatprep.mubr.f32.mxu0 0.0
        %3019 = vmatmul.mubr.f32.gmra.mrb[0].mxu0 %v2857
        %v3020 = vpop.f32.mrb[0].mxu0
        %v3021 = vadd.f32 0.0, %v3020
        %v3022 = vpop.f32.mrb[0].mxu0
        %3023 = vmatprep.mubr.f32.mxu0 0.0
        %3024 = vmatmul.mubr.f32.gmra.mrb[0].mxu0 %v2860
        %v3025 = vpop.f32.mrb[0].mxu0
        %v3026 = vadd.f32 0.0, %v3025
        %v3027 = vpop.f32.mrb[0].mxu0
        %3028 = vmatprep.mubr.f32.mxu0 0.0
        %3029 = vmatmul.mubr.f32.gmra.mrb[0].mxu0 %v2863
        %v3030 = vpop.f32.mrb[0].mxu0
        %v3031 = vadd.f32 0.0, %v3030
        %v3032 = vpop.f32.mrb[0].mxu0
        %3033 = vmatprep.mubr.f32.mxu0 0.0
        %3034 = vmatmul.mubr.f32.gmra.mrb[0].mxu0 %v2866
        %v3035 = vpop.f32.mrb[0].mxu0
        %v3036 = vadd.f32 0.0, %v3035
        %v3037 = vpop.f32.mrb[0].mxu0
        %3038 = vmatprep.mubr.f32.mxu0 0.0
        %3039 = vmatmul.mubr.f32.gmra.mrb[0].mxu0 %v2869
        %v3040 = vpop.f32.mrb[0].mxu0
        %v3041 = vadd.f32 0.0, %v3040
        %v3042 = vpop.f32.mrb[0].mxu0
        %3043 = vmatprep.mubr.f32.mxu0 0.0
        %3044 = vmatmul.mubr.f32.gmra.mrb[0].mxu0 %v2872
        %v3045 = vpop.f32.mrb[0].mxu0
        %v3046 = vadd.f32 0.0, %v3045
        %v3047 = vpop.f32.mrb[0].mxu0
        %3048 = vmatprep.mubr.f32.mxu0 0.0
        %3049 = vmatmul.mubr.f32.gmra.mrb[0].mxu0 %v2875
        %v3050 = vpop.f32.mrb[0].mxu0
        %v3051 = vadd.f32 0.0, %v3050
        %v3052 = vpop.f32.mrb[0].mxu0
        %3053 = vmatprep.mubr.f32.mxu0 0.0
        %3054 = vmatmul.mubr.f32.gmra.mrb[0].mxu0 %v2878
        %v3055 = vpop.f32.mrb[0].mxu0
        %v3056 = vadd.f32 0.0, %v3055
        %v3057 = vpop.f32.mrb[0].mxu0
        %3058 = vmatprep.mubr.f32.mxu0 0.0
        %3059 = vmatmul.mubr.f32.gmra.mrb[0].mxu0 %v2881
        %v3060 = vpop.f32.mrb[0].mxu0
        %v3061 = vadd.f32 0.0, %v3060
        %v3062 = vpop.f32.mrb[0].mxu0
        %3063 = vmatprep.mubr.f32.mxu0 0.0
        %3064 = vmatmul.mubr.f32.gmra.mrb[0].mxu0 %v2884
        %v3065 = vpop.f32.mrb[0].mxu0
        %v3066 = vadd.f32 0.0, %v3065
        %v3067 = vpop.f32.mrb[0].mxu0
        %3068 = vmatprep.mubr.f32.mxu0 0.0
        %3069 = vmatmul.mubr.f32.gmra.mrb[0].mxu0 %v2887
        %v3070 = vpop.f32.mrb[0].mxu0
        %v3071 = vadd.f32 0.0, %v3070
        %v3072 = vpop.f32.mrb[0].mxu0
        %3073 = vmatprep.mubr.f32.mxu0 0.0
        %3074 = vmatmul.mubr.f32.gmra.mrb[0].mxu0 %v2890
        %v3075 = vpop.f32.mrb[0].mxu0
        %v3076 = vadd.f32 0.0, %v3075
        %v3077 = vpop.f32.mrb[0].mxu0
        %3078 = vmatprep.mubr.f32.mxu0 0.0
        %3079 = vmatmul.mubr.f32.gmra.mrb[0].mxu0 %v2893
        %v3080 = vpop.f32.mrb[0].mxu0
        %v3081 = vadd.f32 0.0, %v3080
        %v3082 = vpop.f32.mrb[0].mxu0
        %3083 = vmatprep.mubr.f32.mxu0 0.0
        %3084 = vmatmul.mubr.f32.gmra.mrb[0].mxu0 %v2896
        %v3085 = vpop.f32.mrb[0].mxu0
        %v3086 = vadd.f32 0.0, %v3085
        %v3087 = vpop.f32.mrb[0].mxu0
        %3088 = vmatprep.mubr.f32.mxu0 0.0
        %3089 = vmatmul.mubr.f32.gmra.mrb[0].mxu0 %v2899
        %v3090 = vpop.f32.mrb[0].mxu0
        %v3091 = vadd.f32 0.0, %v3090
        %v3092 = vpop.f32.mrb[0].mxu0
        %3093 = vmatprep.mubr.f32.mxu0 0.0
        %3094 = vmatmul.mubr.f32.gmra.mrb[0].mxu0 %v2902
        %v3095 = vpop.f32.mrb[0].mxu0
        %v3096 = vadd.f32 0.0, %v3095
        %v3097 = vpop.f32.mrb[0].mxu0
        %3098 = vmatprep.mubr.f32.mxu0 0.0
        %3099 = vmatmul.mubr.f32.gmra.mrb[0].mxu0 %v2905
        %v3100 = vpop.f32.mrb[0].mxu0
        %v3101 = vadd.f32 0.0, %v3100
        %v3102 = vpop.f32.mrb[0].mxu0
        %3103 = vmatprep.mubr.f32.mxu0 0.0
        %3104 = vmatmul.mubr.f32.gmra.mrb[0].mxu0 %v2908
        %v3105 = vpop.f32.mrb[0].mxu0
        %v3106 = vadd.f32 0.0, %v3105
        %v3107 = vpop.f32.mrb[0].mxu0
        %3108 = vmatprep.mubr.f32.mxu0 0.0
        %3109 = vmatmul.mubr.f32.gmra.mrb[0].mxu0 %v2911
        %v3110 = vpop.f32.mrb[0].mxu0
        %v3111 = vadd.f32 0.0, %v3110
        %v3112 = vpop.f32.mrb[0].mxu0
        %3113 = vmatprep.mubr.f32.mxu0 0.0
        %3114 = vmatmul.mubr.f32.gmra.mrb[0].mxu0 %v2914
        %v3115 = vpop.f32.mrb[0].mxu0
        %v3116 = vadd.f32 0.0, %v3115
        %v3117 = vpop.f32.mrb[0].mxu0
        %3118 = vmatprep.mubr.f32.mxu0 0.0
        %3119 = vmatmul.mubr.f32.gmra.mrb[0].mxu0 %v2917
        %v3120 = vpop.f32.mrb[0].mxu0
        %v3121 = vadd.f32 0.0, %v3120
        %v3122 = vpop.f32.mrb[0].mxu0
        %3123 = vmatprep.mubr.f32.mxu0 0.0
        %3124 = vmatmul.mubr.f32.gmra.mrb[0].mxu0 %v2920
        %v3125 = vpop.f32.mrb[0].mxu0
        %v3126 = vadd.f32 0.0, %v3125
        %v3127 = vpop.f32.mrb[0].mxu0
        %3128 = vmatprep.mubr.f32.mxu0 0.0
        %3129 = vmatmul.mubr.f32.gmra.mrb[0].mxu0 %v2923
        %v3130 = vpop.f32.mrb[0].mxu0
        %v3131 = vadd.f32 0.0, %v3130
        %v3132 = vpop.f32.mrb[0].mxu0
        %3133 = vmatprep.mubr.f32.mxu0 0.0
        %3134 = vmatmul.mubr.f32.gmra.mrb[0].mxu0 %v2926
        %v3135 = vpop.f32.mrb[0].mxu0
        %v3136 = vadd.f32 0.0, %v3135
        %v3137 = vpop.f32.mrb[0].mxu0
        %3138 = vmatprep.mubr.f32.mxu0 0.0
        %3139 = vmatmul.mubr.f32.gmra.mrb[0].mxu0 %v2929
        %v3140 = vpop.f32.mrb[0].mxu0
        %v3141 = vadd.f32 0.0, %v3140
        %v3142 = vpop.f32.mrb[0].mxu0
        %3143 = vmatprep.mubr.f32.mxu0 0.0
        %3144 = vmatmul.mubr.f32.gmra.mrb[0].mxu0 %v2932
        %v3145 = vpop.f32.mrb[0].mxu0
        %v3146 = vadd.f32 0.0, %v3145
        %v3147 = vpop.f32.mrb[0].mxu0
        %3148 = vmatprep.mubr.f32.mxu0 0.0
        %3149 = vmatmul.mubr.f32.gmra.mrb[0].mxu0 %v2935
        %v3150 = vpop.f32.mrb[0].mxu0
        %v3151 = vadd.f32 0.0, %v3150
        %v3152 = vpop.f32.mrb[0].mxu0
        %3153 = vmatprep.mubr.f32.mxu0 0.0
        %3154 = vmatmul.mubr.f32.gmra.mrb[0].mxu0 %v2938
        %v3155 = vpop.f32.mrb[0].mxu0
        %v3156 = vadd.f32 0.0, %v3155
        %v3157 = vpop.f32.mrb[0].mxu0
        %3158 = vmatprep.mubr.f32.mxu0 0.0
        %3159 = vmatmul.mubr.f32.gmra.mrb[0].mxu0 %v2941
        %v3160 = vpop.f32.mrb[0].mxu0
        %v3161 = vadd.f32 0.0, %v3160
        %v3162 = vpop.f32.mrb[0].mxu0
        %3163 = vmatprep.mubr.f32.mxu0 0.0
        %3164 = vmatmul.mubr.f32.gmra.mrb[0].mxu0 %v2944
        %v3165 = vpop.f32.mrb[0].mxu0
        %v3166 = vadd.f32 0.0, %v3165
        %v3167 = vpop.f32.mrb[0].mxu0
        %3168 = vmatprep.mubr.f32.mxu0 0.0
        %3169 = vmatmul.mubr.f32.gmra.mrb[0].mxu0 %v2947
        %v3170 = vpop.f32.mrb[0].mxu0
        %v3171 = vadd.f32 0.0, %v3170
        %v3172 = vpop.f32.mrb[0].mxu0
        %3173 = vdwg.mxu0
        %v3175 = vsel %vm1039, %v2764, 0
        %v3178 = vsel %vm1039, %v2765, 0
        %v3181 = vsel %vm1039, %v2766, 0
        %v3184 = vsel %vm1039, %v2767, 0
        %v3187 = vsel %vm1039, %v2768, 0
        %v3190 = vsel %vm1039, %v2769, 0
        %v3193 = vsel %vm1039, %v2770, 0
        %v3196 = vsel %vm1039, %v2771, 0
        %v3199 = vsel %vm1039, %v2772, 0
        %v3202 = vsel %vm1039, %v2773, 0
        %v3205 = vsel %vm1039, %v2774, 0
        %v3208 = vsel %vm1039, %v2775, 0
        %v3211 = vsel %vm1039, %v2776, 0
        %v3214 = vsel %vm1039, %v2777, 0
        %v3217 = vsel %vm1039, %v2778, 0
        %v3220 = vsel %vm1039, %v2779, 0
        %v3223 = vsel %vm1039, %v2780, 0
        %v3226 = vsel %vm1039, %v2781, 0
        %v3229 = vsel %vm1039, %v2782, 0
        %v3232 = vsel %vm1039, %v2783, 0
        %v3235 = vsel %vm1039, %v2784, 0
        %v3238 = vsel %vm1039, %v2785, 0
        %v3241 = vsel %vm1039, %v2786, 0
        %v3244 = vsel %vm1039, %v2787, 0
        %v3247 = vsel %vm1039, %v2788, 0
        %v3250 = vsel %vm1039, %v2789, 0
        %v3253 = vsel %vm1039, %v2790, 0
        %v3256 = vsel %vm1039, %v2791, 0
        %v3259 = vsel %vm1039, %v2792, 0
        %v3262 = vsel %vm1039, %v2793, 0
        %v3265 = vsel %vm1039, %v2794, 0
        %v3268 = vsel %vm1039, %v2795, 0
        %3270 = vmatprep.subr.mxu0 0.0
        %3271 = vmatpush1.msra.mxu0 %v2796
        %3272 = vmatprep.subr.mxu0 0.0
        %3273 = vmatpush1.msra.mxu0 %v2797
        %3274 = vmatprep.subr.mxu0 0.0
        %3275 = vmatpush1.msra.mxu0 %v2798
        %3276 = vmatprep.subr.mxu0 0.0
        %3277 = vmatpush1.msra.mxu0 %v2799
        %3278 = vmatprep.subr.mxu0 0.0
        %3279 = vmatpush1.msra.mxu0 %v2800
        %3280 = vmatprep.subr.mxu0 0.0
        %3281 = vmatpush1.msra.mxu0 %v2801
        %3282 = vmatprep.subr.mxu0 0.0
        %3283 = vmatpush1.msra.mxu0 %v2802
        %3284 = vmatprep.subr.mxu0 0.0
        %3285 = vmatpush1.msra.mxu0 %v2803
        %3286 = vmatprep.subr.mxu0 0.0
        %3287 = vmatpush1.msra.mxu0 %v2804
        %3288 = vmatprep.subr.mxu0 0.0
        %3289 = vmatpush1.msra.mxu0 %v2805
        %3290 = vmatprep.subr.mxu0 0.0
        %3291 = vmatpush1.msra.mxu0 %v2806
        %3292 = vmatprep.subr.mxu0 0.0
        %3293 = vmatpush1.msra.mxu0 %v2807
        %3294 = vmatprep.subr.mxu0 0.0
        %3295 = vmatpush1.msra.mxu0 0.0
        %3296 = vmatprep.subr.mxu0 0.0
        %3297 = vmatpush1.msra.mxu0 0.0
        %3298 = vmatprep.subr.mxu0 0.0
        %3299 = vmatpush1.msra.mxu0 0.0
        %3300 = vmatprep.subr.mxu0 0.0
        %3301 = vmatpush1.msra.mxu0 0.0
        %3302 = vmatprep.subr.mxu0 0.0
        %3303 = vmatpush1.msra.mxu0 0.0
        %3304 = vmatprep.subr.mxu0 0.0
        %3305 = vmatpush1.msra.mxu0 0.0
        %3306 = vmatprep.subr.mxu0 0.0
        %3307 = vmatpush1.msra.mxu0 0.0
        %3308 = vmatprep.subr.mxu0 0.0
        %3309 = vmatpush1.msra.mxu0 0.0
        %3310 = vmatprep.subr.mxu0 0.0
        %3311 = vmatpush1.msra.mxu0 0.0
        %3312 = vmatprep.subr.mxu0 0.0
        %3313 = vmatpush1.msra.mxu0 0.0
        %3314 = vmatprep.subr.mxu0 0.0
        %3315 = vmatpush1.msra.mxu0 0.0
        %3316 = vmatprep.subr.mxu0 0.0
        %3317 = vmatpush1.msra.mxu0 0.0
        %3318 = vmatprep.subr.mxu0 0.0
        %3319 = vmatpush1.msra.mxu0 0.0
        %3320 = vmatprep.subr.mxu0 0.0
        %3321 = vmatpush1.msra.mxu0 0.0
        %3322 = vmatprep.subr.mxu0 0.0
        %3323 = vmatpush1.msra.mxu0 0.0
        %3324 = vmatprep.subr.mxu0 0.0
        %3325 = vmatpush1.msra.mxu0 0.0
        %3326 = vmatprep.subr.mxu0 0.0
        %3327 = vmatpush1.msra.mxu0 0.0
        %3328 = vmatprep.subr.mxu0 0.0
        %3329 = vmatpush1.msra.mxu0 0.0
        %3330 = vmatprep.subr.mxu0 0.0
        %3331 = vmatpush1.msra.mxu0 0.0
        %3332 = vmatprep.subr.mxu0 0.0
        %3333 = vmatpush1.msra.mxu0 0.0
        %3334 = vmatprep.mubr.f32.mxu0 0.0
        %3335 = vmatmul.mubr.f32.gmra.mrb[0].mxu0 %v3175
        %v3336 = vpop.f32.mrb[0].mxu0
        %v3337 = vadd.f32 %v3016, %v3336
        %v3338 = vpop.f32.mrb[0].mxu0
        %3339 = vmatprep.mubr.f32.mxu0 0.0
        %3340 = vmatmul.mubr.f32.gmra.mrb[0].mxu0 %v3178
        %v3341 = vpop.f32.mrb[0].mxu0
        %v3342 = vadd.f32 %v3021, %v3341
        %v3343 = vpop.f32.mrb[0].mxu0
        %3344 = vmatprep.mubr.f32.mxu0 0.0
        %3345 = vmatmul.mubr.f32.gmra.mrb[0].mxu0 %v3181
        %v3346 = vpop.f32.mrb[0].mxu0
        %v3347 = vadd.f32 %v3026, %v3346
        %v3348 = vpop.f32.mrb[0].mxu0
        %3349 = vmatprep.mubr.f32.mxu0 0.0
        %3350 = vmatmul.mubr.f32.gmra.mrb[0].mxu0 %v3184
        %v3351 = vpop.f32.mrb[0].mxu0
        %v3352 = vadd.f32 %v3031, %v3351
        %v3353 = vpop.f32.mrb[0].mxu0
        %3354 = vmatprep.mubr.f32.mxu0 0.0
        %3355 = vmatmul.mubr.f32.gmra.mrb[0].mxu0 %v3187
        %v3356 = vpop.f32.mrb[0].mxu0
        %v3357 = vadd.f32 %v3036, %v3356
        %v3358 = vpop.f32.mrb[0].mxu0
        %3359 = vmatprep.mubr.f32.mxu0 0.0
        %3360 = vmatmul.mubr.f32.gmra.mrb[0].mxu0 %v3190
        %v3361 = vpop.f32.mrb[0].mxu0
        %v3362 = vadd.f32 %v3041, %v3361
        %v3363 = vpop.f32.mrb[0].mxu0
        %3364 = vmatprep.mubr.f32.mxu0 0.0
        %3365 = vmatmul.mubr.f32.gmra.mrb[0].mxu0 %v3193
        %v3366 = vpop.f32.mrb[0].mxu0
        %v3367 = vadd.f32 %v3046, %v3366
        %v3368 = vpop.f32.mrb[0].mxu0
        %3369 = vmatprep.mubr.f32.mxu0 0.0
        %3370 = vmatmul.mubr.f32.gmra.mrb[0].mxu0 %v3196
        %v3371 = vpop.f32.mrb[0].mxu0
        %v3372 = vadd.f32 %v3051, %v3371
        %v3373 = vpop.f32.mrb[0].mxu0
        %3374 = vmatprep.mubr.f32.mxu0 0.0
        %3375 = vmatmul.mubr.f32.gmra.mrb[0].mxu0 %v3199
        %v3376 = vpop.f32.mrb[0].mxu0
        %v3377 = vadd.f32 %v3056, %v3376
        %v3378 = vpop.f32.mrb[0].mxu0
        %3379 = vmatprep.mubr.f32.mxu0 0.0
        %3380 = vmatmul.mubr.f32.gmra.mrb[0].mxu0 %v3202
        %v3381 = vpop.f32.mrb[0].mxu0
        %v3382 = vadd.f32 %v3061, %v3381
        %v3383 = vpop.f32.mrb[0].mxu0
        %3384 = vmatprep.mubr.f32.mxu0 0.0
        %3385 = vmatmul.mubr.f32.gmra.mrb[0].mxu0 %v3205
        %v3386 = vpop.f32.mrb[0].mxu0
        %v3387 = vadd.f32 %v3066, %v3386
        %v3388 = vpop.f32.mrb[0].mxu0
        %3389 = vmatprep.mubr.f32.mxu0 0.0
        %3390 = vmatmul.mubr.f32.gmra.mrb[0].mxu0 %v3208
        %v3391 = vpop.f32.mrb[0].mxu0
        %v3392 = vadd.f32 %v3071, %v3391
        %v3393 = vpop.f32.mrb[0].mxu0
        %3394 = vmatprep.mubr.f32.mxu0 0.0
        %3395 = vmatmul.mubr.f32.gmra.mrb[0].mxu0 %v3211
        %v3396 = vpop.f32.mrb[0].mxu0
        %v3397 = vadd.f32 %v3076, %v3396
        %v3398 = vpop.f32.mrb[0].mxu0
        %3399 = vmatprep.mubr.f32.mxu0 0.0
        %3400 = vmatmul.mubr.f32.gmra.mrb[0].mxu0 %v3214
        %v3401 = vpop.f32.mrb[0].mxu0
        %v3402 = vadd.f32 %v3081, %v3401
        %v3403 = vpop.f32.mrb[0].mxu0
        %3404 = vmatprep.mubr.f32.mxu0 0.0
        %3405 = vmatmul.mubr.f32.gmra.mrb[0].mxu0 %v3217
        %v3406 = vpop.f32.mrb[0].mxu0
        %v3407 = vadd.f32 %v3086, %v3406
        %v3408 = vpop.f32.mrb[0].mxu0
        %3409 = vmatprep.mubr.f32.mxu0 0.0
        %3410 = vmatmul.mubr.f32.gmra.mrb[0].mxu0 %v3220
        %v3411 = vpop.f32.mrb[0].mxu0
        %v3412 = vadd.f32 %v3091, %v3411
        %v3413 = vpop.f32.mrb[0].mxu0
        %3414 = vmatprep.mubr.f32.mxu0 0.0
        %3415 = vmatmul.mubr.f32.gmra.mrb[0].mxu0 %v3223
        %v3416 = vpop.f32.mrb[0].mxu0
        %v3417 = vadd.f32 %v3096, %v3416
        %v3418 = vpop.f32.mrb[0].mxu0
        %3419 = vmatprep.mubr.f32.mxu0 0.0
        %3420 = vmatmul.mubr.f32.gmra.mrb[0].mxu0 %v3226
        %v3421 = vpop.f32.mrb[0].mxu0
        %v3422 = vadd.f32 %v3101, %v3421
        %v3423 = vpop.f32.mrb[0].mxu0
        %3424 = vmatprep.mubr.f32.mxu0 0.0
        %3425 = vmatmul.mubr.f32.gmra.mrb[0].mxu0 %v3229
        %v3426 = vpop.f32.mrb[0].mxu0
        %v3427 = vadd.f32 %v3106, %v3426
        %v3428 = vpop.f32.mrb[0].mxu0
        %3429 = vmatprep.mubr.f32.mxu0 0.0
        %3430 = vmatmul.mubr.f32.gmra.mrb[0].mxu0 %v3232
        %v3431 = vpop.f32.mrb[0].mxu0
        %v3432 = vadd.f32 %v3111, %v3431
        %v3433 = vpop.f32.mrb[0].mxu0
        %3434 = vmatprep.mubr.f32.mxu0 0.0
        %3435 = vmatmul.mubr.f32.gmra.mrb[0].mxu0 %v3235
        %v3436 = vpop.f32.mrb[0].mxu0
        %v3437 = vadd.f32 %v3116, %v3436
        %v3438 = vpop.f32.mrb[0].mxu0
        %3439 = vmatprep.mubr.f32.mxu0 0.0
        %3440 = vmatmul.mubr.f32.gmra.mrb[0].mxu0 %v3238
        %v3441 = vpop.f32.mrb[0].mxu0
        %v3442 = vadd.f32 %v3121, %v3441
        %v3443 = vpop.f32.mrb[0].mxu0
        %3444 = vmatprep.mubr.f32.mxu0 0.0
        %3445 = vmatmul.mubr.f32.gmra.mrb[0].mxu0 %v3241
        %v3446 = vpop.f32.mrb[0].mxu0
        %v3447 = vadd.f32 %v3126, %v3446
        %v3448 = vpop.f32.mrb[0].mxu0
        %3449 = vmatprep.mubr.f32.mxu0 0.0
        %3450 = vmatmul.mubr.f32.gmra.mrb[0].mxu0 %v3244
        %v3451 = vpop.f32.mrb[0].mxu0
        %v3452 = vadd.f32 %v3131, %v3451
        %v3453 = vpop.f32.mrb[0].mxu0
        %3454 = vmatprep.mubr.f32.mxu0 0.0
        %3455 = vmatmul.mubr.f32.gmra.mrb[0].mxu0 %v3247
        %v3456 = vpop.f32.mrb[0].mxu0
        %v3457 = vadd.f32 %v3136, %v3456
        %v3458 = vpop.f32.mrb[0].mxu0
        %3459 = vmatprep.mubr.f32.mxu0 0.0
        %3460 = vmatmul.mubr.f32.gmra.mrb[0].mxu0 %v3250
        %v3461 = vpop.f32.mrb[0].mxu0
        %v3462 = vadd.f32 %v3141, %v3461
        %v3463 = vpop.f32.mrb[0].mxu0
        %3464 = vmatprep.mubr.f32.mxu0 0.0
        %3465 = vmatmul.mubr.f32.gmra.mrb[0].mxu0 %v3253
        %v3466 = vpop.f32.mrb[0].mxu0
        %v3467 = vadd.f32 %v3146, %v3466
        %v3468 = vpop.f32.mrb[0].mxu0
        %3469 = vmatprep.mubr.f32.mxu0 0.0
        %3470 = vmatmul.mubr.f32.gmra.mrb[0].mxu0 %v3256
        %v3471 = vpop.f32.mrb[0].mxu0
        %v3472 = vadd.f32 %v3151, %v3471
        %v3473 = vpop.f32.mrb[0].mxu0
        %3474 = vmatprep.mubr.f32.mxu0 0.0
        %3475 = vmatmul.mubr.f32.gmra.mrb[0].mxu0 %v3259
        %v3476 = vpop.f32.mrb[0].mxu0
        %v3477 = vadd.f32 %v3156, %v3476
        %v3478 = vpop.f32.mrb[0].mxu0
        %3479 = vmatprep.mubr.f32.mxu0 0.0
        %3480 = vmatmul.mubr.f32.gmra.mrb[0].mxu0 %v3262
        %v3481 = vpop.f32.mrb[0].mxu0
        %v3482 = vadd.f32 %v3161, %v3481
        %v3483 = vpop.f32.mrb[0].mxu0
        %3484 = vmatprep.mubr.f32.mxu0 0.0
        %3485 = vmatmul.mubr.f32.gmra.mrb[0].mxu0 %v3265
        %v3486 = vpop.f32.mrb[0].mxu0
        %v3487 = vadd.f32 %v3166, %v3486
        %v3488 = vpop.f32.mrb[0].mxu0
        %3489 = vmatprep.mubr.f32.mxu0 0.0
        %3490 = vmatmul.mubr.f32.gmra.mrb[0].mxu0 %v3268
        %v3491 = vpop.f32.mrb[0].mxu0
        %v3492 = vadd.f32 %v3171, %v3491
        %v3493 = vpop.f32.mrb[0].mxu0
        %3494 = vdwg.mxu0
        %v3495 = vld [vmem:[%s1682] sm:$0xff]
        %v3496 = vld [vmem:[%s1682 + $0x8] sm:$0xff]
        %v3497 = vld [vmem:[%s1682 + $0x10] sm:$0xff]
        %v3498 = vld [vmem:[%s1682 + $0x18] sm:$0xff]
        %v3499 = vld [vmem:[%s1682 + $0x20] sm:$0xff]
        %v3500 = vld [vmem:[%s1682 + $0x28] sm:$0xff]
        %v3501 = vld [vmem:[%s1682 + $0x30] sm:$0xff]
        %v3502 = vld [vmem:[%s1682 + $0x38] sm:$0xff]
        %v3503 = vld [vmem:[%s1682 + $0x40] sm:$0xff]
        %v3504 = vld [vmem:[%s1682 + $0x48] sm:$0xff]
        %v3505 = vld [vmem:[%s1682 + $0x50] sm:$0xff]
        %v3506 = vld [vmem:[%s1682 + $0x58] sm:$0xff]
        %v3507 = vld [vmem:[%s1682 + $0x60] sm:$0xff]
        %v3508 = vld [vmem:[%s1682 + $0x68] sm:$0xff]
        %v3509 = vld [vmem:[%s1682 + $0x70] sm:$0xff]
        %v3510 = vld [vmem:[%s1682 + $0x78] sm:$0xff]
        %v3511 = vld [vmem:[%s1682 + $0x80] sm:$0xff]
        %v3512 = vld [vmem:[%s1682 + $0x88] sm:$0xff]
        %v3513 = vld [vmem:[%s1682 + $0x90] sm:$0xff]
        %v3514 = vld [vmem:[%s1682 + $0x98] sm:$0xff]
        %v3515 = vld [vmem:[%s1682 + $0xa0] sm:$0xff]
        %v3516 = vld [vmem:[%s1682 + $0xa8] sm:$0xff]
        %v3517 = vld [vmem:[%s1682 + $0xb0] sm:$0xff]
        %v3518 = vld [vmem:[%s1682 + $0xb8] sm:$0xff]
        %v3519 = vld [vmem:[%s1682 + $0xc0] sm:$0xff]
        %v3520 = vld [vmem:[%s1682 + $0xc8] sm:$0xff]
        %v3521 = vld [vmem:[%s1682 + $0xd0] sm:$0xff]
        %v3522 = vld [vmem:[%s1682 + $0xd8] sm:$0xff]
        %v3523 = vld [vmem:[%s1682 + $0xe0] sm:$0xff]
        %v3524 = vld [vmem:[%s1682 + $0xe8] sm:$0xff]
        %v3525 = vld [vmem:[%s1682 + $0xf0] sm:$0xff]
        %v3526 = vld [vmem:[%s1682 + $0xf8] sm:$0xff]
        %s3527 = scalar_lea.vmem %s3, 192
        %v3528 = vld [vmem:[%s3527] sm:$0xff]
        %v3529 = vld [vmem:[%s3527 + $0x8] sm:$0xff]
        %v3530 = vld [vmem:[%s3527 + $0x10] sm:$0xff]
        %v3531 = vld [vmem:[%s3527 + $0x18] sm:$0xff]
        %v3532 = vld [vmem:[%s3527 + $0x20] sm:$0xff]
        %v3533 = vld [vmem:[%s3527 + $0x28] sm:$0xff]
        %v3534 = vld [vmem:[%s3527 + $0x30] sm:$0xff]
        %v3535 = vld [vmem:[%s3527 + $0x38] sm:$0xff]
        %v3536 = vld [vmem:[%s3527 + $0x40] sm:$0xff]
        %v3537 = vld [vmem:[%s3527 + $0x48] sm:$0xff]
        %v3538 = vld [vmem:[%s3527 + $0x50] sm:$0xff]
        %v3539 = vld [vmem:[%s3527 + $0x58] sm:$0xff]
        %v3541 = vsel %vm1039, %v3495, 0
        %v3544 = vsel %vm1039, %v3496, 0
        %v3547 = vsel %vm1039, %v3497, 0
        %v3550 = vsel %vm1039, %v3498, 0
        %v3553 = vsel %vm1039, %v3499, 0
        %v3556 = vsel %vm1039, %v3500, 0
        %v3559 = vsel %vm1039, %v3501, 0
        %v3562 = vsel %vm1039, %v3502, 0
        %v3565 = vsel %vm1039, %v3503, 0
        %v3568 = vsel %vm1039, %v3504, 0
        %v3571 = vsel %vm1039, %v3505, 0
        %v3574 = vsel %vm1039, %v3506, 0
        %v3577 = vsel %vm1039, %v3507, 0
        %v3580 = vsel %vm1039, %v3508, 0
        %v3583 = vsel %vm1039, %v3509, 0
        %v3586 = vsel %vm1039, %v3510, 0
        %v3589 = vsel %vm1039, %v3511, 0
        %v3592 = vsel %vm1039, %v3512, 0
        %v3595 = vsel %vm1039, %v3513, 0
        %v3598 = vsel %vm1039, %v3514, 0
        %v3601 = vsel %vm1039, %v3515, 0
        %v3604 = vsel %vm1039, %v3516, 0
        %v3607 = vsel %vm1039, %v3517, 0
        %v3610 = vsel %vm1039, %v3518, 0
        %v3613 = vsel %vm1039, %v3519, 0
        %v3616 = vsel %vm1039, %v3520, 0
        %v3619 = vsel %vm1039, %v3521, 0
        %v3622 = vsel %vm1039, %v3522, 0
        %v3625 = vsel %vm1039, %v3523, 0
        %v3628 = vsel %vm1039, %v3524, 0
        %v3631 = vsel %vm1039, %v3525, 0
        %v3634 = vsel %vm1039, %v3526, 0
        %3636 = vmatprep.subr.mxu0 0.0
        %3637 = vmatpush1.msra.mxu0 %v3528
        %3638 = vmatprep.subr.mxu0 0.0
        %3639 = vmatpush1.msra.mxu0 %v3529
        %3640 = vmatprep.subr.mxu0 0.0
        %3641 = vmatpush1.msra.mxu0 %v3530
        %3642 = vmatprep.subr.mxu0 0.0
        %3643 = vmatpush1.msra.mxu0 %v3531
        %3644 = vmatprep.subr.mxu0 0.0
        %3645 = vmatpush1.msra.mxu0 %v3532
        %3646 = vmatprep.subr.mxu0 0.0
        %3647 = vmatpush1.msra.mxu0 %v3533
        %3648 = vmatprep.subr.mxu0 0.0
        %3649 = vmatpush1.msra.mxu0 %v3534
        %3650 = vmatprep.subr.mxu0 0.0
        %3651 = vmatpush1.msra.mxu0 %v3535
        %3652 = vmatprep.subr.mxu0 0.0
        %3653 = vmatpush1.msra.mxu0 %v3536
        %3654 = vmatprep.subr.mxu0 0.0
        %3655 = vmatpush1.msra.mxu0 %v3537
        %3656 = vmatprep.subr.mxu0 0.0
        %3657 = vmatpush1.msra.mxu0 %v3538
        %3658 = vmatprep.subr.mxu0 0.0
        %3659 = vmatpush1.msra.mxu0 %v3539
        %3660 = vmatprep.subr.mxu0 0.0
        %3661 = vmatpush1.msra.mxu0 0.0
        %3662 = vmatprep.subr.mxu0 0.0
        %3663 = vmatpush1.msra.mxu0 0.0
        %3664 = vmatprep.subr.mxu0 0.0
        %3665 = vmatpush1.msra.mxu0 0.0
        %3666 = vmatprep.subr.mxu0 0.0
        %3667 = vmatpush1.msra.mxu0 0.0
        %3668 = vmatprep.subr.mxu0 0.0
        %3669 = vmatpush1.msra.mxu0 0.0
        %3670 = vmatprep.subr.mxu0 0.0
        %3671 = vmatpush1.msra.mxu0 0.0
        %3672 = vmatprep.subr.mxu0 0.0
        %3673 = vmatpush1.msra.mxu0 0.0
        %3674 = vmatprep.subr.mxu0 0.0
        %3675 = vmatpush1.msra.mxu0 0.0
        %3676 = vmatprep.subr.mxu0 0.0
        %3677 = vmatpush1.msra.mxu0 0.0
        %3678 = vmatprep.subr.mxu0 0.0
        %3679 = vmatpush1.msra.mxu0 0.0
        %3680 = vmatprep.subr.mxu0 0.0
        %3681 = vmatpush1.msra.mxu0 0.0
        %3682 = vmatprep.subr.mxu0 0.0
        %3683 = vmatpush1.msra.mxu0 0.0
        %3684 = vmatprep.subr.mxu0 0.0
        %3685 = vmatpush1.msra.mxu0 0.0
        %3686 = vmatprep.subr.mxu0 0.0
        %3687 = vmatpush1.msra.mxu0 0.0
        %3688 = vmatprep.subr.mxu0 0.0
        %3689 = vmatpush1.msra.mxu0 0.0
        %3690 = vmatprep.subr.mxu0 0.0
        %3691 = vmatpush1.msra.mxu0 0.0
        %3692 = vmatprep.subr.mxu0 0.0
        %3693 = vmatpush1.msra.mxu0 0.0
        %3694 = vmatprep.subr.mxu0 0.0
        %3695 = vmatpush1.msra.mxu0 0.0
        %3696 = vmatprep.subr.mxu0 0.0
        %3697 = vmatpush1.msra.mxu0 0.0
        %3698 = vmatprep.subr.mxu0 0.0
        %3699 = vmatpush1.msra.mxu0 0.0
        %3700 = vmatprep.mubr.f32.mxu0 0.0
        %3701 = vmatmul.mubr.f32.gmra.mrb[0].mxu0 %v3541
        %v3702 = vpop.f32.mrb[0].mxu0
        %v3703 = vadd.f32 0.0, %v3702
        %v3704 = vpop.f32.mrb[0].mxu0
        %3705 = vmatprep.mubr.f32.mxu0 0.0
        %3706 = vmatmul.mubr.f32.gmra.mrb[0].mxu0 %v3544
        %v3707 = vpop.f32.mrb[0].mxu0
        %v3708 = vadd.f32 0.0, %v3707
        %v3709 = vpop.f32.mrb[0].mxu0
        %3710 = vmatprep.mubr.f32.mxu0 0.0
        %3711 = vmatmul.mubr.f32.gmra.mrb[0].mxu0 %v3547
        %v3712 = vpop.f32.mrb[0].mxu0
        %v3713 = vadd.f32 0.0, %v3712
        %v3714 = vpop.f32.mrb[0].mxu0
        %3715 = vmatprep.mubr.f32.mxu0 0.0
        %3716 = vmatmul.mubr.f32.gmra.mrb[0].mxu0 %v3550
        %v3717 = vpop.f32.mrb[0].mxu0
        %v3718 = vadd.f32 0.0, %v3717
        %v3719 = vpop.f32.mrb[0].mxu0
        %3720 = vmatprep.mubr.f32.mxu0 0.0
        %3721 = vmatmul.mubr.f32.gmra.mrb[0].mxu0 %v3553
        %v3722 = vpop.f32.mrb[0].mxu0
        %v3723 = vadd.f32 0.0, %v3722
        %v3724 = vpop.f32.mrb[0].mxu0
        %3725 = vmatprep.mubr.f32.mxu0 0.0
        %3726 = vmatmul.mubr.f32.gmra.mrb[0].mxu0 %v3556
        %v3727 = vpop.f32.mrb[0].mxu0
        %v3728 = vadd.f32 0.0, %v3727
        %v3729 = vpop.f32.mrb[0].mxu0
        %3730 = vmatprep.mubr.f32.mxu0 0.0
        %3731 = vmatmul.mubr.f32.gmra.mrb[0].mxu0 %v3559
        %v3732 = vpop.f32.mrb[0].mxu0
        %v3733 = vadd.f32 0.0, %v3732
        %v3734 = vpop.f32.mrb[0].mxu0
        %3735 = vmatprep.mubr.f32.mxu0 0.0
        %3736 = vmatmul.mubr.f32.gmra.mrb[0].mxu0 %v3562
        %v3737 = vpop.f32.mrb[0].mxu0
        %v3738 = vadd.f32 0.0, %v3737
        %v3739 = vpop.f32.mrb[0].mxu0
        %3740 = vmatprep.mubr.f32.mxu0 0.0
        %3741 = vmatmul.mubr.f32.gmra.mrb[0].mxu0 %v3565
        %v3742 = vpop.f32.mrb[0].mxu0
        %v3743 = vadd.f32 0.0, %v3742
        %v3744 = vpop.f32.mrb[0].mxu0
        %3745 = vmatprep.mubr.f32.mxu0 0.0
        %3746 = vmatmul.mubr.f32.gmra.mrb[0].mxu0 %v3568
        %v3747 = vpop.f32.mrb[0].mxu0
        %v3748 = vadd.f32 0.0, %v3747
        %v3749 = vpop.f32.mrb[0].mxu0
        %3750 = vmatprep.mubr.f32.mxu0 0.0
        %3751 = vmatmul.mubr.f32.gmra.mrb[0].mxu0 %v3571
        %v3752 = vpop.f32.mrb[0].mxu0
        %v3753 = vadd.f32 0.0, %v3752
        %v3754 = vpop.f32.mrb[0].mxu0
        %3755 = vmatprep.mubr.f32.mxu0 0.0
        %3756 = vmatmul.mubr.f32.gmra.mrb[0].mxu0 %v3574
        %v3757 = vpop.f32.mrb[0].mxu0
        %v3758 = vadd.f32 0.0, %v3757
        %v3759 = vpop.f32.mrb[0].mxu0
        %3760 = vmatprep.mubr.f32.mxu0 0.0
        %3761 = vmatmul.mubr.f32.gmra.mrb[0].mxu0 %v3577
        %v3762 = vpop.f32.mrb[0].mxu0
        %v3763 = vadd.f32 0.0, %v3762
        %v3764 = vpop.f32.mrb[0].mxu0
        %3765 = vmatprep.mubr.f32.mxu0 0.0
        %3766 = vmatmul.mubr.f32.gmra.mrb[0].mxu0 %v3580
        %v3767 = vpop.f32.mrb[0].mxu0
        %v3768 = vadd.f32 0.0, %v3767
        %v3769 = vpop.f32.mrb[0].mxu0
        %3770 = vmatprep.mubr.f32.mxu0 0.0
        %3771 = vmatmul.mubr.f32.gmra.mrb[0].mxu0 %v3583
        %v3772 = vpop.f32.mrb[0].mxu0
        %v3773 = vadd.f32 0.0, %v3772
        %v3774 = vpop.f32.mrb[0].mxu0
        %3775 = vmatprep.mubr.f32.mxu0 0.0
        %3776 = vmatmul.mubr.f32.gmra.mrb[0].mxu0 %v3586
        %v3777 = vpop.f32.mrb[0].mxu0
        %v3778 = vadd.f32 0.0, %v3777
        %v3779 = vpop.f32.mrb[0].mxu0
        %3780 = vmatprep.mubr.f32.mxu0 0.0
        %3781 = vmatmul.mubr.f32.gmra.mrb[0].mxu0 %v3589
        %v3782 = vpop.f32.mrb[0].mxu0
        %v3783 = vadd.f32 0.0, %v3782
        %v3784 = vpop.f32.mrb[0].mxu0
        %3785 = vmatprep.mubr.f32.mxu0 0.0
        %3786 = vmatmul.mubr.f32.gmra.mrb[0].mxu0 %v3592
        %v3787 = vpop.f32.mrb[0].mxu0
        %v3788 = vadd.f32 0.0, %v3787
        %v3789 = vpop.f32.mrb[0].mxu0
        %3790 = vmatprep.mubr.f32.mxu0 0.0
        %3791 = vmatmul.mubr.f32.gmra.mrb[0].mxu0 %v3595
        %v3792 = vpop.f32.mrb[0].mxu0
        %v3793 = vadd.f32 0.0, %v3792
        %v3794 = vpop.f32.mrb[0].mxu0
        %3795 = vmatprep.mubr.f32.mxu0 0.0
        %3796 = vmatmul.mubr.f32.gmra.mrb[0].mxu0 %v3598
        %v3797 = vpop.f32.mrb[0].mxu0
        %v3798 = vadd.f32 0.0, %v3797
        %v3799 = vpop.f32.mrb[0].mxu0
        %3800 = vmatprep.mubr.f32.mxu0 0.0
        %3801 = vmatmul.mubr.f32.gmra.mrb[0].mxu0 %v3601
        %v3802 = vpop.f32.mrb[0].mxu0
        %v3803 = vadd.f32 0.0, %v3802
        %v3804 = vpop.f32.mrb[0].mxu0
        %3805 = vmatprep.mubr.f32.mxu0 0.0
        %3806 = vmatmul.mubr.f32.gmra.mrb[0].mxu0 %v3604
        %v3807 = vpop.f32.mrb[0].mxu0
        %v3808 = vadd.f32 0.0, %v3807
        %v3809 = vpop.f32.mrb[0].mxu0
        %3810 = vmatprep.mubr.f32.mxu0 0.0
        %3811 = vmatmul.mubr.f32.gmra.mrb[0].mxu0 %v3607
        %v3812 = vpop.f32.mrb[0].mxu0
        %v3813 = vadd.f32 0.0, %v3812
        %v3814 = vpop.f32.mrb[0].mxu0
        %3815 = vmatprep.mubr.f32.mxu0 0.0
        %3816 = vmatmul.mubr.f32.gmra.mrb[0].mxu0 %v3610
        %v3817 = vpop.f32.mrb[0].mxu0
        %v3818 = vadd.f32 0.0, %v3817
        %v3819 = vpop.f32.mrb[0].mxu0
        %3820 = vmatprep.mubr.f32.mxu0 0.0
        %3821 = vmatmul.mubr.f32.gmra.mrb[0].mxu0 %v3613
        %v3822 = vpop.f32.mrb[0].mxu0
        %v3823 = vadd.f32 0.0, %v3822
        %v3824 = vpop.f32.mrb[0].mxu0
        %3825 = vmatprep.mubr.f32.mxu0 0.0
        %3826 = vmatmul.mubr.f32.gmra.mrb[0].mxu0 %v3616
        %v3827 = vpop.f32.mrb[0].mxu0
        %v3828 = vadd.f32 0.0, %v3827
        %v3829 = vpop.f32.mrb[0].mxu0
        %3830 = vmatprep.mubr.f32.mxu0 0.0
        %3831 = vmatmul.mubr.f32.gmra.mrb[0].mxu0 %v3619
        %v3832 = vpop.f32.mrb[0].mxu0
        %v3833 = vadd.f32 0.0, %v3832
        %v3834 = vpop.f32.mrb[0].mxu0
        %3835 = vmatprep.mubr.f32.mxu0 0.0
        %3836 = vmatmul.mubr.f32.gmra.mrb[0].mxu0 %v3622
        %v3837 = vpop.f32.mrb[0].mxu0
        %v3838 = vadd.f32 0.0, %v3837
        %v3839 = vpop.f32.mrb[0].mxu0
        %3840 = vmatprep.mubr.f32.mxu0 0.0
        %3841 = vmatmul.mubr.f32.gmra.mrb[0].mxu0 %v3625
        %v3842 = vpop.f32.mrb[0].mxu0
        %v3843 = vadd.f32 0.0, %v3842
        %v3844 = vpop.f32.mrb[0].mxu0
        %3845 = vmatprep.mubr.f32.mxu0 0.0
        %3846 = vmatmul.mubr.f32.gmra.mrb[0].mxu0 %v3628
        %v3847 = vpop.f32.mrb[0].mxu0
        %v3848 = vadd.f32 0.0, %v3847
        %v3849 = vpop.f32.mrb[0].mxu0
        %3850 = vmatprep.mubr.f32.mxu0 0.0
        %3851 = vmatmul.mubr.f32.gmra.mrb[0].mxu0 %v3631
        %v3852 = vpop.f32.mrb[0].mxu0
        %v3853 = vadd.f32 0.0, %v3852
        %v3854 = vpop.f32.mrb[0].mxu0
        %3855 = vmatprep.mubr.f32.mxu0 0.0
        %3856 = vmatmul.mubr.f32.gmra.mrb[0].mxu0 %v3634
        %v3857 = vpop.f32.mrb[0].mxu0
        %v3858 = vadd.f32 0.0, %v3857
        %v3859 = vpop.f32.mrb[0].mxu0
        %3860 = vdwg.mxu0
        %v3861 = vadd.f32 %v3337, %v3703
        %v3862 = vadd.f32 %v3342, %v3708
        %v3863 = vadd.f32 %v3347, %v3713
        %v3864 = vadd.f32 %v3352, %v3718
        %v3865 = vadd.f32 %v3357, %v3723
        %v3866 = vadd.f32 %v3362, %v3728
        %v3867 = vadd.f32 %v3367, %v3733
        %v3868 = vadd.f32 %v3372, %v3738
        %v3869 = vadd.f32 %v3377, %v3743
        %v3870 = vadd.f32 %v3382, %v3748
        %v3871 = vadd.f32 %v3387, %v3753
        %v3872 = vadd.f32 %v3392, %v3758
        %v3873 = vadd.f32 %v3397, %v3763
        %v3874 = vadd.f32 %v3402, %v3768
        %v3875 = vadd.f32 %v3407, %v3773
        %v3876 = vadd.f32 %v3412, %v3778
        %v3877 = vadd.f32 %v3417, %v3783
        %v3878 = vadd.f32 %v3422, %v3788
        %v3879 = vadd.f32 %v3427, %v3793
        %v3880 = vadd.f32 %v3432, %v3798
        %v3881 = vadd.f32 %v3437, %v3803
        %v3882 = vadd.f32 %v3442, %v3808
        %v3883 = vadd.f32 %v3447, %v3813
        %v3884 = vadd.f32 %v3452, %v3818
        %v3885 = vadd.f32 %v3457, %v3823
        %v3886 = vadd.f32 %v3462, %v3828
        %v3887 = vadd.f32 %v3467, %v3833
        %v3888 = vadd.f32 %v3472, %v3838
        %v3889 = vadd.f32 %v3477, %v3843
        %v3890 = vadd.f32 %v3482, %v3848
        %v3891 = vadd.f32 %v3487, %v3853
        %v3892 = vadd.f32 %v3492, %v3858
        %v3893 = vld [vmem:[%s4] sm:$0x1]
        %v3895 = vlaneseq
        %v3896 = vshrl.u32 %v3895, 7
        %v3897 = vsub.s32 0, %v3896
        %v3898 = vrot.slane %v3893, %v3897
        %v3900 = vadd.f32 %v3861, %v3898
        %v3901 = vadd.f32 %v3862, %v3898
        %v3902 = vadd.f32 %v3863, %v3898
        %v3903 = vadd.f32 %v3864, %v3898
        %v3904 = vadd.f32 %v3865, %v3898
        %v3905 = vadd.f32 %v3866, %v3898
        %v3906 = vadd.f32 %v3867, %v3898
        %v3907 = vadd.f32 %v3868, %v3898
        %v3908 = vadd.f32 %v3869, %v3898
        %v3909 = vadd.f32 %v3870, %v3898
        %v3910 = vadd.f32 %v3871, %v3898
        %v3911 = vadd.f32 %v3872, %v3898
        %v3912 = vadd.f32 %v3873, %v3898
        %v3913 = vadd.f32 %v3874, %v3898
        %v3914 = vadd.f32 %v3875, %v3898
        %v3915 = vadd.f32 %v3876, %v3898
        %v3916 = vadd.f32 %v3877, %v3898
        %v3917 = vadd.f32 %v3878, %v3898
        %v3918 = vadd.f32 %v3879, %v3898
        %v3919 = vadd.f32 %v3880, %v3898
        %v3920 = vadd.f32 %v3881, %v3898
        %v3921 = vadd.f32 %v3882, %v3898
        %v3922 = vadd.f32 %v3883, %v3898
        %v3923 = vadd.f32 %v3884, %v3898
        %v3924 = vadd.f32 %v3885, %v3898
        %v3925 = vadd.f32 %v3886, %v3898
        %v3926 = vadd.f32 %v3887, %v3898
        %v3927 = vadd.f32 %v3888, %v3898
        %v3928 = vadd.f32 %v3889, %v3898
        %v3929 = vadd.f32 %v3890, %v3898
        %v3930 = vadd.f32 %v3891, %v3898
        %v3931 = vadd.f32 %v3892, %v3898
        %v3932 = vmax.f32 %v3900, 0.0
        %v3933 = vmax.f32 %v3901, 0.0
        %v3934 = vmax.f32 %v3902, 0.0
        %v3935 = vmax.f32 %v3903, 0.0
        %v3936 = vmax.f32 %v3904, 0.0
        %v3937 = vmax.f32 %v3905, 0.0
        %v3938 = vmax.f32 %v3906, 0.0
        %v3939 = vmax.f32 %v3907, 0.0
        %v3940 = vmax.f32 %v3908, 0.0
        %v3941 = vmax.f32 %v3909, 0.0
        %v3942 = vmax.f32 %v3910, 0.0
        %v3943 = vmax.f32 %v3911, 0.0
        %v3944 = vmax.f32 %v3912, 0.0
        %v3945 = vmax.f32 %v3913, 0.0
        %v3946 = vmax.f32 %v3914, 0.0
        %v3947 = vmax.f32 %v3915, 0.0
        %v3948 = vmax.f32 %v3916, 0.0
        %v3949 = vmax.f32 %v3917, 0.0
        %v3950 = vmax.f32 %v3918, 0.0
        %v3951 = vmax.f32 %v3919, 0.0
        %v3952 = vmax.f32 %v3920, 0.0
        %v3953 = vmax.f32 %v3921, 0.0
        %v3954 = vmax.f32 %v3922, 0.0
        %v3955 = vmax.f32 %v3923, 0.0
        %v3956 = vmax.f32 %v3924, 0.0
        %v3957 = vmax.f32 %v3925, 0.0
        %v3958 = vmax.f32 %v3926, 0.0
        %v3959 = vmax.f32 %v3927, 0.0
        %v3960 = vmax.f32 %v3928, 0.0
        %v3961 = vmax.f32 %v3929, 0.0
        %v3962 = vmax.f32 %v3930, 0.0
        %v3963 = vmax.f32 %v3931, 0.0
        %s3964 = scalar_lea.vmem [#allocation4], 24
        %vm3965 = vcmask 130048
        %3966 = vst.msk [vmem:[%s3964 + $0x1] sm:$0xff] %vm3965, %v3932
        %3967 = vst.msk [vmem:[%s3964 + $0x9] sm:$0xff] %vm3965, %v3933
        %3968 = vst.msk [vmem:[%s3964 + $0x19] sm:$0xff] %vm3965, %v3934
        %3969 = vst.msk [vmem:[%s3964 + $0x21] sm:$0xff] %vm3965, %v3935
        %3970 = vst.msk [vmem:[%s3964 + $0x31] sm:$0xff] %vm3965, %v3936
        %3971 = vst.msk [vmem:[%s3964 + $0x39] sm:$0xff] %vm3965, %v3937
        %3972 = vst.msk [vmem:[%s3964 + $0x49] sm:$0xff] %vm3965, %v3938
        %3973 = vst.msk [vmem:[%s3964 + $0x51] sm:$0xff] %vm3965, %v3939
        %3974 = vst.msk [vmem:[%s3964 + $0x61] sm:$0xff] %vm3965, %v3940
        %3975 = vst.msk [vmem:[%s3964 + $0x69] sm:$0xff] %vm3965, %v3941
        %3976 = vst.msk [vmem:[%s3964 + $0x79] sm:$0xff] %vm3965, %v3942
        %3977 = vst.msk [vmem:[%s3964 + $0x81] sm:$0xff] %vm3965, %v3943
        %3978 = vst.msk [vmem:[%s3964 + $0x91] sm:$0xff] %vm3965, %v3944
        %3979 = vst.msk [vmem:[%s3964 + $0x99] sm:$0xff] %vm3965, %v3945
        %3980 = vst.msk [vmem:[%s3964 + $0xa9] sm:$0xff] %vm3965, %v3946
        %3981 = vst.msk [vmem:[%s3964 + $0xb1] sm:$0xff] %vm3965, %v3947
        %3982 = vst.msk [vmem:[%s3964 + $0xc1] sm:$0xff] %vm3965, %v3948
        %3983 = vst.msk [vmem:[%s3964 + $0xc9] sm:$0xff] %vm3965, %v3949
        %3984 = vst.msk [vmem:[%s3964 + $0xd9] sm:$0xff] %vm3965, %v3950
        %3985 = vst.msk [vmem:[%s3964 + $0xe1] sm:$0xff] %vm3965, %v3951
        %3986 = vst.msk [vmem:[%s3964 + $0xf1] sm:$0xff] %vm3965, %v3952
        %3987 = vst.msk [vmem:[%s3964 + $0xf9] sm:$0xff] %vm3965, %v3953
        %3988 = vst.msk [vmem:[%s3964 + $0x109] sm:$0xff] %vm3965, %v3954
        %3989 = vst.msk [vmem:[%s3964 + $0x111] sm:$0xff] %vm3965, %v3955
        %3990 = vst.msk [vmem:[%s3964 + $0x121] sm:$0xff] %vm3965, %v3956
        %3991 = vst.msk [vmem:[%s3964 + $0x129] sm:$0xff] %vm3965, %v3957
        %3992 = vst.msk [vmem:[%s3964 + $0x139] sm:$0xff] %vm3965, %v3958
        %3993 = vst.msk [vmem:[%s3964 + $0x141] sm:$0xff] %vm3965, %v3959
        %3994 = vst.msk [vmem:[%s3964 + $0x151] sm:$0xff] %vm3965, %v3960
        %3995 = vst.msk [vmem:[%s3964 + $0x159] sm:$0xff] %vm3965, %v3961
        %3996 = vst.msk [vmem:[%s3964 + $0x169] sm:$0xff] %vm3965, %v3962
        %3997 = vst.msk [vmem:[%s3964 + $0x171] sm:$0xff] %vm3965, %v3963
        %3998 = vst.msk [vmem:[#allocation4 + $0x1] sm:$0xff] %vm3965, %v3934
        %3999 = vst.msk [vmem:[#allocation4 + $0x9] sm:$0xff] %vm3965, %v3935
        %s4000 = scalar_lea.vmem [#allocation4], 408
        %4001 = vst.msk [vmem:[%s4000 + $0x1] sm:$0xff] %vm3965, %v3960
        %4002 = vst.msk [vmem:[%s4000 + $0x9] sm:$0xff] %vm3965, %v3961
        %v4003 = vld [vmem:[#allocation4 + $0x2] sm:$0x1]
        %v4004 = vld [vmem:[#allocation4 + $0x1a] sm:$0x1]
        %v4005 = vld [vmem:[#allocation4 + $0x32] sm:$0x1]
        %v4006 = vld [vmem:[#allocation4 + $0x4a] sm:$0x1]
        %v4007 = vld [vmem:[#allocation4 + $0x62] sm:$0x1]
        %v4008 = vld [vmem:[#allocation4 + $0x7a] sm:$0x1]
        %v4009 = vld [vmem:[#allocation4 + $0x92] sm:$0x1]
        %v4010 = vld [vmem:[#allocation4 + $0xaa] sm:$0x1]
        %v4011 = vld [vmem:[#allocation4 + $0xc2] sm:$0x1]
        %v4012 = vld [vmem:[#allocation4 + $0xda] sm:$0x1]
        %v4013 = vld [vmem:[#allocation4 + $0xf2] sm:$0x1]
        %v4014 = vld [vmem:[#allocation4 + $0x10a] sm:$0x1]
        %v4015 = vld [vmem:[#allocation4 + $0x122] sm:$0x1]
        %v4016 = vld [vmem:[#allocation4 + $0x13a] sm:$0x1]
        %v4017 = vld [vmem:[#allocation4 + $0x152] sm:$0x1]
        %v4018 = vld [vmem:[#allocation4 + $0x16a] sm:$0x1]
        %v4019 = vld [vmem:[#allocation4 + $0x182] sm:$0x1]
        %v4020 = vld [vmem:[#allocation4 + $0x19a] sm:$0x1]
        %vm4021 = vcmask 122880
        %4022 = vst.msk [vmem:[#allocation4] sm:$0x1] %vm4021, %v4003
        %4023 = vst.msk [vmem:[#allocation4 + $0x18] sm:$0x1] %vm4021, %v4004
        %4024 = vst.msk [vmem:[#allocation4 + $0x30] sm:$0x1] %vm4021, %v4005
        %4025 = vst.msk [vmem:[#allocation4 + $0x48] sm:$0x1] %vm4021, %v4006
        %4026 = vst.msk [vmem:[#allocation4 + $0x60] sm:$0x1] %vm4021, %v4007
        %4027 = vst.msk [vmem:[#allocation4 + $0x78] sm:$0x1] %vm4021, %v4008
        %4028 = vst.msk [vmem:[#allocation4 + $0x90] sm:$0x1] %vm4021, %v4009
        %4029 = vst.msk [vmem:[#allocation4 + $0xa8] sm:$0x1] %vm4021, %v4010
        %4030 = vst.msk [vmem:[#allocation4 + $0xc0] sm:$0x1] %vm4021, %v4011
        %4031 = vst.msk [vmem:[#allocation4 + $0xd8] sm:$0x1] %vm4021, %v4012
        %4032 = vst.msk [vmem:[#allocation4 + $0xf0] sm:$0x1] %vm4021, %v4013
        %4033 = vst.msk [vmem:[#allocation4 + $0x108] sm:$0x1] %vm4021, %v4014
        %4034 = vst.msk [vmem:[#allocation4 + $0x120] sm:$0x1] %vm4021, %v4015
        %4035 = vst.msk [vmem:[#allocation4 + $0x138] sm:$0x1] %vm4021, %v4016
        %4036 = vst.msk [vmem:[#allocation4 + $0x150] sm:$0x1] %vm4021, %v4017
        %4037 = vst.msk [vmem:[#allocation4 + $0x168] sm:$0x1] %vm4021, %v4018
        %4038 = vst.msk [vmem:[#allocation4 + $0x180] sm:$0x1] %vm4021, %v4019
        %4039 = vst.msk [vmem:[#allocation4 + $0x198] sm:$0x1] %vm4021, %v4020
        %v4040 = vld [vmem:[#allocation4 + $0xf] sm:$0x1]
        %v4041 = vld [vmem:[#allocation4 + $0x27] sm:$0x1]
        %v4042 = vld [vmem:[#allocation4 + $0x3f] sm:$0x1]
        %v4043 = vld [vmem:[#allocation4 + $0x57] sm:$0x1]
        %v4044 = vld [vmem:[#allocation4 + $0x6f] sm:$0x1]
        %v4045 = vld [vmem:[#allocation4 + $0x87] sm:$0x1]
        %v4046 = vld [vmem:[#allocation4 + $0x9f] sm:$0x1]
        %v4047 = vld [vmem:[#allocation4 + $0xb7] sm:$0x1]
        %v4048 = vld [vmem:[#allocation4 + $0xcf] sm:$0x1]
        %v4049 = vld [vmem:[#allocation4 + $0xe7] sm:$0x1]
        %v4050 = vld [vmem:[#allocation4 + $0xff] sm:$0x1]
        %v4051 = vld [vmem:[#allocation4 + $0x117] sm:$0x1]
        %v4052 = vld [vmem:[#allocation4 + $0x12f] sm:$0x1]
        %v4053 = vld [vmem:[#allocation4 + $0x147] sm:$0x1]
        %v4054 = vld [vmem:[#allocation4 + $0x15f] sm:$0x1]
        %v4055 = vld [vmem:[#allocation4 + $0x177] sm:$0x1]
        %v4056 = vld [vmem:[#allocation4 + $0x18f] sm:$0x1]
        %v4057 = vld [vmem:[#allocation4 + $0x1a7] sm:$0x1]
        %4058 = vst.msk [vmem:[#allocation4 + $0x11] sm:$0x1] %vm4021, %v4040
        %4059 = vst.msk [vmem:[#allocation4 + $0x29] sm:$0x1] %vm4021, %v4041
        %4060 = vst.msk [vmem:[#allocation4 + $0x41] sm:$0x1] %vm4021, %v4042
        %4061 = vst.msk [vmem:[#allocation4 + $0x59] sm:$0x1] %vm4021, %v4043
        %4062 = vst.msk [vmem:[#allocation4 + $0x71] sm:$0x1] %vm4021, %v4044
        %4063 = vst.msk [vmem:[#allocation4 + $0x89] sm:$0x1] %vm4021, %v4045
        %4064 = vst.msk [vmem:[#allocation4 + $0xa1] sm:$0x1] %vm4021, %v4046
        %4065 = vst.msk [vmem:[#allocation4 + $0xb9] sm:$0x1] %vm4021, %v4047
        %4066 = vst.msk [vmem:[#allocation4 + $0xd1] sm:$0x1] %vm4021, %v4048
        %4067 = vst.msk [vmem:[#allocation4 + $0xe9] sm:$0x1] %vm4021, %v4049
        %4068 = vst.msk [vmem:[#allocation4 + $0x101] sm:$0x1] %vm4021, %v4050
        %4069 = vst.msk [vmem:[#allocation4 + $0x119] sm:$0x1] %vm4021, %v4051
        %4070 = vst.msk [vmem:[#allocation4 + $0x131] sm:$0x1] %vm4021, %v4052
        %4071 = vst.msk [vmem:[#allocation4 + $0x149] sm:$0x1] %vm4021, %v4053
        %4072 = vst.msk [vmem:[#allocation4 + $0x161] sm:$0x1] %vm4021, %v4054
        %4073 = vst.msk [vmem:[#allocation4 + $0x179] sm:$0x1] %vm4021, %v4055
        %4074 = vst.msk [vmem:[#allocation4 + $0x191] sm:$0x1] %vm4021, %v4056
        %4075 = vst.msk [vmem:[#allocation4 + $0x1a9] sm:$0x1] %vm4021, %v4057
        %v4076 = vld [vmem:[#allocation4] sm:$0xff]
        %v4077 = vld [vmem:[#allocation4 + $0x8] sm:$0xff]
        %v4078 = vld [vmem:[#allocation4 + $0x18] sm:$0xff]
        %v4079 = vld [vmem:[#allocation4 + $0x20] sm:$0xff]
        %v4080 = vld [vmem:[#allocation4 + $0x30] sm:$0xff]
        %v4081 = vld [vmem:[#allocation4 + $0x38] sm:$0xff]
        %v4082 = vld [vmem:[#allocation4 + $0x48] sm:$0xff]
        %v4083 = vld [vmem:[#allocation4 + $0x50] sm:$0xff]
        %v4084 = vld [vmem:[#allocation4 + $0x60] sm:$0xff]
        %v4085 = vld [vmem:[#allocation4 + $0x68] sm:$0xff]
        %v4086 = vld [vmem:[#allocation4 + $0x78] sm:$0xff]
        %v4087 = vld [vmem:[#allocation4 + $0x80] sm:$0xff]
        %v4088 = vld [vmem:[#allocation4 + $0x90] sm:$0xff]
        %v4089 = vld [vmem:[#allocation4 + $0x98] sm:$0xff]
        %v4090 = vld [vmem:[#allocation4 + $0xa8] sm:$0xff]
        %v4091 = vld [vmem:[#allocation4 + $0xb0] sm:$0xff]
        %v4092 = vld [vmem:[#allocation4 + $0xc0] sm:$0xff]
        %v4093 = vld [vmem:[#allocation4 + $0xc8] sm:$0xff]
        %v4094 = vld [vmem:[#allocation4 + $0xd8] sm:$0xff]
        %v4095 = vld [vmem:[#allocation4 + $0xe0] sm:$0xff]
        %v4096 = vld [vmem:[#allocation4 + $0xf0] sm:$0xff]
        %v4097 = vld [vmem:[#allocation4 + $0xf8] sm:$0xff]
        %v4098 = vld [vmem:[#allocation4 + $0x108] sm:$0xff]
        %v4099 = vld [vmem:[#allocation4 + $0x110] sm:$0xff]
        %v4100 = vld [vmem:[#allocation4 + $0x120] sm:$0xff]
        %v4101 = vld [vmem:[#allocation4 + $0x128] sm:$0xff]
        %v4102 = vld [vmem:[#allocation4 + $0x138] sm:$0xff]
        %v4103 = vld [vmem:[#allocation4 + $0x140] sm:$0xff]
        %v4104 = vld [vmem:[#allocation4 + $0x150] sm:$0xff]
        %v4105 = vld [vmem:[#allocation4 + $0x158] sm:$0xff]
        %v4106 = vld [vmem:[#allocation4 + $0x168] sm:$0xff]
        %v4107 = vld [vmem:[#allocation4 + $0x170] sm:$0xff]
        %v4108 = vld [vmem:[#allocation4 + $0x180] sm:$0xff]
        %v4109 = vld [vmem:[#allocation4 + $0x188] sm:$0xff]
        %v4110 = vld [vmem:[#allocation4 + $0x198] sm:$0xff]
        %v4111 = vld [vmem:[#allocation4 + $0x1a0] sm:$0xff]
        %4112 = vst.msk [vmem:[#allocation5] sm:$0xff] %vm3965, %v4076
        %4113 = vst.msk [vmem:[#allocation5 + $0x8] sm:$0xff] %vm3965, %v4077
        %4114 = vst.msk [vmem:[#allocation5 + $0x10] sm:$0xff] %vm3965, %v4078
        %4115 = vst.msk [vmem:[#allocation5 + $0x18] sm:$0xff] %vm3965, %v4079
        %4116 = vst.msk [vmem:[#allocation5 + $0x20] sm:$0xff] %vm3965, %v4080
        %4117 = vst.msk [vmem:[#allocation5 + $0x28] sm:$0xff] %vm3965, %v4081
        %4118 = vst.msk [vmem:[#allocation5 + $0x30] sm:$0xff] %vm3965, %v4082
        %4119 = vst.msk [vmem:[#allocation5 + $0x38] sm:$0xff] %vm3965, %v4083
        %4120 = vst.msk [vmem:[#allocation5 + $0x40] sm:$0xff] %vm3965, %v4084
        %4121 = vst.msk [vmem:[#allocation5 + $0x48] sm:$0xff] %vm3965, %v4085
        %4122 = vst.msk [vmem:[#allocation5 + $0x50] sm:$0xff] %vm3965, %v4086
        %4123 = vst.msk [vmem:[#allocation5 + $0x58] sm:$0xff] %vm3965, %v4087
        %4124 = vst.msk [vmem:[#allocation5 + $0x60] sm:$0xff] %vm3965, %v4088
        %4125 = vst.msk [vmem:[#allocation5 + $0x68] sm:$0xff] %vm3965, %v4089
        %4126 = vst.msk [vmem:[#allocation5 + $0x70] sm:$0xff] %vm3965, %v4090
        %4127 = vst.msk [vmem:[#allocation5 + $0x78] sm:$0xff] %vm3965, %v4091
        %4128 = vst.msk [vmem:[#allocation5 + $0x80] sm:$0xff] %vm3965, %v4092
        %4129 = vst.msk [vmem:[#allocation5 + $0x88] sm:$0xff] %vm3965, %v4093
        %4130 = vst.msk [vmem:[#allocation5 + $0x90] sm:$0xff] %vm3965, %v4094
        %4131 = vst.msk [vmem:[#allocation5 + $0x98] sm:$0xff] %vm3965, %v4095
        %4132 = vst.msk [vmem:[#allocation5 + $0xa0] sm:$0xff] %vm3965, %v4096
        %4133 = vst.msk [vmem:[#allocation5 + $0xa8] sm:$0xff] %vm3965, %v4097
        %4134 = vst.msk [vmem:[#allocation5 + $0xb0] sm:$0xff] %vm3965, %v4098
        %4135 = vst.msk [vmem:[#allocation5 + $0xb8] sm:$0xff] %vm3965, %v4099
        %4136 = vst.msk [vmem:[#allocation5 + $0xc0] sm:$0xff] %vm3965, %v4100
        %4137 = vst.msk [vmem:[#allocation5 + $0xc8] sm:$0xff] %vm3965, %v4101
        %4138 = vst.msk [vmem:[#allocation5 + $0xd0] sm:$0xff] %vm3965, %v4102
        %4139 = vst.msk [vmem:[#allocation5 + $0xd8] sm:$0xff] %vm3965, %v4103
        %4140 = vst.msk [vmem:[#allocation5 + $0xe0] sm:$0xff] %vm3965, %v4104
        %4141 = vst.msk [vmem:[#allocation5 + $0xe8] sm:$0xff] %vm3965, %v4105
        %4142 = vst.msk [vmem:[#allocation5 + $0xf0] sm:$0xff] %vm3965, %v4106
        %4143 = vst.msk [vmem:[#allocation5 + $0xf8] sm:$0xff] %vm3965, %v4107
        %4144 = vst.msk [vmem:[#allocation5 + $0x100] sm:$0xff] %vm3965, %v4108
        %4145 = vst.msk [vmem:[#allocation5 + $0x108] sm:$0xff] %vm3965, %v4109
        %4146 = vst.msk [vmem:[#allocation5 + $0x110] sm:$0xff] %vm3965, %v4110
        %4147 = vst.msk [vmem:[#allocation5 + $0x118] sm:$0xff] %vm3965, %v4111
        %v4148 = vld [vmem:[#allocation4 + $0x1] sm:$0xff]
        %v4149 = vld [vmem:[#allocation4 + $0x9] sm:$0xff]
        %v4150 = vld [vmem:[#allocation4 + $0x19] sm:$0xff]
        %v4151 = vld [vmem:[#allocation4 + $0x21] sm:$0xff]
        %v4152 = vld [vmem:[#allocation4 + $0x31] sm:$0xff]
        %v4153 = vld [vmem:[#allocation4 + $0x39] sm:$0xff]
        %v4154 = vld [vmem:[#allocation4 + $0x49] sm:$0xff]
        %v4155 = vld [vmem:[#allocation4 + $0x51] sm:$0xff]
        %v4156 = vld [vmem:[#allocation4 + $0x61] sm:$0xff]
        %v4157 = vld [vmem:[#allocation4 + $0x69] sm:$0xff]
        %v4158 = vld [vmem:[#allocation4 + $0x79] sm:$0xff]
        %v4159 = vld [vmem:[#allocation4 + $0x81] sm:$0xff]
        %v4160 = vld [vmem:[#allocation4 + $0x91] sm:$0xff]
        %v4161 = vld [vmem:[#allocation4 + $0x99] sm:$0xff]
        %v4162 = vld [vmem:[#allocation4 + $0xa9] sm:$0xff]
        %v4163 = vld [vmem:[#allocation4 + $0xb1] sm:$0xff]
        %v4164 = vld [vmem:[#allocation4 + $0xc1] sm:$0xff]
        %v4165 = vld [vmem:[#allocation4 + $0xc9] sm:$0xff]
        %v4166 = vld [vmem:[#allocation4 + $0xd9] sm:$0xff]
        %v4167 = vld [vmem:[#allocation4 + $0xe1] sm:$0xff]
        %v4168 = vld [vmem:[#allocation4 + $0xf1] sm:$0xff]
        %v4169 = vld [vmem:[#allocation4 + $0xf9] sm:$0xff]
        %v4170 = vld [vmem:[#allocation4 + $0x109] sm:$0xff]
        %v4171 = vld [vmem:[#allocation4 + $0x111] sm:$0xff]
        %v4172 = vld [vmem:[#allocation4 + $0x121] sm:$0xff]
        %v4173 = vld [vmem:[#allocation4 + $0x129] sm:$0xff]
        %v4174 = vld [vmem:[#allocation4 + $0x139] sm:$0xff]
        %v4175 = vld [vmem:[#allocation4 + $0x141] sm:$0xff]
        %v4176 = vld [vmem:[#allocation4 + $0x151] sm:$0xff]
        %v4177 = vld [vmem:[#allocation4 + $0x159] sm:$0xff]
        %v4178 = vld [vmem:[#allocation4 + $0x169] sm:$0xff]
        %v4179 = vld [vmem:[#allocation4 + $0x171] sm:$0xff]
        %v4180 = vld [vmem:[#allocation4 + $0x181] sm:$0xff]
        %v4181 = vld [vmem:[#allocation4 + $0x189] sm:$0xff]
        %v4182 = vld [vmem:[#allocation4 + $0x199] sm:$0xff]
        %v4183 = vld [vmem:[#allocation4 + $0x1a1] sm:$0xff]
        %4220 = vrot.lane.b32.xlu0 %v4148, 16
        %v4221 = vpop.permute.xlu0 %4220
        %4222 = vrot.lane.b32.xlu0 %v4149, 16
        %v4223 = vpop.permute.xlu0 %4222
        %4224 = vrot.lane.b32.xlu0 %v4150, 16
        %v4225 = vpop.permute.xlu0 %4224
        %4226 = vrot.lane.b32.xlu0 %v4151, 16
        %v4227 = vpop.permute.xlu0 %4226
        %4228 = vrot.lane.b32.xlu0 %v4152, 16
        %v4229 = vpop.permute.xlu0 %4228
        %4230 = vrot.lane.b32.xlu0 %v4153, 16
        %v4231 = vpop.permute.xlu0 %4230
        %4232 = vrot.lane.b32.xlu0 %v4154, 16
        %v4233 = vpop.permute.xlu0 %4232
        %4234 = vrot.lane.b32.xlu0 %v4155, 16
        %v4235 = vpop.permute.xlu0 %4234
        %4236 = vrot.lane.b32.xlu0 %v4156, 16
        %v4237 = vpop.permute.xlu0 %4236
        %4238 = vrot.lane.b32.xlu0 %v4157, 16
        %v4239 = vpop.permute.xlu0 %4238
        %4240 = vrot.lane.b32.xlu0 %v4158, 16
        %v4241 = vpop.permute.xlu0 %4240
        %4242 = vrot.lane.b32.xlu0 %v4159, 16
        %v4243 = vpop.permute.xlu0 %4242
        %4244 = vrot.lane.b32.xlu0 %v4160, 16
        %v4245 = vpop.permute.xlu0 %4244
        %4246 = vrot.lane.b32.xlu0 %v4161, 16
        %v4247 = vpop.permute.xlu0 %4246
        %4248 = vrot.lane.b32.xlu0 %v4162, 16
        %v4249 = vpop.permute.xlu0 %4248
        %4250 = vrot.lane.b32.xlu0 %v4163, 16
        %v4251 = vpop.permute.xlu0 %4250
        %4252 = vrot.lane.b32.xlu0 %v4164, 16
        %v4253 = vpop.permute.xlu0 %4252
        %4254 = vrot.lane.b32.xlu0 %v4165, 16
        %v4255 = vpop.permute.xlu0 %4254
        %4256 = vrot.lane.b32.xlu0 %v4166, 16
        %v4257 = vpop.permute.xlu0 %4256
        %4258 = vrot.lane.b32.xlu0 %v4167, 16
        %v4259 = vpop.permute.xlu0 %4258
        %4260 = vrot.lane.b32.xlu0 %v4168, 16
        %v4261 = vpop.permute.xlu0 %4260
        %4262 = vrot.lane.b32.xlu0 %v4169, 16
        %v4263 = vpop.permute.xlu0 %4262
        %4264 = vrot.lane.b32.xlu0 %v4170, 16
        %v4265 = vpop.permute.xlu0 %4264
        %4266 = vrot.lane.b32.xlu0 %v4171, 16
        %v4267 = vpop.permute.xlu0 %4266
        %4268 = vrot.lane.b32.xlu0 %v4172, 16
        %v4269 = vpop.permute.xlu0 %4268
        %4270 = vrot.lane.b32.xlu0 %v4173, 16
        %v4271 = vpop.permute.xlu0 %4270
        %4272 = vrot.lane.b32.xlu0 %v4174, 16
        %v4273 = vpop.permute.xlu0 %4272
        %4274 = vrot.lane.b32.xlu0 %v4175, 16
        %v4275 = vpop.permute.xlu0 %4274
        %4276 = vrot.lane.b32.xlu0 %v4176, 16
        %v4277 = vpop.permute.xlu0 %4276
        %4278 = vrot.lane.b32.xlu0 %v4177, 16
        %v4279 = vpop.permute.xlu0 %4278
        %4280 = vrot.lane.b32.xlu0 %v4178, 16
        %v4281 = vpop.permute.xlu0 %4280
        %4282 = vrot.lane.b32.xlu0 %v4179, 16
        %v4283 = vpop.permute.xlu0 %4282
        %4284 = vrot.lane.b32.xlu0 %v4180, 16
        %v4285 = vpop.permute.xlu0 %4284
        %4286 = vrot.lane.b32.xlu0 %v4181, 16
        %v4287 = vpop.permute.xlu0 %4286
        %4288 = vrot.lane.b32.xlu0 %v4182, 16
        %v4289 = vpop.permute.xlu0 %4288
        %4290 = vrot.lane.b32.xlu0 %v4183, 16
        %v4291 = vpop.permute.xlu0 %4290
        %vm4328 = vcmask 261248
        %4329 = vst.msk [vmem:[#allocation5] sm:$0xff] %vm4328, %v4221
        %4330 = vst.msk [vmem:[#allocation5 + $0x8] sm:$0xff] %vm4328, %v4223
        %4331 = vst.msk [vmem:[#allocation5 + $0x10] sm:$0xff] %vm4328, %v4225
        %4332 = vst.msk [vmem:[#allocation5 + $0x18] sm:$0xff] %vm4328, %v4227
        %4333 = vst.msk [vmem:[#allocation5 + $0x20] sm:$0xff] %vm4328, %v4229
        %4334 = vst.msk [vmem:[#allocation5 + $0x28] sm:$0xff] %vm4328, %v4231
        %4335 = vst.msk [vmem:[#allocation5 + $0x30] sm:$0xff] %vm4328, %v4233
        %4336 = vst.msk [vmem:[#allocation5 + $0x38] sm:$0xff] %vm4328, %v4235
        %4337 = vst.msk [vmem:[#allocation5 + $0x40] sm:$0xff] %vm4328, %v4237
        %4338 = vst.msk [vmem:[#allocation5 + $0x48] sm:$0xff] %vm4328, %v4239
        %4339 = vst.msk [vmem:[#allocation5 + $0x50] sm:$0xff] %vm4328, %v4241
        %4340 = vst.msk [vmem:[#allocation5 + $0x58] sm:$0xff] %vm4328, %v4243
        %4341 = vst.msk [vmem:[#allocation5 + $0x60] sm:$0xff] %vm4328, %v4245
        %4342 = vst.msk [vmem:[#allocation5 + $0x68] sm:$0xff] %vm4328, %v4247
        %4343 = vst.msk [vmem:[#allocation5 + $0x70] sm:$0xff] %vm4328, %v4249
        %4344 = vst.msk [vmem:[#allocation5 + $0x78] sm:$0xff] %vm4328, %v4251
        %4345 = vst.msk [vmem:[#allocation5 + $0x80] sm:$0xff] %vm4328, %v4253
        %4346 = vst.msk [vmem:[#allocation5 + $0x88] sm:$0xff] %vm4328, %v4255
        %4347 = vst.msk [vmem:[#allocation5 + $0x90] sm:$0xff] %vm4328, %v4257
        %4348 = vst.msk [vmem:[#allocation5 + $0x98] sm:$0xff] %vm4328, %v4259
        %4349 = vst.msk [vmem:[#allocation5 + $0xa0] sm:$0xff] %vm4328, %v4261
        %4350 = vst.msk [vmem:[#allocation5 + $0xa8] sm:$0xff] %vm4328, %v4263
        %4351 = vst.msk [vmem:[#allocation5 + $0xb0] sm:$0xff] %vm4328, %v4265
        %4352 = vst.msk [vmem:[#allocation5 + $0xb8] sm:$0xff] %vm4328, %v4267
        %4353 = vst.msk [vmem:[#allocation5 + $0xc0] sm:$0xff] %vm4328, %v4269
        %4354 = vst.msk [vmem:[#allocation5 + $0xc8] sm:$0xff] %vm4328, %v4271
        %4355 = vst.msk [vmem:[#allocation5 + $0xd0] sm:$0xff] %vm4328, %v4273
        %4356 = vst.msk [vmem:[#allocation5 + $0xd8] sm:$0xff] %vm4328, %v4275
        %4357 = vst.msk [vmem:[#allocation5 + $0xe0] sm:$0xff] %vm4328, %v4277
        %4358 = vst.msk [vmem:[#allocation5 + $0xe8] sm:$0xff] %vm4328, %v4279
        %4359 = vst.msk [vmem:[#allocation5 + $0xf0] sm:$0xff] %vm4328, %v4281
        %4360 = vst.msk [vmem:[#allocation5 + $0xf8] sm:$0xff] %vm4328, %v4283
        %4361 = vst.msk [vmem:[#allocation5 + $0x100] sm:$0xff] %vm4328, %v4285
        %4362 = vst.msk [vmem:[#allocation5 + $0x108] sm:$0xff] %vm4328, %v4287
        %4363 = vst.msk [vmem:[#allocation5 + $0x110] sm:$0xff] %vm4328, %v4289
        %4364 = vst.msk [vmem:[#allocation5 + $0x118] sm:$0xff] %vm4328, %v4291
        %v4365 = vld [vmem:[#allocation4 + $0x2] sm:$0xff]
        %v4366 = vld [vmem:[#allocation4 + $0xa] sm:$0xff]
        %v4367 = vld [vmem:[#allocation4 + $0x1a] sm:$0xff]
        %v4368 = vld [vmem:[#allocation4 + $0x22] sm:$0xff]
        %v4369 = vld [vmem:[#allocation4 + $0x32] sm:$0xff]
        %v4370 = vld [vmem:[#allocation4 + $0x3a] sm:$0xff]
        %v4371 = vld [vmem:[#allocation4 + $0x4a] sm:$0xff]
        %v4372 = vld [vmem:[#allocation4 + $0x52] sm:$0xff]
        %v4373 = vld [vmem:[#allocation4 + $0x62] sm:$0xff]
        %v4374 = vld [vmem:[#allocation4 + $0x6a] sm:$0xff]
        %v4375 = vld [vmem:[#allocation4 + $0x7a] sm:$0xff]
        %v4376 = vld [vmem:[#allocation4 + $0x82] sm:$0xff]
        %v4377 = vld [vmem:[#allocation4 + $0x92] sm:$0xff]
        %v4378 = vld [vmem:[#allocation4 + $0x9a] sm:$0xff]
        %v4379 = vld [vmem:[#allocation4 + $0xaa] sm:$0xff]
        %v4380 = vld [vmem:[#allocation4 + $0xb2] sm:$0xff]
        %v4381 = vld [vmem:[#allocation4 + $0xc2] sm:$0xff]
        %v4382 = vld [vmem:[#allocation4 + $0xca] sm:$0xff]
        %v4383 = vld [vmem:[#allocation4 + $0xda] sm:$0xff]
        %v4384 = vld [vmem:[#allocation4 + $0xe2] sm:$0xff]
        %v4385 = vld [vmem:[#allocation4 + $0xf2] sm:$0xff]
        %v4386 = vld [vmem:[#allocation4 + $0xfa] sm:$0xff]
        %v4387 = vld [vmem:[#allocation4 + $0x10a] sm:$0xff]
        %v4388 = vld [vmem:[#allocation4 + $0x112] sm:$0xff]
        %v4389 = vld [vmem:[#allocation4 + $0x122] sm:$0xff]
        %v4390 = vld [vmem:[#allocation4 + $0x12a] sm:$0xff]
        %v4391 = vld [vmem:[#allocation4 + $0x13a] sm:$0xff]
        %v4392 = vld [vmem:[#allocation4 + $0x142] sm:$0xff]
        %v4393 = vld [vmem:[#allocation4 + $0x152] sm:$0xff]
        %v4394 = vld [vmem:[#allocation4 + $0x15a] sm:$0xff]
        %v4395 = vld [vmem:[#allocation4 + $0x16a] sm:$0xff]
        %v4396 = vld [vmem:[#allocation4 + $0x172] sm:$0xff]
        %v4397 = vld [vmem:[#allocation4 + $0x182] sm:$0xff]
        %v4398 = vld [vmem:[#allocation4 + $0x18a] sm:$0xff]
        %v4399 = vld [vmem:[#allocation4 + $0x19a] sm:$0xff]
        %v4400 = vld [vmem:[#allocation4 + $0x1a2] sm:$0xff]
        %4437 = vrot.lane.b32.xlu0 %v4365, 32
        %v4438 = vpop.permute.xlu0 %4437
        %4439 = vrot.lane.b32.xlu0 %v4366, 32
        %v4440 = vpop.permute.xlu0 %4439
        %4441 = vrot.lane.b32.xlu0 %v4367, 32
        %v4442 = vpop.permute.xlu0 %4441
        %4443 = vrot.lane.b32.xlu0 %v4368, 32
        %v4444 = vpop.permute.xlu0 %4443
        %4445 = vrot.lane.b32.xlu0 %v4369, 32
        %v4446 = vpop.permute.xlu0 %4445
        %4447 = vrot.lane.b32.xlu0 %v4370, 32
        %v4448 = vpop.permute.xlu0 %4447
        %4449 = vrot.lane.b32.xlu0 %v4371, 32
        %v4450 = vpop.permute.xlu0 %4449
        %4451 = vrot.lane.b32.xlu0 %v4372, 32
        %v4452 = vpop.permute.xlu0 %4451
        %4453 = vrot.lane.b32.xlu0 %v4373, 32
        %v4454 = vpop.permute.xlu0 %4453
        %4455 = vrot.lane.b32.xlu0 %v4374, 32
        %v4456 = vpop.permute.xlu0 %4455
        %4457 = vrot.lane.b32.xlu0 %v4375, 32
        %v4458 = vpop.permute.xlu0 %4457
        %4459 = vrot.lane.b32.xlu0 %v4376, 32
        %v4460 = vpop.permute.xlu0 %4459
        %4461 = vrot.lane.b32.xlu0 %v4377, 32
        %v4462 = vpop.permute.xlu0 %4461
        %4463 = vrot.lane.b32.xlu0 %v4378, 32
        %v4464 = vpop.permute.xlu0 %4463
        %4465 = vrot.lane.b32.xlu0 %v4379, 32
        %v4466 = vpop.permute.xlu0 %4465
        %4467 = vrot.lane.b32.xlu0 %v4380, 32
        %v4468 = vpop.permute.xlu0 %4467
        %4469 = vrot.lane.b32.xlu0 %v4381, 32
        %v4470 = vpop.permute.xlu0 %4469
        %4471 = vrot.lane.b32.xlu0 %v4382, 32
        %v4472 = vpop.permute.xlu0 %4471
        %4473 = vrot.lane.b32.xlu0 %v4383, 32
        %v4474 = vpop.permute.xlu0 %4473
        %4475 = vrot.lane.b32.xlu0 %v4384, 32
        %v4476 = vpop.permute.xlu0 %4475
        %4477 = vrot.lane.b32.xlu0 %v4385, 32
        %v4478 = vpop.permute.xlu0 %4477
        %4479 = vrot.lane.b32.xlu0 %v4386, 32
        %v4480 = vpop.permute.xlu0 %4479
        %4481 = vrot.lane.b32.xlu0 %v4387, 32
        %v4482 = vpop.permute.xlu0 %4481
        %4483 = vrot.lane.b32.xlu0 %v4388, 32
        %v4484 = vpop.permute.xlu0 %4483
        %4485 = vrot.lane.b32.xlu0 %v4389, 32
        %v4486 = vpop.permute.xlu0 %4485
        %4487 = vrot.lane.b32.xlu0 %v4390, 32
        %v4488 = vpop.permute.xlu0 %4487
        %4489 = vrot.lane.b32.xlu0 %v4391, 32
        %v4490 = vpop.permute.xlu0 %4489
        %4491 = vrot.lane.b32.xlu0 %v4392, 32
        %v4492 = vpop.permute.xlu0 %4491
        %4493 = vrot.lane.b32.xlu0 %v4393, 32
        %v4494 = vpop.permute.xlu0 %4493
        %4495 = vrot.lane.b32.xlu0 %v4394, 32
        %v4496 = vpop.permute.xlu0 %4495
        %4497 = vrot.lane.b32.xlu0 %v4395, 32
        %v4498 = vpop.permute.xlu0 %4497
        %4499 = vrot.lane.b32.xlu0 %v4396, 32
        %v4500 = vpop.permute.xlu0 %4499
        %4501 = vrot.lane.b32.xlu0 %v4397, 32
        %v4502 = vpop.permute.xlu0 %4501
        %4503 = vrot.lane.b32.xlu0 %v4398, 32
        %v4504 = vpop.permute.xlu0 %4503
        %4505 = vrot.lane.b32.xlu0 %v4399, 32
        %v4506 = vpop.permute.xlu0 %4505
        %4507 = vrot.lane.b32.xlu0 %v4400, 32
        %v4508 = vpop.permute.xlu0 %4507
        %vm4545 = vcmask 392448
        %4546 = vst.msk [vmem:[#allocation5] sm:$0xff] %vm4545, %v4438
        %4547 = vst.msk [vmem:[#allocation5 + $0x8] sm:$0xff] %vm4545, %v4440
        %4548 = vst.msk [vmem:[#allocation5 + $0x10] sm:$0xff] %vm4545, %v4442
        %4549 = vst.msk [vmem:[#allocation5 + $0x18] sm:$0xff] %vm4545, %v4444
        %4550 = vst.msk [vmem:[#allocation5 + $0x20] sm:$0xff] %vm4545, %v4446
        %4551 = vst.msk [vmem:[#allocation5 + $0x28] sm:$0xff] %vm4545, %v4448
        %4552 = vst.msk [vmem:[#allocation5 + $0x30] sm:$0xff] %vm4545, %v4450
        %4553 = vst.msk [vmem:[#allocation5 + $0x38] sm:$0xff] %vm4545, %v4452
        %4554 = vst.msk [vmem:[#allocation5 + $0x40] sm:$0xff] %vm4545, %v4454
        %4555 = vst.msk [vmem:[#allocation5 + $0x48] sm:$0xff] %vm4545, %v4456
        %4556 = vst.msk [vmem:[#allocation5 + $0x50] sm:$0xff] %vm4545, %v4458
        %4557 = vst.msk [vmem:[#allocation5 + $0x58] sm:$0xff] %vm4545, %v4460
        %4558 = vst.msk [vmem:[#allocation5 + $0x60] sm:$0xff] %vm4545, %v4462
        %4559 = vst.msk [vmem:[#allocation5 + $0x68] sm:$0xff] %vm4545, %v4464
        %4560 = vst.msk [vmem:[#allocation5 + $0x70] sm:$0xff] %vm4545, %v4466
        %4561 = vst.msk [vmem:[#allocation5 + $0x78] sm:$0xff] %vm4545, %v4468
        %4562 = vst.msk [vmem:[#allocation5 + $0x80] sm:$0xff] %vm4545, %v4470
        %4563 = vst.msk [vmem:[#allocation5 + $0x88] sm:$0xff] %vm4545, %v4472
        %4564 = vst.msk [vmem:[#allocation5 + $0x90] sm:$0xff] %vm4545, %v4474
        %4565 = vst.msk [vmem:[#allocation5 + $0x98] sm:$0xff] %vm4545, %v4476
        %4566 = vst.msk [vmem:[#allocation5 + $0xa0] sm:$0xff] %vm4545, %v4478
        %4567 = vst.msk [vmem:[#allocation5 + $0xa8] sm:$0xff] %vm4545, %v4480
        %4568 = vst.msk [vmem:[#allocation5 + $0xb0] sm:$0xff] %vm4545, %v4482
        %4569 = vst.msk [vmem:[#allocation5 + $0xb8] sm:$0xff] %vm4545, %v4484
        %4570 = vst.msk [vmem:[#allocation5 + $0xc0] sm:$0xff] %vm4545, %v4486
        %4571 = vst.msk [vmem:[#allocation5 + $0xc8] sm:$0xff] %vm4545, %v4488
        %4572 = vst.msk [vmem:[#allocation5 + $0xd0] sm:$0xff] %vm4545, %v4490
        %4573 = vst.msk [vmem:[#allocation5 + $0xd8] sm:$0xff] %vm4545, %v4492
        %4574 = vst.msk [vmem:[#allocation5 + $0xe0] sm:$0xff] %vm4545, %v4494
        %4575 = vst.msk [vmem:[#allocation5 + $0xe8] sm:$0xff] %vm4545, %v4496
        %4576 = vst.msk [vmem:[#allocation5 + $0xf0] sm:$0xff] %vm4545, %v4498
        %4577 = vst.msk [vmem:[#allocation5 + $0xf8] sm:$0xff] %vm4545, %v4500
        %4578 = vst.msk [vmem:[#allocation5 + $0x100] sm:$0xff] %vm4545, %v4502
        %4579 = vst.msk [vmem:[#allocation5 + $0x108] sm:$0xff] %vm4545, %v4504
        %4580 = vst.msk [vmem:[#allocation5 + $0x110] sm:$0xff] %vm4545, %v4506
        %4581 = vst.msk [vmem:[#allocation5 + $0x118] sm:$0xff] %vm4545, %v4508
        %v4582 = vld [vmem:[#allocation5] sm:$0xff]
        %v4583 = vld [vmem:[#allocation5 + $0x8] sm:$0xff]
        %v4584 = vld [vmem:[#allocation5 + $0x10] sm:$0xff]
        %v4585 = vld [vmem:[#allocation5 + $0x18] sm:$0xff]
        %v4586 = vld [vmem:[#allocation5 + $0x20] sm:$0xff]
        %v4587 = vld [vmem:[#allocation5 + $0x28] sm:$0xff]
        %v4588 = vld [vmem:[#allocation5 + $0x30] sm:$0xff]
        %v4589 = vld [vmem:[#allocation5 + $0x38] sm:$0xff]
        %v4590 = vld [vmem:[#allocation5 + $0x40] sm:$0xff]
        %v4591 = vld [vmem:[#allocation5 + $0x48] sm:$0xff]
        %v4592 = vld [vmem:[#allocation5 + $0x50] sm:$0xff]
        %v4593 = vld [vmem:[#allocation5 + $0x58] sm:$0xff]
        %v4594 = vld [vmem:[#allocation5 + $0x60] sm:$0xff]
        %v4595 = vld [vmem:[#allocation5 + $0x68] sm:$0xff]
        %v4596 = vld [vmem:[#allocation5 + $0x70] sm:$0xff]
        %v4597 = vld [vmem:[#allocation5 + $0x78] sm:$0xff]
        %v4598 = vld [vmem:[#allocation5 + $0x80] sm:$0xff]
        %v4599 = vld [vmem:[#allocation5 + $0x88] sm:$0xff]
        %v4600 = vld [vmem:[#allocation5 + $0x90] sm:$0xff]
        %v4601 = vld [vmem:[#allocation5 + $0x98] sm:$0xff]
        %v4602 = vld [vmem:[#allocation5 + $0xa0] sm:$0xff]
        %v4603 = vld [vmem:[#allocation5 + $0xa8] sm:$0xff]
        %v4604 = vld [vmem:[#allocation5 + $0xb0] sm:$0xff]
        %v4605 = vld [vmem:[#allocation5 + $0xb8] sm:$0xff]
        %v4606 = vld [vmem:[#allocation5 + $0xc0] sm:$0xff]
        %v4607 = vld [vmem:[#allocation5 + $0xc8] sm:$0xff]
        %v4608 = vld [vmem:[#allocation5 + $0xd0] sm:$0xff]
        %v4609 = vld [vmem:[#allocation5 + $0xd8] sm:$0xff]
        %v4610 = vld [vmem:[#allocation5 + $0xe0] sm:$0xff]
        %v4611 = vld [vmem:[#allocation5 + $0xe8] sm:$0xff]
        %v4612 = vld [vmem:[#allocation5 + $0xf0] sm:$0xff]
        %v4613 = vld [vmem:[#allocation5 + $0xf8] sm:$0xff]
        %v4614 = vld [vmem:[%s5] sm:$0x1]
        %v4616 = vlaneseq
        %v4617 = vshrl.u32 %v4616, 7
        %v4618 = vsub.s32 0, %v4617
        %v4619 = vrot.slane %v4614, %v4618
        %v4621 = vmul.f32 %v4582, %v4619
        %v4622 = vmul.f32 %v4583, %v4619
        %v4623 = vmul.f32 %v4584, %v4619
        %v4624 = vmul.f32 %v4585, %v4619
        %v4625 = vmul.f32 %v4586, %v4619
        %v4626 = vmul.f32 %v4587, %v4619
        %v4627 = vmul.f32 %v4588, %v4619
        %v4628 = vmul.f32 %v4589, %v4619
        %v4629 = vmul.f32 %v4590, %v4619
        %v4630 = vmul.f32 %v4591, %v4619
        %v4631 = vmul.f32 %v4592, %v4619
        %v4632 = vmul.f32 %v4593, %v4619
        %v4633 = vmul.f32 %v4594, %v4619
        %v4634 = vmul.f32 %v4595, %v4619
        %v4635 = vmul.f32 %v4596, %v4619
        %v4636 = vmul.f32 %v4597, %v4619
        %v4637 = vmul.f32 %v4598, %v4619
        %v4638 = vmul.f32 %v4599, %v4619
        %v4639 = vmul.f32 %v4600, %v4619
        %v4640 = vmul.f32 %v4601, %v4619
        %v4641 = vmul.f32 %v4602, %v4619
        %v4642 = vmul.f32 %v4603, %v4619
        %v4643 = vmul.f32 %v4604, %v4619
        %v4644 = vmul.f32 %v4605, %v4619
        %v4645 = vmul.f32 %v4606, %v4619
        %v4646 = vmul.f32 %v4607, %v4619
        %v4647 = vmul.f32 %v4608, %v4619
        %v4648 = vmul.f32 %v4609, %v4619
        %v4649 = vmul.f32 %v4610, %v4619
        %v4650 = vmul.f32 %v4611, %v4619
        %v4651 = vmul.f32 %v4612, %v4619
        %v4652 = vmul.f32 %v4613, %v4619
        %vm4653 = vcmask 392192
        %v4654 = vsel %vm4653, %v4621, 0.0
        %4655 = vadd.xlane.f32.xlu0 %v4654
        %v4656 = vpop.xlane.xlu0 %4655
        %v4657 = vsel %vm4653, %v4622, 0.0
        %4658 = vadd.xlane.f32.xlu0 %v4657
        %v4659 = vpop.xlane.xlu0 %4658
        %v4660 = vsel %vm4653, %v4623, 0.0
        %4661 = vadd.xlane.f32.xlu0 %v4660
        %v4662 = vpop.xlane.xlu0 %4661
        %v4663 = vsel %vm4653, %v4624, 0.0
        %4664 = vadd.xlane.f32.xlu0 %v4663
        %v4665 = vpop.xlane.xlu0 %4664
        %v4666 = vsel %vm4653, %v4625, 0.0
        %4667 = vadd.xlane.f32.xlu0 %v4666
        %v4668 = vpop.xlane.xlu0 %4667
        %v4669 = vsel %vm4653, %v4626, 0.0
        %4670 = vadd.xlane.f32.xlu0 %v4669
        %v4671 = vpop.xlane.xlu0 %4670
        %v4672 = vsel %vm4653, %v4627, 0.0
        %4673 = vadd.xlane.f32.xlu0 %v4672
        %v4674 = vpop.xlane.xlu0 %4673
        %v4675 = vsel %vm4653, %v4628, 0.0
        %4676 = vadd.xlane.f32.xlu0 %v4675
        %v4677 = vpop.xlane.xlu0 %4676
        %v4678 = vsel %vm4653, %v4629, 0.0
        %4679 = vadd.xlane.f32.xlu0 %v4678
        %v4680 = vpop.xlane.xlu0 %4679
        %v4681 = vsel %vm4653, %v4630, 0.0
        %4682 = vadd.xlane.f32.xlu0 %v4681
        %v4683 = vpop.xlane.xlu0 %4682
        %v4684 = vsel %vm4653, %v4631, 0.0
        %4685 = vadd.xlane.f32.xlu0 %v4684
        %v4686 = vpop.xlane.xlu0 %4685
        %v4687 = vsel %vm4653, %v4632, 0.0
        %4688 = vadd.xlane.f32.xlu0 %v4687
        %v4689 = vpop.xlane.xlu0 %4688
        %v4690 = vsel %vm4653, %v4633, 0.0
        %4691 = vadd.xlane.f32.xlu0 %v4690
        %v4692 = vpop.xlane.xlu0 %4691
        %v4693 = vsel %vm4653, %v4634, 0.0
        %4694 = vadd.xlane.f32.xlu0 %v4693
        %v4695 = vpop.xlane.xlu0 %4694
        %v4696 = vsel %vm4653, %v4635, 0.0
        %4697 = vadd.xlane.f32.xlu0 %v4696
        %v4698 = vpop.xlane.xlu0 %4697
        %v4699 = vsel %vm4653, %v4636, 0.0
        %4700 = vadd.xlane.f32.xlu0 %v4699
        %v4701 = vpop.xlane.xlu0 %4700
        %v4702 = vsel %vm4653, %v4637, 0.0
        %4703 = vadd.xlane.f32.xlu0 %v4702
        %v4704 = vpop.xlane.xlu0 %4703
        %v4705 = vsel %vm4653, %v4638, 0.0
        %4706 = vadd.xlane.f32.xlu0 %v4705
        %v4707 = vpop.xlane.xlu0 %4706
        %v4708 = vsel %vm4653, %v4639, 0.0
        %4709 = vadd.xlane.f32.xlu0 %v4708
        %v4710 = vpop.xlane.xlu0 %4709
        %v4711 = vsel %vm4653, %v4640, 0.0
        %4712 = vadd.xlane.f32.xlu0 %v4711
        %v4713 = vpop.xlane.xlu0 %4712
        %v4714 = vsel %vm4653, %v4641, 0.0
        %4715 = vadd.xlane.f32.xlu0 %v4714
        %v4716 = vpop.xlane.xlu0 %4715
        %v4717 = vsel %vm4653, %v4642, 0.0
        %4718 = vadd.xlane.f32.xlu0 %v4717
        %v4719 = vpop.xlane.xlu0 %4718
        %v4720 = vsel %vm4653, %v4643, 0.0
        %4721 = vadd.xlane.f32.xlu0 %v4720
        %v4722 = vpop.xlane.xlu0 %4721
        %v4723 = vsel %vm4653, %v4644, 0.0
        %4724 = vadd.xlane.f32.xlu0 %v4723
        %v4725 = vpop.xlane.xlu0 %4724
        %v4726 = vsel %vm4653, %v4645, 0.0
        %4727 = vadd.xlane.f32.xlu0 %v4726
        %v4728 = vpop.xlane.xlu0 %4727
        %v4729 = vsel %vm4653, %v4646, 0.0
        %4730 = vadd.xlane.f32.xlu0 %v4729
        %v4731 = vpop.xlane.xlu0 %4730
        %v4732 = vsel %vm4653, %v4647, 0.0
        %4733 = vadd.xlane.f32.xlu0 %v4732
        %v4734 = vpop.xlane.xlu0 %4733
        %v4735 = vsel %vm4653, %v4648, 0.0
        %4736 = vadd.xlane.f32.xlu0 %v4735
        %v4737 = vpop.xlane.xlu0 %4736
        %v4738 = vsel %vm4653, %v4649, 0.0
        %4739 = vadd.xlane.f32.xlu0 %v4738
        %v4740 = vpop.xlane.xlu0 %4739
        %v4741 = vsel %vm4653, %v4650, 0.0
        %4742 = vadd.xlane.f32.xlu0 %v4741
        %v4743 = vpop.xlane.xlu0 %4742
        %v4744 = vsel %vm4653, %v4651, 0.0
        %4745 = vadd.xlane.f32.xlu0 %v4744
        %v4746 = vpop.xlane.xlu0 %4745
        %v4747 = vsel %vm4653, %v4652, 0.0
        %4748 = vadd.xlane.f32.xlu0 %v4747
        %v4749 = vpop.xlane.xlu0 %4748
        %v4750 = vadd.f32 %v4656, 0.0
        %v4751 = vadd.f32 %v4659, 0.0
        %v4752 = vadd.f32 %v4662, 0.0
        %v4753 = vadd.f32 %v4665, 0.0
        %v4754 = vadd.f32 %v4668, 0.0
        %v4755 = vadd.f32 %v4671, 0.0
        %v4756 = vadd.f32 %v4674, 0.0
        %v4757 = vadd.f32 %v4677, 0.0
        %v4758 = vadd.f32 %v4680, 0.0
        %v4759 = vadd.f32 %v4683, 0.0
        %v4760 = vadd.f32 %v4686, 0.0
        %v4761 = vadd.f32 %v4689, 0.0
        %v4762 = vadd.f32 %v4692, 0.0
        %v4763 = vadd.f32 %v4695, 0.0
        %v4764 = vadd.f32 %v4698, 0.0
        %v4765 = vadd.f32 %v4701, 0.0
        %v4766 = vadd.f32 %v4704, 0.0
        %v4767 = vadd.f32 %v4707, 0.0
        %v4768 = vadd.f32 %v4710, 0.0
        %v4769 = vadd.f32 %v4713, 0.0
        %v4770 = vadd.f32 %v4716, 0.0
        %v4771 = vadd.f32 %v4719, 0.0
        %v4772 = vadd.f32 %v4722, 0.0
        %v4773 = vadd.f32 %v4725, 0.0
        %v4774 = vadd.f32 %v4728, 0.0
        %v4775 = vadd.f32 %v4731, 0.0
        %v4776 = vadd.f32 %v4734, 0.0
        %v4777 = vadd.f32 %v4737, 0.0
        %v4778 = vadd.f32 %v4740, 0.0
        %v4779 = vadd.f32 %v4743, 0.0
        %v4780 = vadd.f32 %v4746, 0.0
        %v4781 = vadd.f32 %v4749, 0.0
        %s4782 = scalar_lea.vmem [#allocation5], 16
        %v4783 = vld [vmem:[%s4782] sm:$0xff]
        %v4784 = vld [vmem:[%s4782 + $0x8] sm:$0xff]
        %v4785 = vld [vmem:[%s4782 + $0x10] sm:$0xff]
        %v4786 = vld [vmem:[%s4782 + $0x18] sm:$0xff]
        %v4787 = vld [vmem:[%s4782 + $0x20] sm:$0xff]
        %v4788 = vld [vmem:[%s4782 + $0x28] sm:$0xff]
        %v4789 = vld [vmem:[%s4782 + $0x30] sm:$0xff]
        %v4790 = vld [vmem:[%s4782 + $0x38] sm:$0xff]
        %v4791 = vld [vmem:[%s4782 + $0x40] sm:$0xff]
        %v4792 = vld [vmem:[%s4782 + $0x48] sm:$0xff]
        %v4793 = vld [vmem:[%s4782 + $0x50] sm:$0xff]
        %v4794 = vld [vmem:[%s4782 + $0x58] sm:$0xff]
        %v4795 = vld [vmem:[%s4782 + $0x60] sm:$0xff]
        %v4796 = vld [vmem:[%s4782 + $0x68] sm:$0xff]
        %v4797 = vld [vmem:[%s4782 + $0x70] sm:$0xff]
        %v4798 = vld [vmem:[%s4782 + $0x78] sm:$0xff]
        %v4799 = vld [vmem:[%s4782 + $0x80] sm:$0xff]
        %v4800 = vld [vmem:[%s4782 + $0x88] sm:$0xff]
        %v4801 = vld [vmem:[%s4782 + $0x90] sm:$0xff]
        %v4802 = vld [vmem:[%s4782 + $0x98] sm:$0xff]
        %v4803 = vld [vmem:[%s4782 + $0xa0] sm:$0xff]
        %v4804 = vld [vmem:[%s4782 + $0xa8] sm:$0xff]
        %v4805 = vld [vmem:[%s4782 + $0xb0] sm:$0xff]
        %v4806 = vld [vmem:[%s4782 + $0xb8] sm:$0xff]
        %v4807 = vld [vmem:[%s4782 + $0xc0] sm:$0xff]
        %v4808 = vld [vmem:[%s4782 + $0xc8] sm:$0xff]
        %v4809 = vld [vmem:[%s4782 + $0xd0] sm:$0xff]
        %v4810 = vld [vmem:[%s4782 + $0xd8] sm:$0xff]
        %v4811 = vld [vmem:[%s4782 + $0xe0] sm:$0xff]
        %v4812 = vld [vmem:[%s4782 + $0xe8] sm:$0xff]
        %v4813 = vld [vmem:[%s4782 + $0xf0] sm:$0xff]
        %v4814 = vld [vmem:[%s4782 + $0xf8] sm:$0xff]
        %s4815 = scalar_lea.vmem %s5, 1
        %v4816 = vld [vmem:[%s4815] sm:$0x1]
        %v4818 = vlaneseq
        %v4819 = vshrl.u32 %v4818, 7
        %v4820 = vsub.s32 0, %v4819
        %v4821 = vrot.slane %v4816, %v4820
        %v4823 = vmul.f32 %v4783, %v4821
        %v4824 = vmul.f32 %v4784, %v4821
        %v4825 = vmul.f32 %v4785, %v4821
        %v4826 = vmul.f32 %v4786, %v4821
        %v4827 = vmul.f32 %v4787, %v4821
        %v4828 = vmul.f32 %v4788, %v4821
        %v4829 = vmul.f32 %v4789, %v4821
        %v4830 = vmul.f32 %v4790, %v4821
        %v4831 = vmul.f32 %v4791, %v4821
        %v4832 = vmul.f32 %v4792, %v4821
        %v4833 = vmul.f32 %v4793, %v4821
        %v4834 = vmul.f32 %v4794, %v4821
        %v4835 = vmul.f32 %v4795, %v4821
        %v4836 = vmul.f32 %v4796, %v4821
        %v4837 = vmul.f32 %v4797, %v4821
        %v4838 = vmul.f32 %v4798, %v4821
        %v4839 = vmul.f32 %v4799, %v4821
        %v4840 = vmul.f32 %v4800, %v4821
        %v4841 = vmul.f32 %v4801, %v4821
        %v4842 = vmul.f32 %v4802, %v4821
        %v4843 = vmul.f32 %v4803, %v4821
        %v4844 = vmul.f32 %v4804, %v4821
        %v4845 = vmul.f32 %v4805, %v4821
        %v4846 = vmul.f32 %v4806, %v4821
        %v4847 = vmul.f32 %v4807, %v4821
        %v4848 = vmul.f32 %v4808, %v4821
        %v4849 = vmul.f32 %v4809, %v4821
        %v4850 = vmul.f32 %v4810, %v4821
        %v4851 = vmul.f32 %v4811, %v4821
        %v4852 = vmul.f32 %v4812, %v4821
        %v4853 = vmul.f32 %v4813, %v4821
        %v4854 = vmul.f32 %v4814, %v4821
        %v4855 = vsel %vm4653, %v4823, 0.0
        %4856 = vadd.xlane.f32.xlu0 %v4855
        %v4857 = vpop.xlane.xlu0 %4856
        %v4858 = vsel %vm4653, %v4824, 0.0
        %4859 = vadd.xlane.f32.xlu0 %v4858
        %v4860 = vpop.xlane.xlu0 %4859
        %v4861 = vsel %vm4653, %v4825, 0.0
        %4862 = vadd.xlane.f32.xlu0 %v4861
        %v4863 = vpop.xlane.xlu0 %4862
        %v4864 = vsel %vm4653, %v4826, 0.0
        %4865 = vadd.xlane.f32.xlu0 %v4864
        %v4866 = vpop.xlane.xlu0 %4865
        %v4867 = vsel %vm4653, %v4827, 0.0
        %4868 = vadd.xlane.f32.xlu0 %v4867
        %v4869 = vpop.xlane.xlu0 %4868
        %v4870 = vsel %vm4653, %v4828, 0.0
        %4871 = vadd.xlane.f32.xlu0 %v4870
        %v4872 = vpop.xlane.xlu0 %4871
        %v4873 = vsel %vm4653, %v4829, 0.0
        %4874 = vadd.xlane.f32.xlu0 %v4873
        %v4875 = vpop.xlane.xlu0 %4874
        %v4876 = vsel %vm4653, %v4830, 0.0
        %4877 = vadd.xlane.f32.xlu0 %v4876
        %v4878 = vpop.xlane.xlu0 %4877
        %v4879 = vsel %vm4653, %v4831, 0.0
        %4880 = vadd.xlane.f32.xlu0 %v4879
        %v4881 = vpop.xlane.xlu0 %4880
        %v4882 = vsel %vm4653, %v4832, 0.0
        %4883 = vadd.xlane.f32.xlu0 %v4882
        %v4884 = vpop.xlane.xlu0 %4883
        %v4885 = vsel %vm4653, %v4833, 0.0
        %4886 = vadd.xlane.f32.xlu0 %v4885
        %v4887 = vpop.xlane.xlu0 %4886
        %v4888 = vsel %vm4653, %v4834, 0.0
        %4889 = vadd.xlane.f32.xlu0 %v4888
        %v4890 = vpop.xlane.xlu0 %4889
        %v4891 = vsel %vm4653, %v4835, 0.0
        %4892 = vadd.xlane.f32.xlu0 %v4891
        %v4893 = vpop.xlane.xlu0 %4892
        %v4894 = vsel %vm4653, %v4836, 0.0
        %4895 = vadd.xlane.f32.xlu0 %v4894
        %v4896 = vpop.xlane.xlu0 %4895
        %v4897 = vsel %vm4653, %v4837, 0.0
        %4898 = vadd.xlane.f32.xlu0 %v4897
        %v4899 = vpop.xlane.xlu0 %4898
        %v4900 = vsel %vm4653, %v4838, 0.0
        %4901 = vadd.xlane.f32.xlu0 %v4900
        %v4902 = vpop.xlane.xlu0 %4901
        %v4903 = vsel %vm4653, %v4839, 0.0
        %4904 = vadd.xlane.f32.xlu0 %v4903
        %v4905 = vpop.xlane.xlu0 %4904
        %v4906 = vsel %vm4653, %v4840, 0.0
        %4907 = vadd.xlane.f32.xlu0 %v4906
        %v4908 = vpop.xlane.xlu0 %4907
        %v4909 = vsel %vm4653, %v4841, 0.0
        %4910 = vadd.xlane.f32.xlu0 %v4909
        %v4911 = vpop.xlane.xlu0 %4910
        %v4912 = vsel %vm4653, %v4842, 0.0
        %4913 = vadd.xlane.f32.xlu0 %v4912
        %v4914 = vpop.xlane.xlu0 %4913
        %v4915 = vsel %vm4653, %v4843, 0.0
        %4916 = vadd.xlane.f32.xlu0 %v4915
        %v4917 = vpop.xlane.xlu0 %4916
        %v4918 = vsel %vm4653, %v4844, 0.0
        %4919 = vadd.xlane.f32.xlu0 %v4918
        %v4920 = vpop.xlane.xlu0 %4919
        %v4921 = vsel %vm4653, %v4845, 0.0
        %4922 = vadd.xlane.f32.xlu0 %v4921
        %v4923 = vpop.xlane.xlu0 %4922
        %v4924 = vsel %vm4653, %v4846, 0.0
        %4925 = vadd.xlane.f32.xlu0 %v4924
        %v4926 = vpop.xlane.xlu0 %4925
        %v4927 = vsel %vm4653, %v4847, 0.0
        %4928 = vadd.xlane.f32.xlu0 %v4927
        %v4929 = vpop.xlane.xlu0 %4928
        %v4930 = vsel %vm4653, %v4848, 0.0
        %4931 = vadd.xlane.f32.xlu0 %v4930
        %v4932 = vpop.xlane.xlu0 %4931
        %v4933 = vsel %vm4653, %v4849, 0.0
        %4934 = vadd.xlane.f32.xlu0 %v4933
        %v4935 = vpop.xlane.xlu0 %4934
        %v4936 = vsel %vm4653, %v4850, 0.0
        %4937 = vadd.xlane.f32.xlu0 %v4936
        %v4938 = vpop.xlane.xlu0 %4937
        %v4939 = vsel %vm4653, %v4851, 0.0
        %4940 = vadd.xlane.f32.xlu0 %v4939
        %v4941 = vpop.xlane.xlu0 %4940
        %v4942 = vsel %vm4653, %v4852, 0.0
        %4943 = vadd.xlane.f32.xlu0 %v4942
        %v4944 = vpop.xlane.xlu0 %4943
        %v4945 = vsel %vm4653, %v4853, 0.0
        %4946 = vadd.xlane.f32.xlu0 %v4945
        %v4947 = vpop.xlane.xlu0 %4946
        %v4948 = vsel %vm4653, %v4854, 0.0
        %4949 = vadd.xlane.f32.xlu0 %v4948
        %v4950 = vpop.xlane.xlu0 %4949
        %v4951 = vadd.f32 %v4750, %v4857
        %v4952 = vadd.f32 %v4751, %v4860
        %v4953 = vadd.f32 %v4752, %v4863
        %v4954 = vadd.f32 %v4753, %v4866
        %v4955 = vadd.f32 %v4754, %v4869
        %v4956 = vadd.f32 %v4755, %v4872
        %v4957 = vadd.f32 %v4756, %v4875
        %v4958 = vadd.f32 %v4757, %v4878
        %v4959 = vadd.f32 %v4758, %v4881
        %v4960 = vadd.f32 %v4759, %v4884
        %v4961 = vadd.f32 %v4760, %v4887
        %v4962 = vadd.f32 %v4761, %v4890
        %v4963 = vadd.f32 %v4762, %v4893
        %v4964 = vadd.f32 %v4763, %v4896
        %v4965 = vadd.f32 %v4764, %v4899
        %v4966 = vadd.f32 %v4765, %v4902
        %v4967 = vadd.f32 %v4766, %v4905
        %v4968 = vadd.f32 %v4767, %v4908
        %v4969 = vadd.f32 %v4768, %v4911
        %v4970 = vadd.f32 %v4769, %v4914
        %v4971 = vadd.f32 %v4770, %v4917
        %v4972 = vadd.f32 %v4771, %v4920
        %v4973 = vadd.f32 %v4772, %v4923
        %v4974 = vadd.f32 %v4773, %v4926
        %v4975 = vadd.f32 %v4774, %v4929
        %v4976 = vadd.f32 %v4775, %v4932
        %v4977 = vadd.f32 %v4776, %v4935
        %v4978 = vadd.f32 %v4777, %v4938
        %v4979 = vadd.f32 %v4778, %v4941
        %v4980 = vadd.f32 %v4779, %v4944
        %v4981 = vadd.f32 %v4780, %v4947
        %v4982 = vadd.f32 %v4781, %v4950
        %s4983 = scalar_lea.vmem [#allocation5], 32
        %v4984 = vld [vmem:[%s4983] sm:$0xff]
        %v4985 = vld [vmem:[%s4983 + $0x8] sm:$0xff]
        %v4986 = vld [vmem:[%s4983 + $0x10] sm:$0xff]
        %v4987 = vld [vmem:[%s4983 + $0x18] sm:$0xff]
        %v4988 = vld [vmem:[%s4983 + $0x20] sm:$0xff]
        %v4989 = vld [vmem:[%s4983 + $0x28] sm:$0xff]
        %v4990 = vld [vmem:[%s4983 + $0x30] sm:$0xff]
        %v4991 = vld [vmem:[%s4983 + $0x38] sm:$0xff]
        %v4992 = vld [vmem:[%s4983 + $0x40] sm:$0xff]
        %v4993 = vld [vmem:[%s4983 + $0x48] sm:$0xff]
        %v4994 = vld [vmem:[%s4983 + $0x50] sm:$0xff]
        %v4995 = vld [vmem:[%s4983 + $0x58] sm:$0xff]
        %v4996 = vld [vmem:[%s4983 + $0x60] sm:$0xff]
        %v4997 = vld [vmem:[%s4983 + $0x68] sm:$0xff]
        %v4998 = vld [vmem:[%s4983 + $0x70] sm:$0xff]
        %v4999 = vld [vmem:[%s4983 + $0x78] sm:$0xff]
        %v5000 = vld [vmem:[%s4983 + $0x80] sm:$0xff]
        %v5001 = vld [vmem:[%s4983 + $0x88] sm:$0xff]
        %v5002 = vld [vmem:[%s4983 + $0x90] sm:$0xff]
        %v5003 = vld [vmem:[%s4983 + $0x98] sm:$0xff]
        %v5004 = vld [vmem:[%s4983 + $0xa0] sm:$0xff]
        %v5005 = vld [vmem:[%s4983 + $0xa8] sm:$0xff]
        %v5006 = vld [vmem:[%s4983 + $0xb0] sm:$0xff]
        %v5007 = vld [vmem:[%s4983 + $0xb8] sm:$0xff]
        %v5008 = vld [vmem:[%s4983 + $0xc0] sm:$0xff]
        %v5009 = vld [vmem:[%s4983 + $0xc8] sm:$0xff]
        %v5010 = vld [vmem:[%s4983 + $0xd0] sm:$0xff]
        %v5011 = vld [vmem:[%s4983 + $0xd8] sm:$0xff]
        %v5012 = vld [vmem:[%s4983 + $0xe0] sm:$0xff]
        %v5013 = vld [vmem:[%s4983 + $0xe8] sm:$0xff]
        %v5014 = vld [vmem:[%s4983 + $0xf0] sm:$0xff]
        %v5015 = vld [vmem:[%s4983 + $0xf8] sm:$0xff]
        %s5016 = scalar_lea.vmem %s5, 2
        %v5017 = vld [vmem:[%s5016] sm:$0x1]
        %v5019 = vlaneseq
        %v5020 = vshrl.u32 %v5019, 7
        %v5021 = vsub.s32 0, %v5020
        %v5022 = vrot.slane %v5017, %v5021
        %v5024 = vmul.f32 %v4984, %v5022
        %v5025 = vmul.f32 %v4985, %v5022
        %v5026 = vmul.f32 %v4986, %v5022
        %v5027 = vmul.f32 %v4987, %v5022
        %v5028 = vmul.f32 %v4988, %v5022
        %v5029 = vmul.f32 %v4989, %v5022
        %v5030 = vmul.f32 %v4990, %v5022
        %v5031 = vmul.f32 %v4991, %v5022
        %v5032 = vmul.f32 %v4992, %v5022
        %v5033 = vmul.f32 %v4993, %v5022
        %v5034 = vmul.f32 %v4994, %v5022
        %v5035 = vmul.f32 %v4995, %v5022
        %v5036 = vmul.f32 %v4996, %v5022
        %v5037 = vmul.f32 %v4997, %v5022
        %v5038 = vmul.f32 %v4998, %v5022
        %v5039 = vmul.f32 %v4999, %v5022
        %v5040 = vmul.f32 %v5000, %v5022
        %v5041 = vmul.f32 %v5001, %v5022
        %v5042 = vmul.f32 %v5002, %v5022
        %v5043 = vmul.f32 %v5003, %v5022
        %v5044 = vmul.f32 %v5004, %v5022
        %v5045 = vmul.f32 %v5005, %v5022
        %v5046 = vmul.f32 %v5006, %v5022
        %v5047 = vmul.f32 %v5007, %v5022
        %v5048 = vmul.f32 %v5008, %v5022
        %v5049 = vmul.f32 %v5009, %v5022
        %v5050 = vmul.f32 %v5010, %v5022
        %v5051 = vmul.f32 %v5011, %v5022
        %v5052 = vmul.f32 %v5012, %v5022
        %v5053 = vmul.f32 %v5013, %v5022
        %v5054 = vmul.f32 %v5014, %v5022
        %v5055 = vmul.f32 %v5015, %v5022
        %v5056 = vsel %vm4653, %v5024, 0.0
        %5057 = vadd.xlane.f32.xlu0 %v5056
        %v5058 = vpop.xlane.xlu0 %5057
        %v5059 = vsel %vm4653, %v5025, 0.0
        %5060 = vadd.xlane.f32.xlu0 %v5059
        %v5061 = vpop.xlane.xlu0 %5060
        %v5062 = vsel %vm4653, %v5026, 0.0
        %5063 = vadd.xlane.f32.xlu0 %v5062
        %v5064 = vpop.xlane.xlu0 %5063
        %v5065 = vsel %vm4653, %v5027, 0.0
        %5066 = vadd.xlane.f32.xlu0 %v5065
        %v5067 = vpop.xlane.xlu0 %5066
        %v5068 = vsel %vm4653, %v5028, 0.0
        %5069 = vadd.xlane.f32.xlu0 %v5068
        %v5070 = vpop.xlane.xlu0 %5069
        %v5071 = vsel %vm4653, %v5029, 0.0
        %5072 = vadd.xlane.f32.xlu0 %v5071
        %v5073 = vpop.xlane.xlu0 %5072
        %v5074 = vsel %vm4653, %v5030, 0.0
        %5075 = vadd.xlane.f32.xlu0 %v5074
        %v5076 = vpop.xlane.xlu0 %5075
        %v5077 = vsel %vm4653, %v5031, 0.0
        %5078 = vadd.xlane.f32.xlu0 %v5077
        %v5079 = vpop.xlane.xlu0 %5078
        %v5080 = vsel %vm4653, %v5032, 0.0
        %5081 = vadd.xlane.f32.xlu0 %v5080
        %v5082 = vpop.xlane.xlu0 %5081
        %v5083 = vsel %vm4653, %v5033, 0.0
        %5084 = vadd.xlane.f32.xlu0 %v5083
        %v5085 = vpop.xlane.xlu0 %5084
        %v5086 = vsel %vm4653, %v5034, 0.0
        %5087 = vadd.xlane.f32.xlu0 %v5086
        %v5088 = vpop.xlane.xlu0 %5087
        %v5089 = vsel %vm4653, %v5035, 0.0
        %5090 = vadd.xlane.f32.xlu0 %v5089
        %v5091 = vpop.xlane.xlu0 %5090
        %v5092 = vsel %vm4653, %v5036, 0.0
        %5093 = vadd.xlane.f32.xlu0 %v5092
        %v5094 = vpop.xlane.xlu0 %5093
        %v5095 = vsel %vm4653, %v5037, 0.0
        %5096 = vadd.xlane.f32.xlu0 %v5095
        %v5097 = vpop.xlane.xlu0 %5096
        %v5098 = vsel %vm4653, %v5038, 0.0
        %5099 = vadd.xlane.f32.xlu0 %v5098
        %v5100 = vpop.xlane.xlu0 %5099
        %v5101 = vsel %vm4653, %v5039, 0.0
        %5102 = vadd.xlane.f32.xlu0 %v5101
        %v5103 = vpop.xlane.xlu0 %5102
        %v5104 = vsel %vm4653, %v5040, 0.0
        %5105 = vadd.xlane.f32.xlu0 %v5104
        %v5106 = vpop.xlane.xlu0 %5105
        %v5107 = vsel %vm4653, %v5041, 0.0
        %5108 = vadd.xlane.f32.xlu0 %v5107
        %v5109 = vpop.xlane.xlu0 %5108
        %v5110 = vsel %vm4653, %v5042, 0.0
        %5111 = vadd.xlane.f32.xlu0 %v5110
        %v5112 = vpop.xlane.xlu0 %5111
        %v5113 = vsel %vm4653, %v5043, 0.0
        %5114 = vadd.xlane.f32.xlu0 %v5113
        %v5115 = vpop.xlane.xlu0 %5114
        %v5116 = vsel %vm4653, %v5044, 0.0
        %5117 = vadd.xlane.f32.xlu0 %v5116
        %v5118 = vpop.xlane.xlu0 %5117
        %v5119 = vsel %vm4653, %v5045, 0.0
        %5120 = vadd.xlane.f32.xlu0 %v5119
        %v5121 = vpop.xlane.xlu0 %5120
        %v5122 = vsel %vm4653, %v5046, 0.0
        %5123 = vadd.xlane.f32.xlu0 %v5122
        %v5124 = vpop.xlane.xlu0 %5123
        %v5125 = vsel %vm4653, %v5047, 0.0
        %5126 = vadd.xlane.f32.xlu0 %v5125
        %v5127 = vpop.xlane.xlu0 %5126
        %v5128 = vsel %vm4653, %v5048, 0.0
        %5129 = vadd.xlane.f32.xlu0 %v5128
        %v5130 = vpop.xlane.xlu0 %5129
        %v5131 = vsel %vm4653, %v5049, 0.0
        %5132 = vadd.xlane.f32.xlu0 %v5131
        %v5133 = vpop.xlane.xlu0 %5132
        %v5134 = vsel %vm4653, %v5050, 0.0
        %5135 = vadd.xlane.f32.xlu0 %v5134
        %v5136 = vpop.xlane.xlu0 %5135
        %v5137 = vsel %vm4653, %v5051, 0.0
        %5138 = vadd.xlane.f32.xlu0 %v5137
        %v5139 = vpop.xlane.xlu0 %5138
        %v5140 = vsel %vm4653, %v5052, 0.0
        %5141 = vadd.xlane.f32.xlu0 %v5140
        %v5142 = vpop.xlane.xlu0 %5141
        %v5143 = vsel %vm4653, %v5053, 0.0
        %5144 = vadd.xlane.f32.xlu0 %v5143
        %v5145 = vpop.xlane.xlu0 %5144
        %v5146 = vsel %vm4653, %v5054, 0.0
        %5147 = vadd.xlane.f32.xlu0 %v5146
        %v5148 = vpop.xlane.xlu0 %5147
        %v5149 = vsel %vm4653, %v5055, 0.0
        %5150 = vadd.xlane.f32.xlu0 %v5149
        %v5151 = vpop.xlane.xlu0 %5150
        %v5152 = vadd.f32 %v4951, %v5058
        %v5153 = vadd.f32 %v4952, %v5061
        %v5154 = vadd.f32 %v4953, %v5064
        %v5155 = vadd.f32 %v4954, %v5067
        %v5156 = vadd.f32 %v4955, %v5070
        %v5157 = vadd.f32 %v4956, %v5073
        %v5158 = vadd.f32 %v4957, %v5076
        %v5159 = vadd.f32 %v4958, %v5079
        %v5160 = vadd.f32 %v4959, %v5082
        %v5161 = vadd.f32 %v4960, %v5085
        %v5162 = vadd.f32 %v4961, %v5088
        %v5163 = vadd.f32 %v4962, %v5091
        %v5164 = vadd.f32 %v4963, %v5094
        %v5165 = vadd.f32 %v4964, %v5097
        %v5166 = vadd.f32 %v4965, %v5100
        %v5167 = vadd.f32 %v4966, %v5103
        %v5168 = vadd.f32 %v4967, %v5106
        %v5169 = vadd.f32 %v4968, %v5109
        %v5170 = vadd.f32 %v4969, %v5112
        %v5171 = vadd.f32 %v4970, %v5115
        %v5172 = vadd.f32 %v4971, %v5118
        %v5173 = vadd.f32 %v4972, %v5121
        %v5174 = vadd.f32 %v4973, %v5124
        %v5175 = vadd.f32 %v4974, %v5127
        %v5176 = vadd.f32 %v4975, %v5130
        %v5177 = vadd.f32 %v4976, %v5133
        %v5178 = vadd.f32 %v4977, %v5136
        %v5179 = vadd.f32 %v4978, %v5139
        %v5180 = vadd.f32 %v4979, %v5142
        %v5181 = vadd.f32 %v4980, %v5145
        %v5182 = vadd.f32 %v4981, %v5148
        %v5183 = vadd.f32 %v4982, %v5151
        %v5184 = vld [vmem:[#allocation6] sm:$0x1]
        %v5186 = vlaneseq
        %v5187 = vshrl.u32 %v5186, 7
        %v5188 = vsub.s32 0, %v5187
        %v5189 = vrot.slane %v5184, %v5188
        %5190 = vset.pattern.permute.xlu0 0
        %5191 = vperm.xlu0 %5190, %v5189
        %v5192 = vpop.permute.xlu0 %5191
        %v5194 = vadd.f32 %v5152, %v5192
        %v5195 = vadd.f32 %v5153, %v5192
        %v5196 = vadd.f32 %v5154, %v5192
        %v5197 = vadd.f32 %v5155, %v5192
        %v5198 = vadd.f32 %v5156, %v5192
        %v5199 = vadd.f32 %v5157, %v5192
        %v5200 = vadd.f32 %v5158, %v5192
        %v5201 = vadd.f32 %v5159, %v5192
        %v5202 = vadd.f32 %v5160, %v5192
        %v5203 = vadd.f32 %v5161, %v5192
        %v5204 = vadd.f32 %v5162, %v5192
        %v5205 = vadd.f32 %v5163, %v5192
        %v5206 = vadd.f32 %v5164, %v5192
        %v5207 = vadd.f32 %v5165, %v5192
        %v5208 = vadd.f32 %v5166, %v5192
        %v5209 = vadd.f32 %v5167, %v5192
        %v5210 = vadd.f32 %v5168, %v5192
        %v5211 = vadd.f32 %v5169, %v5192
        %v5212 = vadd.f32 %v5170, %v5192
        %v5213 = vadd.f32 %v5171, %v5192
        %v5214 = vadd.f32 %v5172, %v5192
        %v5215 = vadd.f32 %v5173, %v5192
        %v5216 = vadd.f32 %v5174, %v5192
        %v5217 = vadd.f32 %v5175, %v5192
        %v5218 = vadd.f32 %v5176, %v5192
        %v5219 = vadd.f32 %v5177, %v5192
        %v5220 = vadd.f32 %v5178, %v5192
        %v5221 = vadd.f32 %v5179, %v5192
        %v5222 = vadd.f32 %v5180, %v5192
        %v5223 = vadd.f32 %v5181, %v5192
        %v5224 = vadd.f32 %v5182, %v5192
        %v5225 = vadd.f32 %v5183, %v5192
        %v5258 = vlaneseq
        %v5259 = vand.u32 %v5258, 127
        %v5260 = vlaneseq
        %v5261 = vshrl.u32 %v5260, 7
        %v5262 = vsub.s32 %v5259, %v5261
        %v5263 = vrot.slane %v5194, %v5262
        %v5264 = vadd.s32 %v5259, 4294967288
        %v5265 = vlaneseq
        %v5266 = vshrl.u32 %v5265, 7
        %v5267 = vsub.s32 %v5264, %v5266
        %v5268 = vrot.slane %v5195, %v5267
        %vm5269 = vcmask 130112
        %v5270 = vsel %vm5269, %v5268, %v5263
        %v5271 = vlaneseq
        %v5272 = vshrl.u32 %v5271, 7
        %v5273 = vsub.s32 %v5259, %v5272
        %v5274 = vrot.slane %v5196, %v5273
        %v5275 = vlaneseq
        %v5276 = vshrl.u32 %v5275, 7
        %v5277 = vsub.s32 %v5264, %v5276
        %v5278 = vrot.slane %v5197, %v5277
        %v5279 = vsel %vm5269, %v5278, %v5274
        %v5280 = vlaneseq
        %v5281 = vshrl.u32 %v5280, 7
        %v5282 = vsub.s32 %v5259, %v5281
        %v5283 = vrot.slane %v5198, %v5282
        %v5284 = vlaneseq
        %v5285 = vshrl.u32 %v5284, 7
        %v5286 = vsub.s32 %v5264, %v5285
        %v5287 = vrot.slane %v5199, %v5286
        %v5288 = vsel %vm5269, %v5287, %v5283
        %v5289 = vlaneseq
        %v5290 = vshrl.u32 %v5289, 7
        %v5291 = vsub.s32 %v5259, %v5290
        %v5292 = vrot.slane %v5200, %v5291
        %v5293 = vlaneseq
        %v5294 = vshrl.u32 %v5293, 7
        %v5295 = vsub.s32 %v5264, %v5294
        %v5296 = vrot.slane %v5201, %v5295
        %v5297 = vsel %vm5269, %v5296, %v5292
        %v5298 = vlaneseq
        %v5299 = vshrl.u32 %v5298, 7
        %v5300 = vsub.s32 %v5259, %v5299
        %v5301 = vrot.slane %v5202, %v5300
        %v5302 = vlaneseq
        %v5303 = vshrl.u32 %v5302, 7
        %v5304 = vsub.s32 %v5264, %v5303
        %v5305 = vrot.slane %v5203, %v5304
        %v5306 = vsel %vm5269, %v5305, %v5301
        %v5307 = vlaneseq
        %v5308 = vshrl.u32 %v5307, 7
        %v5309 = vsub.s32 %v5259, %v5308
        %v5310 = vrot.slane %v5204, %v5309
        %v5311 = vlaneseq
        %v5312 = vshrl.u32 %v5311, 7
        %v5313 = vsub.s32 %v5264, %v5312
        %v5314 = vrot.slane %v5205, %v5313
        %v5315 = vsel %vm5269, %v5314, %v5310
        %v5316 = vlaneseq
        %v5317 = vshrl.u32 %v5316, 7
        %v5318 = vsub.s32 %v5259, %v5317
        %v5319 = vrot.slane %v5206, %v5318
        %v5320 = vlaneseq
        %v5321 = vshrl.u32 %v5320, 7
        %v5322 = vsub.s32 %v5264, %v5321
        %v5323 = vrot.slane %v5207, %v5322
        %v5324 = vsel %vm5269, %v5323, %v5319
        %v5325 = vlaneseq
        %v5326 = vshrl.u32 %v5325, 7
        %v5327 = vsub.s32 %v5259, %v5326
        %v5328 = vrot.slane %v5208, %v5327
        %v5329 = vlaneseq
        %v5330 = vshrl.u32 %v5329, 7
        %v5331 = vsub.s32 %v5264, %v5330
        %v5332 = vrot.slane %v5209, %v5331
        %v5333 = vsel %vm5269, %v5332, %v5328
        %v5334 = vlaneseq
        %v5335 = vshrl.u32 %v5334, 7
        %v5336 = vsub.s32 %v5259, %v5335
        %v5337 = vrot.slane %v5210, %v5336
        %v5338 = vlaneseq
        %v5339 = vshrl.u32 %v5338, 7
        %v5340 = vsub.s32 %v5264, %v5339
        %v5341 = vrot.slane %v5211, %v5340
        %v5342 = vsel %vm5269, %v5341, %v5337
        %v5343 = vlaneseq
        %v5344 = vshrl.u32 %v5343, 7
        %v5345 = vsub.s32 %v5259, %v5344
        %v5346 = vrot.slane %v5212, %v5345
        %v5347 = vlaneseq
        %v5348 = vshrl.u32 %v5347, 7
        %v5349 = vsub.s32 %v5264, %v5348
        %v5350 = vrot.slane %v5213, %v5349
        %v5351 = vsel %vm5269, %v5350, %v5346
        %v5352 = vlaneseq
        %v5353 = vshrl.u32 %v5352, 7
        %v5354 = vsub.s32 %v5259, %v5353
        %v5355 = vrot.slane %v5214, %v5354
        %v5356 = vlaneseq
        %v5357 = vshrl.u32 %v5356, 7
        %v5358 = vsub.s32 %v5264, %v5357
        %v5359 = vrot.slane %v5215, %v5358
        %v5360 = vsel %vm5269, %v5359, %v5355
        %v5361 = vlaneseq
        %v5362 = vshrl.u32 %v5361, 7
        %v5363 = vsub.s32 %v5259, %v5362
        %v5364 = vrot.slane %v5216, %v5363
        %v5365 = vlaneseq
        %v5366 = vshrl.u32 %v5365, 7
        %v5367 = vsub.s32 %v5264, %v5366
        %v5368 = vrot.slane %v5217, %v5367
        %v5369 = vsel %vm5269, %v5368, %v5364
        %v5370 = vlaneseq
        %v5371 = vshrl.u32 %v5370, 7
        %v5372 = vsub.s32 %v5259, %v5371
        %v5373 = vrot.slane %v5218, %v5372
        %v5374 = vlaneseq
        %v5375 = vshrl.u32 %v5374, 7
        %v5376 = vsub.s32 %v5264, %v5375
        %v5377 = vrot.slane %v5219, %v5376
        %v5378 = vsel %vm5269, %v5377, %v5373
        %v5379 = vlaneseq
        %v5380 = vshrl.u32 %v5379, 7
        %v5381 = vsub.s32 %v5259, %v5380
        %v5382 = vrot.slane %v5220, %v5381
        %v5383 = vlaneseq
        %v5384 = vshrl.u32 %v5383, 7
        %v5385 = vsub.s32 %v5264, %v5384
        %v5386 = vrot.slane %v5221, %v5385
        %v5387 = vsel %vm5269, %v5386, %v5382
        %v5388 = vlaneseq
        %v5389 = vshrl.u32 %v5388, 7
        %v5390 = vsub.s32 %v5259, %v5389
        %v5391 = vrot.slane %v5222, %v5390
        %v5392 = vlaneseq
        %v5393 = vshrl.u32 %v5392, 7
        %v5394 = vsub.s32 %v5264, %v5393
        %v5395 = vrot.slane %v5223, %v5394
        %v5396 = vsel %vm5269, %v5395, %v5391
        %v5397 = vlaneseq
        %v5398 = vshrl.u32 %v5397, 7
        %v5399 = vsub.s32 %v5259, %v5398
        %v5400 = vrot.slane %v5224, %v5399
        %v5401 = vlaneseq
        %v5402 = vshrl.u32 %v5401, 7
        %v5403 = vsub.s32 %v5264, %v5402
        %v5404 = vrot.slane %v5225, %v5403
        %v5405 = vsel %vm5269, %v5404, %v5400
        %vm5406 = vcmask 1041409
        %v5407 = vsel %vm5406, %v5279, %v5270
        %vm5408 = vcmask 1042434
        %v5409 = vsel %vm5408, %v5288, %v5407
        %vm5410 = vcmask 1043459
        %v5411 = vsel %vm5410, %v5297, %v5409
        %vm5412 = vcmask 1044484
        %v5413 = vsel %vm5412, %v5306, %v5411
        %vm5414 = vcmask 1045509
        %v5415 = vsel %vm5414, %v5315, %v5413
        %vm5416 = vcmask 1046534
        %v5417 = vsel %vm5416, %v5324, %v5415
        %vm5418 = vcmask 1047559
        %v5419 = vsel %vm5418, %v5333, %v5417
        %v5420 = vsel %vm5406, %v5351, %v5342
        %v5421 = vsel %vm5408, %v5360, %v5420
        %v5422 = vsel %vm5410, %v5369, %v5421
        %v5423 = vsel %vm5412, %v5378, %v5422
        %v5424 = vsel %vm5414, %v5387, %v5423
        %v5425 = vsel %vm5416, %v5396, %v5424
        %v5426 = vsel %vm5418, %v5405, %v5425
        %5429 = vst.msk [vmem:[%s298] sm:$0xff] %vm3965, %v5419
        %5430 = vst.msk [vmem:[%s298 + $0x8] sm:$0xff] %vm3965, %v5426
        %s5431 = sand.u32 %s186, 1
        %s5432 = scalar_lea.sflag [#allocation9], %s5431
        %s5433 = sand.u32 %s186, 1
        %s5434 = smul.addr %s5433, 16
        %s5435 = scalar_lea.vmem [#allocation10], %s5434
        // Predicated region
        $region53: #{cnn_decoder_forward.1} parent=47 // pred_check
          %p5436 = pneg %p196
        $region54: #{cnn_decoder_forward.1} parent=47 // pred_check_branch
          %5438 = sbr.rel (%p5436) target = $region56
        $region55: #{cnn_decoder_forward.1} parent=47 // pred_region
          %s5440 = ssub.s32 256, 256
          %5441 = vsyncadd %s5432, %s5440
          %s5442 = smul.addr %s26, 2
          %s5443 = smul.addr %s5442, 128
          %s5444 = scalar_lea.hbm %s7, %s5443
          %s5445 = sshll.u32 %s5435, 4
          %s5446 = int_to_ptr.vmem [resolvable:$true] %s5445
          %5451 = dma.vmem_to_hbm [thread:$0]  %s5446, 256, %s5444, %s5432, 128, 128, 8
        $region56: #{cnn_decoder_forward.1} parent=47 // pred_fallthru
          _
      $region48: #{cnn_decoder_forward.1} parent=5 // pred_fallthru
        _
      %p5452 = scmp.le.s32.totalorder 2, %s21
      // Predicated region
      $region57: #{cnn_decoder_forward.1} parent=5 // pred_check
        %p5453 = pneg %p5452
      $region58: #{cnn_decoder_forward.1} parent=5 // pred_check_branch
        %5455 = sbr.rel (%p5453) target = $region60
      $region59: #{cnn_decoder_forward.1} parent=5 // pred_region
        %s5456 = ssub.s32 %s21, 2
        // Predicated region
        $region61: #{cnn_decoder_forward.1} parent=59 // pred_check
          %p5457 = pneg %p202
        $region62: #{cnn_decoder_forward.1} parent=59 // pred_check_branch
          %5459 = sbr.rel (%p5457) target = $region64
        $region63: #{cnn_decoder_forward.1} parent=59 // pred_region
          %s5460 = sand.u32 %s187, 1
          %s5461 = scalar_lea.sflag [#allocation9], %s5460
          %s5462 = sand.u32 %s187, 1
          %s5463 = smul.addr %s5462, 16
          %s5464 = scalar_lea.vmem [#allocation10], %s5463
          %5465 = dma.done %s5461, 256
        $region64: #{cnn_decoder_forward.1} parent=59 // pred_fallthru
          _
      $region60: #{cnn_decoder_forward.1} parent=5 // pred_fallthru
        _
    $region6: #{cnn_decoder_forward.1} parent=1 // loop_footer
      %s25 = sadd.s32 1, %s21
    $region7: #{cnn_decoder_forward.1} parent=1 // loop_footer_branch
      %20 = sbr.rel target = $region3
    $region8: #{cnn_decoder_forward.1} parent=1 // loop_exit
      _
    %5466 = vsyncpa [#allocation8], 1
    %s5467 = scalar_lea.sflag [#allocation8], 1
    %5468 = vsyncpa %s5467, 1
    %5469 = vsyncpa [#allocation9], 1
    %s5470 = scalar_lea.sflag [#allocation9], 1
    %5471 = vsyncpa %s5470, 1

</llo_original>
